<compile_context>
chip_gen: v5e
topology: v5e:2x2
jax: 0.10.0
libtpu: 0.0.40
codegen_flags: <defaults>
</compile_context>

<pallas_src>
import jax
import jax.numpy as jnp
from jax.experimental import pallas as pl
from jax.experimental.pallas import tpu as pltpu

IN_FEATURES = 64 * 64 * 3   # 12288
HIDDEN = 128
OUT = 2
OUT_PAD = 128               # lane-dense output width (slice back to 2 in wrapper)
SUBLANE = 8


def mlp_kernel(x_ref, w1_ref, b1_ref, w2_ref, b2_ref, o_ref):
    # linear1: (Bp, 12288) bf16 @ (12288, 128) bf16 -> f32 on the MXU.
    h = jnp.dot(x_ref[...], w1_ref[...], preferred_element_type=jnp.float32)
    h = jnp.maximum(h + b1_ref[...], 0.0)                       # bias + ReLU
    # linear2 (padded to 128 lanes): (Bp, 128) @ (128, 128) -> f32.
    y = jnp.dot(h, w2_ref[...], preferred_element_type=jnp.float32)
    o_ref[...] = (y + b2_ref[...]).astype(o_ref.dtype)


def prepare_params(w1, b1, w2, b2):
    """One-time param prep (do NOT call per forward):
    pre-transpose, cast W1 to bf16, pad linear2 to 128 output lanes."""
    w1t = w1.T.astype(jnp.bfloat16)                 # (IN_FEATURES, HIDDEN) bf16
    b1r = b1.reshape(1, HIDDEN).astype(jnp.float32)
    w2t_pad = jnp.zeros((HIDDEN, OUT_PAD), jnp.float32).at[:, :OUT].set(w2.T)
    b2_pad = jnp.zeros((1, OUT_PAD), jnp.float32).at[:, :OUT].set(b2.reshape(1, OUT))
    return w1t, b1r, w2t_pad, b2_pad


def network_forward(x_nchw, prepared):
    """x_nchw: (B, 3, 64, 64) f32; prepared: output of prepare_params.
    Returns (B, 2) f32."""
    w1t, b1r, w2t_pad, b2_pad = prepared
    B = x_nchw.shape[0]
    Bp = ((B + SUBLANE - 1) // SUBLANE) * SUBLANE

    x2d = x_nchw.reshape(B, IN_FEATURES).astype(jnp.bfloat16)
    if Bp != B:                                      # pad batch to sublane multiple
        x2d = jnp.zeros((Bp, IN_FEATURES), jnp.bfloat16).at[:B].set(x2d)

    out_pad = pl.pallas_call(
        mlp_kernel,
        out_shape=jax.ShapeDtypeStruct((Bp, OUT_PAD), jnp.float32),
        grid_spec=pltpu.PrefetchScalarGridSpec(
            num_scalar_prefetch=0,
            grid=(1,),
            in_specs=[
                pl.BlockSpec((Bp, IN_FEATURES), lambda i: (0, 0)),      # x
                pl.BlockSpec((IN_FEATURES, HIDDEN), lambda i: (0, 0)),  # W1^T (bf16)
                pl.BlockSpec((1, HIDDEN), lambda i: (0, 0)),            # b1
                pl.BlockSpec((HIDDEN, OUT_PAD), lambda i: (0, 0)),      # W2^T padded
                pl.BlockSpec((1, OUT_PAD), lambda i: (0, 0)),           # b2 padded
            ],
            out_specs=pl.BlockSpec((Bp, OUT_PAD), lambda i: (0, 0)),
        ),
        compiler_params=pltpu.CompilerParams(
            dimension_semantics=("arbitrary",),
        ),
    )(x2d, w1t, b1r, w2t_pad, b2_pad)

    return out_pad[:B, :OUT]


def init_params(key):
    """Deterministic init mimicking nn.Linear default (uniform +/- 1/sqrt(fan_in))."""
    k1, k2, k3, k4 = jax.random.split(key, 4)
    lim1 = 1.0 / (IN_FEATURES ** 0.5)
    lim2 = 1.0 / (HIDDEN ** 0.5)
    w1 = jax.random.uniform(k1, (HIDDEN, IN_FEATURES), jnp.float32, -lim1, lim1)
    b1 = jax.random.uniform(k2, (HIDDEN,), jnp.float32, -lim1, lim1)
    w2 = jax.random.uniform(k3, (OUT, HIDDEN), jnp.float32, -lim2, lim2)
    b2 = jax.random.uniform(k4, (OUT,), jnp.float32, -lim2, lim2)
    return w1, b1, w2, b2


if __name__ == "__main__":
    key = jax.random.PRNGKey(0)
    kx, kp = jax.random.split(key)

    B = 2
    x = jax.random.normal(kx, (B, 3, 64, 64), jnp.float32)
    w1, b1, w2, b2 = init_params(kp)

    prepared = prepare_params(w1, b1, w2, b2)        # one-time weight prep
    out = network_forward(x, prepared)
    out = jax.block_until_ready(out)

    # Reference check in plain JAX f32 (kernel uses bf16 inputs + f32 accumulate,
    # so tolerance is relaxed accordingly).
    x2d = x.reshape(B, IN_FEATURES)
    ref = jnp.maximum(x2d @ w1.T + b1, 0.0) @ w2.T + b2
    assert out.shape == (B, OUT)
    assert jnp.allclose(out, ref, atol=2e-2, rtol=2e-2), "mismatch vs reference"

    print("KERNEL_OK")
</pallas_src>

<mosaic_0001>
module attributes {stable_mosaic.version = 11 : i64} {
  func.func @mlp_kernel(%arg0: i32, %arg1: memref<8x12288xbf16, #tpu.memory_space<vmem>>, %arg2: memref<12288x128xbf16, #tpu.memory_space<vmem>>, %arg3: memref<1x128xf32, #tpu.memory_space<vmem>>, %arg4: memref<128x128xf32, #tpu.memory_space<vmem>>, %arg5: memref<1x128xf32, #tpu.memory_space<vmem>>, %arg6: memref<8x128xf32, #tpu.memory_space<vmem>>) attributes {dimension_semantics = [#tpu.dimension_semantics<arbitrary>], iteration_bounds = array<i64: 1>, scalar_prefetch = 0 : i64, scratch_operands = 0 : i64, tpu.core_type = #tpu.core_type<tc>, window_params = [{pipeline_mode = #tpu.pipeline_mode<synchronous>, transform_indices = @transform_0, window_bounds = array<i64: 8, 12288>}, {pipeline_mode = #tpu.pipeline_mode<synchronous>, transform_indices = @transform_1, window_bounds = array<i64: 12288, 128>}, {pipeline_mode = #tpu.pipeline_mode<synchronous>, transform_indices = @transform_2, window_bounds = array<i64: 1, 128>}, {pipeline_mode = #tpu.pipeline_mode<synchronous>, transform_indices = @transform_3, window_bounds = array<i64: 128, 128>}, {pipeline_mode = #tpu.pipeline_mode<synchronous>, transform_indices = @transform_4, window_bounds = array<i64: 1, 128>}, {pipeline_mode = #tpu.pipeline_mode<synchronous>, transform_indices = @transform_5, window_bounds = array<i64: 8, 128>}]} {
    %c0 = arith.constant 0 : index
    %c0_0 = arith.constant 0 : index
    %0 = vector.load %arg1[%c0, %c0_0] : memref<8x12288xbf16, #tpu.memory_space<vmem>>, vector<8x12288xbf16>
    %c0_1 = arith.constant 0 : index
    %c0_2 = arith.constant 0 : index
    %1 = vector.load %arg2[%c0_1, %c0_2] : memref<12288x128xbf16, #tpu.memory_space<vmem>>, vector<12288x128xbf16>
    %cst = arith.constant dense<0.000000e+00> : vector<8x128xf32>
    %2 = tpu.matmul %0, %1, %cst {dimension_numbers = #tpu.dot_dimension_numbers<[1], [0], [0], [1], [0, 0, 1, 1], [], []>} : vector<8x12288xbf16>, vector<12288x128xbf16>, vector<8x128xf32> -> vector<8x128xf32>
    %c0_3 = arith.constant 0 : index
    %c0_4 = arith.constant 0 : index
    %3 = vector.load %arg3[%c0_3, %c0_4] : memref<1x128xf32, #tpu.memory_space<vmem>>, vector<1x128xf32>
    %4 = vector.broadcast %3 : vector<1x128xf32> to vector<8x128xf32>
    %5 = arith.addf %2, %4 : vector<8x128xf32>
    %cst_5 = arith.constant 0.000000e+00 : f32
    %6 = vector.broadcast %cst_5 : f32 to vector<8x128xf32>
    %7 = arith.maximumf %5, %6 : vector<8x128xf32>
    %c0_6 = arith.constant 0 : index
    %c0_7 = arith.constant 0 : index
    %8 = vector.load %arg4[%c0_6, %c0_7] : memref<128x128xf32, #tpu.memory_space<vmem>>, vector<128x128xf32>
    %cst_8 = arith.constant dense<0.000000e+00> : vector<8x128xf32>
    %9 = tpu.matmul %7, %8, %cst_8 {dimension_numbers = #tpu.dot_dimension_numbers<[1], [0], [0], [1], [0, 0, 1, 1], [], []>} : vector<8x128xf32>, vector<128x128xf32>, vector<8x128xf32> -> vector<8x128xf32>
    %c0_9 = arith.constant 0 : index
    %c0_10 = arith.constant 0 : index
    %10 = vector.load %arg5[%c0_9, %c0_10] : memref<1x128xf32, #tpu.memory_space<vmem>>, vector<1x128xf32>
    %11 = vector.broadcast %10 : vector<1x128xf32> to vector<8x128xf32>
    %12 = arith.addf %9, %11 : vector<8x128xf32>
    %c0_11 = arith.constant 0 : index
    %c0_12 = arith.constant 0 : index
    %13 = vector.load %arg6[%c0_11, %c0_12] : memref<8x128xf32, #tpu.memory_space<vmem>>, vector<8x128xf32>
    tpu.vector_store %arg6[%c0_11, %c0_12], %12 {strides = array<i32>} : memref<8x128xf32, #tpu.memory_space<vmem>>, vector<8x128xf32>,
    return
  }
  func.func @transform_0(%arg0: i32) -> (i32, i32) {
    %c0_i32 = arith.constant 0 : i32
    %c0_i32_0 = arith.constant 0 : i32
    %c0_i32_1 = arith.constant 0 : i32
    return %c0_i32, %c0_i32_0 : i32, i32
  }
  func.func @transform_1(%arg0: i32) -> (i32, i32) {
    %c0_i32 = arith.constant 0 : i32
    %c0_i32_0 = arith.constant 0 : i32
    %c0_i32_1 = arith.constant 0 : i32
    return %c0_i32, %c0_i32_0 : i32, i32
  }
  func.func @transform_2(%arg0: i32) -> (i32, i32) {
    %c0_i32 = arith.constant 0 : i32
    %c0_i32_0 = arith.constant 0 : i32
    %c0_i32_1 = arith.constant 0 : i32
    return %c0_i32, %c0_i32_0 : i32, i32
  }
  func.func @transform_3(%arg0: i32) -> (i32, i32) {
    %c0_i32 = arith.constant 0 : i32
    %c0_i32_0 = arith.constant 0 : i32
    %c0_i32_1 = arith.constant 0 : i32
    return %c0_i32, %c0_i32_0 : i32, i32
  }
  func.func @transform_4(%arg0: i32) -> (i32, i32) {
    %c0_i32 = arith.constant 0 : i32
    %c0_i32_0 = arith.constant 0 : i32
    %c0_i32_1 = arith.constant 0 : i32
    return %c0_i32, %c0_i32_0 : i32, i32
  }
  func.func @transform_5(%arg0: i32) -> (i32, i32) {
    %c0_i32 = arith.constant 0 : i32
    %c0_i32_0 = arith.constant 0 : i32
    %c0_i32_1 = arith.constant 0 : i32
    return %c0_i32, %c0_i32_0 : i32, i32
  }
}

</mosaic_0001>

<llo_original>
// kernel: tpu_custom_call.1
$region0: #{tpu_custom_call.1}
  #allocation0 [shape = 'u32[]', space=smem, size = 0x4, offset = 0x4, fixed_abs, tag = 'smem constant byte address 0x4 - core index']
  #allocation1 [shape = 'u32[72,128]{1,0:T(1,128)}', space=vmem, size = 0x9000, scoped, tag = 'internal scratch']
  %s0 = inlined_call_operand.hbm [shape: bf16[8,12288], index: 0, kind: input, shape index: {}]
  %s1 = inlined_call_operand.hbm [shape: bf16[12288,128], index: 1, kind: input, shape index: {}]
  %s2 = inlined_call_operand.hbm [shape: f32[1,128], index: 2, kind: input, shape index: {}]
  %s3 = inlined_call_operand.hbm [shape: f32[128,128], index: 3, kind: input, shape index: {}]
  %s4 = inlined_call_operand.hbm [shape: f32[1,128], index: 4, kind: input, shape index: {}]
  %s5 = inlined_call_operand.hbm [shape: f32[8,128], index: 5, kind: output, shape index: {}]
  %s6 = sld [smem:[#allocation0]]
  $region50: #{tpu_custom_call.1} parent=0
    _
  %s8 = ssub.s32 1, %s6
  %s9 = scalar_select 0, %s8, %s6
  $region1: #{tpu_custom_call.1} parent=0
    #allocation2 [shape = 'u8[196608]{0}', space=vmem, size = 0x30000, scoped, tag = 'input window, operand 0, single buffered']
    #allocation3 [shape = 's32[1]{0}', space=sflag, size = 0x4, scoped, tag = 'scoped memory for tpu_custom_call.1']
    #allocation4 [shape = 's32[1]{0}', space=sflag, size = 0x4, scoped, tag = 'scoped memory for tpu_custom_call.1']
    #allocation5 [shape = 'u8[3145728]{0}', space=vmem, size = 0x300000, scoped, tag = 'input window, operand 1, single buffered']
    #allocation6 [shape = 's32[1]{0}', space=sflag, size = 0x4, scoped, tag = 'scoped memory for tpu_custom_call.1']
    #allocation7 [shape = 'u8[512]{0}', space=vmem, size = 0x400, scoped, tag = 'input window, operand 2, single buffered']
    #allocation8 [shape = 'u8[65536]{0}', space=vmem, size = 0x10000, scoped, tag = 'input window, operand 3, single buffered']
    #allocation9 [shape = 's32[1]{0}', space=sflag, size = 0x4, scoped, tag = 'scoped memory for tpu_custom_call.1']
    #allocation10 [shape = 'u8[512]{0}', space=vmem, size = 0x400, scoped, tag = 'input window, operand 4, single buffered']
    #allocation11 [shape = 'u8[4096]{0}', space=vmem, size = 0x1000, scoped, tag = 'output window, operand 0, single buffered']
    %10 = vsyncpa [#allocation3], 0
    %11 = vsyncpa [#allocation6], 0
    %12 = vsyncpa [#allocation9], 0
    %13 = vsyncpa [#allocation4], 0
    // Predicated region
    $region2: #{tpu_custom_call.1} parent=1 // pred_check
      _
    $region3: #{tpu_custom_call.1} parent=1 // pred_check_branch
      %15 = sbr.rel (0) target = $region5
    $region4: #{tpu_custom_call.1} parent=1 // pred_region
      %17 = vsyncadd [#allocation3], 0
      %s19 = sshll.u32 %s0, 4
      %s20 = int_to_ptr.hbm [resolvable:$true] %s19
      %s21 = sshll.u32 [#allocation2], 4
      %s22 = int_to_ptr.vmem [resolvable:$true] %s21
      %24 = dma.hbm_to_vmem [thread:$0]  %s20, 6144, %s22, [#allocation3]
    $region5: #{tpu_custom_call.1} parent=1 // pred_fallthru
      _
    // Predicated region
    $region6: #{tpu_custom_call.1} parent=1 // pred_check
      _
    $region7: #{tpu_custom_call.1} parent=1 // pred_check_branch
      %26 = sbr.rel (0) target = $region9
    $region8: #{tpu_custom_call.1} parent=1 // pred_region
      %28 = vsyncadd [#allocation6], 0
      %s29 = sshll.u32 %s1, 4
      %s30 = int_to_ptr.hbm [resolvable:$true] %s29
      %s31 = sshll.u32 [#allocation5], 4
      %s32 = int_to_ptr.vmem [resolvable:$true] %s31
      %37 = dma.hbm_to_vmem [thread:$0]  %s30, 98304, %s32, [#allocation6], 64, 64, 4
    $region9: #{tpu_custom_call.1} parent=1 // pred_fallthru
      _
    // Predicated region
    $region10: #{tpu_custom_call.1} parent=1 // pred_check
      _
    $region11: #{tpu_custom_call.1} parent=1 // pred_check_branch
      %39 = sbr.rel (0) target = $region13
    $region12: #{tpu_custom_call.1} parent=1 // pred_region
      %41 = vsyncadd [#allocation6], 0
      %s43 = sshll.u32 %s2, 4
      %s44 = int_to_ptr.hbm [resolvable:$true] %s43
      %s45 = sshll.u32 [#allocation7], 4
      %s46 = int_to_ptr.vmem [resolvable:$true] %s45
      %48 = dma.hbm_to_vmem [thread:$0]  %s44, 16, %s46, [#allocation6]
    $region13: #{tpu_custom_call.1} parent=1 // pred_fallthru
      _
    // Predicated region
    $region14: #{tpu_custom_call.1} parent=1 // pred_check
      _
    $region15: #{tpu_custom_call.1} parent=1 // pred_check_branch
      %50 = sbr.rel (0) target = $region17
    $region16: #{tpu_custom_call.1} parent=1 // pred_region
      %52 = vsyncadd [#allocation9], 0
      %s53 = sshll.u32 %s3, 4
      %s54 = int_to_ptr.hbm [resolvable:$true] %s53
      %s55 = sshll.u32 [#allocation8], 4
      %s56 = int_to_ptr.vmem [resolvable:$true] %s55
      %61 = dma.hbm_to_vmem [thread:$0]  %s54, 2048, %s56, [#allocation9], 128, 128, 8
    $region17: #{tpu_custom_call.1} parent=1 // pred_fallthru
      _
    // Predicated region
    $region18: #{tpu_custom_call.1} parent=1 // pred_check
      _
    $region19: #{tpu_custom_call.1} parent=1 // pred_check_branch
      %63 = sbr.rel (0) target = $region21
    $region20: #{tpu_custom_call.1} parent=1 // pred_region
      %65 = vsyncadd [#allocation9], 0
      %s67 = sshll.u32 %s4, 4
      %s68 = int_to_ptr.hbm [resolvable:$true] %s67
      %s69 = sshll.u32 [#allocation10], 4
      %s70 = int_to_ptr.vmem [resolvable:$true] %s69
      %72 = dma.hbm_to_vmem [thread:$0]  %s68, 16, %s70, [#allocation9]
    $region21: #{tpu_custom_call.1} parent=1 // pred_fallthru
      _
    // Predicated region
    $region22: #{tpu_custom_call.1} parent=1 // pred_check
      _
    $region23: #{tpu_custom_call.1} parent=1 // pred_check_branch
      %74 = sbr.rel (0) target = $region25
    $region24: #{tpu_custom_call.1} parent=1 // pred_region
      %76 = dma.done [#allocation3], 6144
    $region25: #{tpu_custom_call.1} parent=1 // pred_fallthru
      _
    // Predicated region
    $region26: #{tpu_custom_call.1} parent=1 // pred_check
      _
    $region27: #{tpu_custom_call.1} parent=1 // pred_check_branch
      %78 = sbr.rel (0) target = $region29
    $region28: #{tpu_custom_call.1} parent=1 // pred_region
      %80 = dma.done [#allocation6], 98304
    $region29: #{tpu_custom_call.1} parent=1 // pred_fallthru
      _
    // Predicated region
    $region30: #{tpu_custom_call.1} parent=1 // pred_check
      _
    $region31: #{tpu_custom_call.1} parent=1 // pred_check_branch
      %82 = sbr.rel (0) target = $region33
    $region32: #{tpu_custom_call.1} parent=1 // pred_region
      %84 = dma.done [#allocation6], 16
    $region33: #{tpu_custom_call.1} parent=1 // pred_fallthru
      _
    // Predicated region
    $region34: #{tpu_custom_call.1} parent=1 // pred_check
      _
    $region35: #{tpu_custom_call.1} parent=1 // pred_check_branch
      %86 = sbr.rel (0) target = $region37
    $region36: #{tpu_custom_call.1} parent=1 // pred_region
      %88 = dma.done [#allocation9], 2048
    $region37: #{tpu_custom_call.1} parent=1 // pred_fallthru
      _
    // Predicated region
    $region38: #{tpu_custom_call.1} parent=1 // pred_check
      _
    $region39: #{tpu_custom_call.1} parent=1 // pred_check_branch
      %90 = sbr.rel (0) target = $region41
    $region40: #{tpu_custom_call.1} parent=1 // pred_region
      %92 = dma.done [#allocation9], 16
    $region41: #{tpu_custom_call.1} parent=1 // pred_fallthru
      _
    %v93 = vld [vmem:[#allocation2] sm:$0xff]
    %v94 = vld [vmem:[#allocation2 + $0x8] sm:$0xff]
    %v95 = vld [vmem:[#allocation2 + $0x10] sm:$0xff]
    %v96 = vld [vmem:[#allocation2 + $0x18] sm:$0xff]
    %v97 = vld [vmem:[#allocation2 + $0x20] sm:$0xff]
    %v98 = vld [vmem:[#allocation2 + $0x28] sm:$0xff]
    %v99 = vld [vmem:[#allocation2 + $0x30] sm:$0xff]
    %v100 = vld [vmem:[#allocation2 + $0x38] sm:$0xff]
    %v101 = vld [vmem:[#allocation2 + $0x40] sm:$0xff]
    %v102 = vld [vmem:[#allocation2 + $0x48] sm:$0xff]
    %v103 = vld [vmem:[#allocation2 + $0x50] sm:$0xff]
    %v104 = vld [vmem:[#allocation2 + $0x58] sm:$0xff]
    %v105 = vld [vmem:[#allocation2 + $0x60] sm:$0xff]
    %v106 = vld [vmem:[#allocation2 + $0x68] sm:$0xff]
    %v107 = vld [vmem:[#allocation2 + $0x70] sm:$0xff]
    %v108 = vld [vmem:[#allocation2 + $0x78] sm:$0xff]
    %v109 = vld [vmem:[#allocation2 + $0x80] sm:$0xff]
    %v110 = vld [vmem:[#allocation2 + $0x88] sm:$0xff]
    %v111 = vld [vmem:[#allocation2 + $0x90] sm:$0xff]
    %v112 = vld [vmem:[#allocation2 + $0x98] sm:$0xff]
    %v113 = vld [vmem:[#allocation2 + $0xa0] sm:$0xff]
    %v114 = vld [vmem:[#allocation2 + $0xa8] sm:$0xff]
    %v115 = vld [vmem:[#allocation2 + $0xb0] sm:$0xff]
    %v116 = vld [vmem:[#allocation2 + $0xb8] sm:$0xff]
    %v117 = vld [vmem:[#allocation2 + $0xc0] sm:$0xff]
    %v118 = vld [vmem:[#allocation2 + $0xc8] sm:$0xff]
    %v119 = vld [vmem:[#allocation2 + $0xd0] sm:$0xff]
    %v120 = vld [vmem:[#allocation2 + $0xd8] sm:$0xff]
    %v121 = vld [vmem:[#allocation2 + $0xe0] sm:$0xff]
    %v122 = vld [vmem:[#allocation2 + $0xe8] sm:$0xff]
    %v123 = vld [vmem:[#allocation2 + $0xf0] sm:$0xff]
    %v124 = vld [vmem:[#allocation2 + $0xf8] sm:$0xff]
    %v125 = vld [vmem:[#allocation2 + $0x100] sm:$0xff]
    %v126 = vld [vmem:[#allocation2 + $0x108] sm:$0xff]
    %v127 = vld [vmem:[#allocation2 + $0x110] sm:$0xff]
    %v128 = vld [vmem:[#allocation2 + $0x118] sm:$0xff]
    %v129 = vld [vmem:[#allocation2 + $0x120] sm:$0xff]
    %v130 = vld [vmem:[#allocation2 + $0x128] sm:$0xff]
    %v131 = vld [vmem:[#allocation2 + $0x130] sm:$0xff]
    %v132 = vld [vmem:[#allocation2 + $0x138] sm:$0xff]
    %v133 = vld [vmem:[#allocation2 + $0x140] sm:$0xff]
    %v134 = vld [vmem:[#allocation2 + $0x148] sm:$0xff]
    %v135 = vld [vmem:[#allocation2 + $0x150] sm:$0xff]
    %v136 = vld [vmem:[#allocation2 + $0x158] sm:$0xff]
    %v137 = vld [vmem:[#allocation2 + $0x160] sm:$0xff]
    %v138 = vld [vmem:[#allocation2 + $0x168] sm:$0xff]
    %v139 = vld [vmem:[#allocation2 + $0x170] sm:$0xff]
    %v140 = vld [vmem:[#allocation2 + $0x178] sm:$0xff]
    %v141 = vld [vmem:[#allocation5] sm:$0xf]
    %v142 = vld [vmem:[#allocation5 + $0x4] sm:$0xf]
    %v143 = vld [vmem:[#allocation5 + $0x8] sm:$0xf]
    %v144 = vld [vmem:[#allocation5 + $0xc] sm:$0xf]
    %v145 = vld [vmem:[#allocation5 + $0x10] sm:$0xf]
    %v146 = vld [vmem:[#allocation5 + $0x14] sm:$0xf]
    %v147 = vld [vmem:[#allocation5 + $0x18] sm:$0xf]
    %v148 = vld [vmem:[#allocation5 + $0x1c] sm:$0xf]
    %v149 = vld [vmem:[#allocation5 + $0x20] sm:$0xf]
    %v150 = vld [vmem:[#allocation5 + $0x24] sm:$0xf]
    %v151 = vld [vmem:[#allocation5 + $0x28] sm:$0xf]
    %v152 = vld [vmem:[#allocation5 + $0x2c] sm:$0xf]
    %v153 = vld [vmem:[#allocation5 + $0x30] sm:$0xf]
    %v154 = vld [vmem:[#allocation5 + $0x34] sm:$0xf]
    %v155 = vld [vmem:[#allocation5 + $0x38] sm:$0xf]
    %v156 = vld [vmem:[#allocation5 + $0x3c] sm:$0xf]
    %v157 = vld [vmem:[#allocation5 + $0x40] sm:$0xf]
    %v158 = vld [vmem:[#allocation5 + $0x44] sm:$0xf]
    %v159 = vld [vmem:[#allocation5 + $0x48] sm:$0xf]
    %v160 = vld [vmem:[#allocation5 + $0x4c] sm:$0xf]
    %v161 = vld [vmem:[#allocation5 + $0x50] sm:$0xf]
    %v162 = vld [vmem:[#allocation5 + $0x54] sm:$0xf]
    %v163 = vld [vmem:[#allocation5 + $0x58] sm:$0xf]
    %v164 = vld [vmem:[#allocation5 + $0x5c] sm:$0xf]
    %v165 = vld [vmem:[#allocation5 + $0x60] sm:$0xf]
    %v166 = vld [vmem:[#allocation5 + $0x64] sm:$0xf]
    %v167 = vld [vmem:[#allocation5 + $0x68] sm:$0xf]
    %v168 = vld [vmem:[#allocation5 + $0x6c] sm:$0xf]
    %v169 = vld [vmem:[#allocation5 + $0x70] sm:$0xf]
    %v170 = vld [vmem:[#allocation5 + $0x74] sm:$0xf]
    %v171 = vld [vmem:[#allocation5 + $0x78] sm:$0xf]
    %v172 = vld [vmem:[#allocation5 + $0x7c] sm:$0xf]
    %v173 = vld [vmem:[#allocation5 + $0x80] sm:$0xf]
    %v174 = vld [vmem:[#allocation5 + $0x84] sm:$0xf]
    %v175 = vld [vmem:[#allocation5 + $0x88] sm:$0xf]
    %v176 = vld [vmem:[#allocation5 + $0x8c] sm:$0xf]
    %v177 = vld [vmem:[#allocation5 + $0x90] sm:$0xf]
    %v178 = vld [vmem:[#allocation5 + $0x94] sm:$0xf]
    %v179 = vld [vmem:[#allocation5 + $0x98] sm:$0xf]
    %v180 = vld [vmem:[#allocation5 + $0x9c] sm:$0xf]
    %v181 = vld [vmem:[#allocation5 + $0xa0] sm:$0xf]
    %v182 = vld [vmem:[#allocation5 + $0xa4] sm:$0xf]
    %v183 = vld [vmem:[#allocation5 + $0xa8] sm:$0xf]
    %v184 = vld [vmem:[#allocation5 + $0xac] sm:$0xf]
    %v185 = vld [vmem:[#allocation5 + $0xb0] sm:$0xf]
    %v186 = vld [vmem:[#allocation5 + $0xb4] sm:$0xf]
    %v187 = vld [vmem:[#allocation5 + $0xb8] sm:$0xf]
    %v188 = vld [vmem:[#allocation5 + $0xbc] sm:$0xf]
    %v189 = vld [vmem:[#allocation5 + $0xc0] sm:$0xf]
    %v190 = vld [vmem:[#allocation5 + $0xc4] sm:$0xf]
    %v191 = vld [vmem:[#allocation5 + $0xc8] sm:$0xf]
    %v192 = vld [vmem:[#allocation5 + $0xcc] sm:$0xf]
    %v193 = vld [vmem:[#allocation5 + $0xd0] sm:$0xf]
    %v194 = vld [vmem:[#allocation5 + $0xd4] sm:$0xf]
    %v195 = vld [vmem:[#allocation5 + $0xd8] sm:$0xf]
    %v196 = vld [vmem:[#allocation5 + $0xdc] sm:$0xf]
    %v197 = vld [vmem:[#allocation5 + $0xe0] sm:$0xf]
    %v198 = vld [vmem:[#allocation5 + $0xe4] sm:$0xf]
    %v199 = vld [vmem:[#allocation5 + $0xe8] sm:$0xf]
    %v200 = vld [vmem:[#allocation5 + $0xec] sm:$0xf]
    %v201 = vld [vmem:[#allocation5 + $0xf0] sm:$0xf]
    %v202 = vld [vmem:[#allocation5 + $0xf4] sm:$0xf]
    %v203 = vld [vmem:[#allocation5 + $0xf8] sm:$0xf]
    %v204 = vld [vmem:[#allocation5 + $0xfc] sm:$0xf]
    %v205 = vld [vmem:[#allocation5 + $0x100] sm:$0xf]
    %v206 = vld [vmem:[#allocation5 + $0x104] sm:$0xf]
    %v207 = vld [vmem:[#allocation5 + $0x108] sm:$0xf]
    %v208 = vld [vmem:[#allocation5 + $0x10c] sm:$0xf]
    %v209 = vld [vmem:[#allocation5 + $0x110] sm:$0xf]
    %v210 = vld [vmem:[#allocation5 + $0x114] sm:$0xf]
    %v211 = vld [vmem:[#allocation5 + $0x118] sm:$0xf]
    %v212 = vld [vmem:[#allocation5 + $0x11c] sm:$0xf]
    %v213 = vld [vmem:[#allocation5 + $0x120] sm:$0xf]
    %v214 = vld [vmem:[#allocation5 + $0x124] sm:$0xf]
    %v215 = vld [vmem:[#allocation5 + $0x128] sm:$0xf]
    %v216 = vld [vmem:[#allocation5 + $0x12c] sm:$0xf]
    %v217 = vld [vmem:[#allocation5 + $0x130] sm:$0xf]
    %v218 = vld [vmem:[#allocation5 + $0x134] sm:$0xf]
    %v219 = vld [vmem:[#allocation5 + $0x138] sm:$0xf]
    %v220 = vld [vmem:[#allocation5 + $0x13c] sm:$0xf]
    %v221 = vld [vmem:[#allocation5 + $0x140] sm:$0xf]
    %v222 = vld [vmem:[#allocation5 + $0x144] sm:$0xf]
    %v223 = vld [vmem:[#allocation5 + $0x148] sm:$0xf]
    %v224 = vld [vmem:[#allocation5 + $0x14c] sm:$0xf]
    %v225 = vld [vmem:[#allocation5 + $0x150] sm:$0xf]
    %v226 = vld [vmem:[#allocation5 + $0x154] sm:$0xf]
    %v227 = vld [vmem:[#allocation5 + $0x158] sm:$0xf]
    %v228 = vld [vmem:[#allocation5 + $0x15c] sm:$0xf]
    %v229 = vld [vmem:[#allocation5 + $0x160] sm:$0xf]
    %v230 = vld [vmem:[#allocation5 + $0x164] sm:$0xf]
    %v231 = vld [vmem:[#allocation5 + $0x168] sm:$0xf]
    %v232 = vld [vmem:[#allocation5 + $0x16c] sm:$0xf]
    %v233 = vld [vmem:[#allocation5 + $0x170] sm:$0xf]
    %v234 = vld [vmem:[#allocation5 + $0x174] sm:$0xf]
    %v235 = vld [vmem:[#allocation5 + $0x178] sm:$0xf]
    %v236 = vld [vmem:[#allocation5 + $0x17c] sm:$0xf]
    %v237 = vld [vmem:[#allocation5 + $0x180] sm:$0xf]
    %v238 = vld [vmem:[#allocation5 + $0x184] sm:$0xf]
    %v239 = vld [vmem:[#allocation5 + $0x188] sm:$0xf]
    %v240 = vld [vmem:[#allocation5 + $0x18c] sm:$0xf]
    %v241 = vld [vmem:[#allocation5 + $0x190] sm:$0xf]
    %v242 = vld [vmem:[#allocation5 + $0x194] sm:$0xf]
    %v243 = vld [vmem:[#allocation5 + $0x198] sm:$0xf]
    %v244 = vld [vmem:[#allocation5 + $0x19c] sm:$0xf]
    %v245 = vld [vmem:[#allocation5 + $0x1a0] sm:$0xf]
    %v246 = vld [vmem:[#allocation5 + $0x1a4] sm:$0xf]
    %v247 = vld [vmem:[#allocation5 + $0x1a8] sm:$0xf]
    %v248 = vld [vmem:[#allocation5 + $0x1ac] sm:$0xf]
    %v249 = vld [vmem:[#allocation5 + $0x1b0] sm:$0xf]
    %v250 = vld [vmem:[#allocation5 + $0x1b4] sm:$0xf]
    %v251 = vld [vmem:[#allocation5 + $0x1b8] sm:$0xf]
    %v252 = vld [vmem:[#allocation5 + $0x1bc] sm:$0xf]
    %v253 = vld [vmem:[#allocation5 + $0x1c0] sm:$0xf]
    %v254 = vld [vmem:[#allocation5 + $0x1c4] sm:$0xf]
    %v255 = vld [vmem:[#allocation5 + $0x1c8] sm:$0xf]
    %v256 = vld [vmem:[#allocation5 + $0x1cc] sm:$0xf]
    %v257 = vld [vmem:[#allocation5 + $0x1d0] sm:$0xf]
    %v258 = vld [vmem:[#allocation5 + $0x1d4] sm:$0xf]
    %v259 = vld [vmem:[#allocation5 + $0x1d8] sm:$0xf]
    %v260 = vld [vmem:[#allocation5 + $0x1dc] sm:$0xf]
    %v261 = vld [vmem:[#allocation5 + $0x1e0] sm:$0xf]
    %v262 = vld [vmem:[#allocation5 + $0x1e4] sm:$0xf]
    %v263 = vld [vmem:[#allocation5 + $0x1e8] sm:$0xf]
    %v264 = vld [vmem:[#allocation5 + $0x1ec] sm:$0xf]
    %v265 = vld [vmem:[#allocation5 + $0x1f0] sm:$0xf]
    %v266 = vld [vmem:[#allocation5 + $0x1f4] sm:$0xf]
    %v267 = vld [vmem:[#allocation5 + $0x1f8] sm:$0xf]
    %v268 = vld [vmem:[#allocation5 + $0x1fc] sm:$0xf]
    %v269 = vld [vmem:[#allocation5 + $0x200] sm:$0xf]
    %v270 = vld [vmem:[#allocation5 + $0x204] sm:$0xf]
    %v271 = vld [vmem:[#allocation5 + $0x208] sm:$0xf]
    %v272 = vld [vmem:[#allocation5 + $0x20c] sm:$0xf]
    %v273 = vld [vmem:[#allocation5 + $0x210] sm:$0xf]
    %v274 = vld [vmem:[#allocation5 + $0x214] sm:$0xf]
    %v275 = vld [vmem:[#allocation5 + $0x218] sm:$0xf]
    %v276 = vld [vmem:[#allocation5 + $0x21c] sm:$0xf]
    %v277 = vld [vmem:[#allocation5 + $0x220] sm:$0xf]
    %v278 = vld [vmem:[#allocation5 + $0x224] sm:$0xf]
    %v279 = vld [vmem:[#allocation5 + $0x228] sm:$0xf]
    %v280 = vld [vmem:[#allocation5 + $0x22c] sm:$0xf]
    %v281 = vld [vmem:[#allocation5 + $0x230] sm:$0xf]
    %v282 = vld [vmem:[#allocation5 + $0x234] sm:$0xf]
    %v283 = vld [vmem:[#allocation5 + $0x238] sm:$0xf]
    %v284 = vld [vmem:[#allocation5 + $0x23c] sm:$0xf]
    %v285 = vld [vmem:[#allocation5 + $0x240] sm:$0xf]
    %v286 = vld [vmem:[#allocation5 + $0x244] sm:$0xf]
    %v287 = vld [vmem:[#allocation5 + $0x248] sm:$0xf]
    %v288 = vld [vmem:[#allocation5 + $0x24c] sm:$0xf]
    %v289 = vld [vmem:[#allocation5 + $0x250] sm:$0xf]
    %v290 = vld [vmem:[#allocation5 + $0x254] sm:$0xf]
    %v291 = vld [vmem:[#allocation5 + $0x258] sm:$0xf]
    %v292 = vld [vmem:[#allocation5 + $0x25c] sm:$0xf]
    %v293 = vld [vmem:[#allocation5 + $0x260] sm:$0xf]
    %v294 = vld [vmem:[#allocation5 + $0x264] sm:$0xf]
    %v295 = vld [vmem:[#allocation5 + $0x268] sm:$0xf]
    %v296 = vld [vmem:[#allocation5 + $0x26c] sm:$0xf]
    %v297 = vld [vmem:[#allocation5 + $0x270] sm:$0xf]
    %v298 = vld [vmem:[#allocation5 + $0x274] sm:$0xf]
    %v299 = vld [vmem:[#allocation5 + $0x278] sm:$0xf]
    %v300 = vld [vmem:[#allocation5 + $0x27c] sm:$0xf]
    %v301 = vld [vmem:[#allocation5 + $0x280] sm:$0xf]
    %v302 = vld [vmem:[#allocation5 + $0x284] sm:$0xf]
    %v303 = vld [vmem:[#allocation5 + $0x288] sm:$0xf]
    %v304 = vld [vmem:[#allocation5 + $0x28c] sm:$0xf]
    %v305 = vld [vmem:[#allocation5 + $0x290] sm:$0xf]
    %v306 = vld [vmem:[#allocation5 + $0x294] sm:$0xf]
    %v307 = vld [vmem:[#allocation5 + $0x298] sm:$0xf]
    %v308 = vld [vmem:[#allocation5 + $0x29c] sm:$0xf]
    %v309 = vld [vmem:[#allocation5 + $0x2a0] sm:$0xf]
    %v310 = vld [vmem:[#allocation5 + $0x2a4] sm:$0xf]
    %v311 = vld [vmem:[#allocation5 + $0x2a8] sm:$0xf]
    %v312 = vld [vmem:[#allocation5 + $0x2ac] sm:$0xf]
    %v313 = vld [vmem:[#allocation5 + $0x2b0] sm:$0xf]
    %v314 = vld [vmem:[#allocation5 + $0x2b4] sm:$0xf]
    %v315 = vld [vmem:[#allocation5 + $0x2b8] sm:$0xf]
    %v316 = vld [vmem:[#allocation5 + $0x2bc] sm:$0xf]
    %v317 = vld [vmem:[#allocation5 + $0x2c0] sm:$0xf]
    %v318 = vld [vmem:[#allocation5 + $0x2c4] sm:$0xf]
    %v319 = vld [vmem:[#allocation5 + $0x2c8] sm:$0xf]
    %v320 = vld [vmem:[#allocation5 + $0x2cc] sm:$0xf]
    %v321 = vld [vmem:[#allocation5 + $0x2d0] sm:$0xf]
    %v322 = vld [vmem:[#allocation5 + $0x2d4] sm:$0xf]
    %v323 = vld [vmem:[#allocation5 + $0x2d8] sm:$0xf]
    %v324 = vld [vmem:[#allocation5 + $0x2dc] sm:$0xf]
    %v325 = vld [vmem:[#allocation5 + $0x2e0] sm:$0xf]
    %v326 = vld [vmem:[#allocation5 + $0x2e4] sm:$0xf]
    %v327 = vld [vmem:[#allocation5 + $0x2e8] sm:$0xf]
    %v328 = vld [vmem:[#allocation5 + $0x2ec] sm:$0xf]
    %v329 = vld [vmem:[#allocation5 + $0x2f0] sm:$0xf]
    %v330 = vld [vmem:[#allocation5 + $0x2f4] sm:$0xf]
    %v331 = vld [vmem:[#allocation5 + $0x2f8] sm:$0xf]
    %v332 = vld [vmem:[#allocation5 + $0x2fc] sm:$0xf]
    %v333 = vld [vmem:[#allocation5 + $0x300] sm:$0xf]
    %v334 = vld [vmem:[#allocation5 + $0x304] sm:$0xf]
    %v335 = vld [vmem:[#allocation5 + $0x308] sm:$0xf]
    %v336 = vld [vmem:[#allocation5 + $0x30c] sm:$0xf]
    %v337 = vld [vmem:[#allocation5 + $0x310] sm:$0xf]
    %v338 = vld [vmem:[#allocation5 + $0x314] sm:$0xf]
    %v339 = vld [vmem:[#allocation5 + $0x318] sm:$0xf]
    %v340 = vld [vmem:[#allocation5 + $0x31c] sm:$0xf]
    %v341 = vld [vmem:[#allocation5 + $0x320] sm:$0xf]
    %v342 = vld [vmem:[#allocation5 + $0x324] sm:$0xf]
    %v343 = vld [vmem:[#allocation5 + $0x328] sm:$0xf]
    %v344 = vld [vmem:[#allocation5 + $0x32c] sm:$0xf]
    %v345 = vld [vmem:[#allocation5 + $0x330] sm:$0xf]
    %v346 = vld [vmem:[#allocation5 + $0x334] sm:$0xf]
    %v347 = vld [vmem:[#allocation5 + $0x338] sm:$0xf]
    %v348 = vld [vmem:[#allocation5 + $0x33c] sm:$0xf]
    %v349 = vld [vmem:[#allocation5 + $0x340] sm:$0xf]
    %v350 = vld [vmem:[#allocation5 + $0x344] sm:$0xf]
    %v351 = vld [vmem:[#allocation5 + $0x348] sm:$0xf]
    %v352 = vld [vmem:[#allocation5 + $0x34c] sm:$0xf]
    %v353 = vld [vmem:[#allocation5 + $0x350] sm:$0xf]
    %v354 = vld [vmem:[#allocation5 + $0x354] sm:$0xf]
    %v355 = vld [vmem:[#allocation5 + $0x358] sm:$0xf]
    %v356 = vld [vmem:[#allocation5 + $0x35c] sm:$0xf]
    %v357 = vld [vmem:[#allocation5 + $0x360] sm:$0xf]
    %v358 = vld [vmem:[#allocation5 + $0x364] sm:$0xf]
    %v359 = vld [vmem:[#allocation5 + $0x368] sm:$0xf]
    %v360 = vld [vmem:[#allocation5 + $0x36c] sm:$0xf]
    %v361 = vld [vmem:[#allocation5 + $0x370] sm:$0xf]
    %v362 = vld [vmem:[#allocation5 + $0x374] sm:$0xf]
    %v363 = vld [vmem:[#allocation5 + $0x378] sm:$0xf]
    %v364 = vld [vmem:[#allocation5 + $0x37c] sm:$0xf]
    %v365 = vld [vmem:[#allocation5 + $0x380] sm:$0xf]
    %v366 = vld [vmem:[#allocation5 + $0x384] sm:$0xf]
    %v367 = vld [vmem:[#allocation5 + $0x388] sm:$0xf]
    %v368 = vld [vmem:[#allocation5 + $0x38c] sm:$0xf]
    %v369 = vld [vmem:[#allocation5 + $0x390] sm:$0xf]
    %v370 = vld [vmem:[#allocation5 + $0x394] sm:$0xf]
    %v371 = vld [vmem:[#allocation5 + $0x398] sm:$0xf]
    %v372 = vld [vmem:[#allocation5 + $0x39c] sm:$0xf]
    %v373 = vld [vmem:[#allocation5 + $0x3a0] sm:$0xf]
    %v374 = vld [vmem:[#allocation5 + $0x3a4] sm:$0xf]
    %v375 = vld [vmem:[#allocation5 + $0x3a8] sm:$0xf]
    %v376 = vld [vmem:[#allocation5 + $0x3ac] sm:$0xf]
    %v377 = vld [vmem:[#allocation5 + $0x3b0] sm:$0xf]
    %v378 = vld [vmem:[#allocation5 + $0x3b4] sm:$0xf]
    %v379 = vld [vmem:[#allocation5 + $0x3b8] sm:$0xf]
    %v380 = vld [vmem:[#allocation5 + $0x3bc] sm:$0xf]
    %v381 = vld [vmem:[#allocation5 + $0x3c0] sm:$0xf]
    %v382 = vld [vmem:[#allocation5 + $0x3c4] sm:$0xf]
    %v383 = vld [vmem:[#allocation5 + $0x3c8] sm:$0xf]
    %v384 = vld [vmem:[#allocation5 + $0x3cc] sm:$0xf]
    %v385 = vld [vmem:[#allocation5 + $0x3d0] sm:$0xf]
    %v386 = vld [vmem:[#allocation5 + $0x3d4] sm:$0xf]
    %v387 = vld [vmem:[#allocation5 + $0x3d8] sm:$0xf]
    %v388 = vld [vmem:[#allocation5 + $0x3dc] sm:$0xf]
    %v389 = vld [vmem:[#allocation5 + $0x3e0] sm:$0xf]
    %v390 = vld [vmem:[#allocation5 + $0x3e4] sm:$0xf]
    %v391 = vld [vmem:[#allocation5 + $0x3e8] sm:$0xf]
    %v392 = vld [vmem:[#allocation5 + $0x3ec] sm:$0xf]
    %v393 = vld [vmem:[#allocation5 + $0x3f0] sm:$0xf]
    %v394 = vld [vmem:[#allocation5 + $0x3f4] sm:$0xf]
    %v395 = vld [vmem:[#allocation5 + $0x3f8] sm:$0xf]
    %v396 = vld [vmem:[#allocation5 + $0x3fc] sm:$0xf]
    %v397 = vld [vmem:[#allocation5 + $0x400] sm:$0xf]
    %v398 = vld [vmem:[#allocation5 + $0x404] sm:$0xf]
    %v399 = vld [vmem:[#allocation5 + $0x408] sm:$0xf]
    %v400 = vld [vmem:[#allocation5 + $0x40c] sm:$0xf]
    %v401 = vld [vmem:[#allocation5 + $0x410] sm:$0xf]
    %v402 = vld [vmem:[#allocation5 + $0x414] sm:$0xf]
    %v403 = vld [vmem:[#allocation5 + $0x418] sm:$0xf]
    %v404 = vld [vmem:[#allocation5 + $0x41c] sm:$0xf]
    %v405 = vld [vmem:[#allocation5 + $0x420] sm:$0xf]
    %v406 = vld [vmem:[#allocation5 + $0x424] sm:$0xf]
    %v407 = vld [vmem:[#allocation5 + $0x428] sm:$0xf]
    %v408 = vld [vmem:[#allocation5 + $0x42c] sm:$0xf]
    %v409 = vld [vmem:[#allocation5 + $0x430] sm:$0xf]
    %v410 = vld [vmem:[#allocation5 + $0x434] sm:$0xf]
    %v411 = vld [vmem:[#allocation5 + $0x438] sm:$0xf]
    %v412 = vld [vmem:[#allocation5 + $0x43c] sm:$0xf]
    %v413 = vld [vmem:[#allocation5 + $0x440] sm:$0xf]
    %v414 = vld [vmem:[#allocation5 + $0x444] sm:$0xf]
    %v415 = vld [vmem:[#allocation5 + $0x448] sm:$0xf]
    %v416 = vld [vmem:[#allocation5 + $0x44c] sm:$0xf]
    %v417 = vld [vmem:[#allocation5 + $0x450] sm:$0xf]
    %v418 = vld [vmem:[#allocation5 + $0x454] sm:$0xf]
    %v419 = vld [vmem:[#allocation5 + $0x458] sm:$0xf]
    %v420 = vld [vmem:[#allocation5 + $0x45c] sm:$0xf]
    %v421 = vld [vmem:[#allocation5 + $0x460] sm:$0xf]
    %v422 = vld [vmem:[#allocation5 + $0x464] sm:$0xf]
    %v423 = vld [vmem:[#allocation5 + $0x468] sm:$0xf]
    %v424 = vld [vmem:[#allocation5 + $0x46c] sm:$0xf]
    %v425 = vld [vmem:[#allocation5 + $0x470] sm:$0xf]
    %v426 = vld [vmem:[#allocation5 + $0x474] sm:$0xf]
    %v427 = vld [vmem:[#allocation5 + $0x478] sm:$0xf]
    %v428 = vld [vmem:[#allocation5 + $0x47c] sm:$0xf]
    %v429 = vld [vmem:[#allocation5 + $0x480] sm:$0xf]
    %v430 = vld [vmem:[#allocation5 + $0x484] sm:$0xf]
    %v431 = vld [vmem:[#allocation5 + $0x488] sm:$0xf]
    %v432 = vld [vmem:[#allocation5 + $0x48c] sm:$0xf]
    %v433 = vld [vmem:[#allocation5 + $0x490] sm:$0xf]
    %v434 = vld [vmem:[#allocation5 + $0x494] sm:$0xf]
    %v435 = vld [vmem:[#allocation5 + $0x498] sm:$0xf]
    %v436 = vld [vmem:[#allocation5 + $0x49c] sm:$0xf]
    %v437 = vld [vmem:[#allocation5 + $0x4a0] sm:$0xf]
    %v438 = vld [vmem:[#allocation5 + $0x4a4] sm:$0xf]
    %v439 = vld [vmem:[#allocation5 + $0x4a8] sm:$0xf]
    %v440 = vld [vmem:[#allocation5 + $0x4ac] sm:$0xf]
    %v441 = vld [vmem:[#allocation5 + $0x4b0] sm:$0xf]
    %v442 = vld [vmem:[#allocation5 + $0x4b4] sm:$0xf]
    %v443 = vld [vmem:[#allocation5 + $0x4b8] sm:$0xf]
    %v444 = vld [vmem:[#allocation5 + $0x4bc] sm:$0xf]
    %v445 = vld [vmem:[#allocation5 + $0x4c0] sm:$0xf]
    %v446 = vld [vmem:[#allocation5 + $0x4c4] sm:$0xf]
    %v447 = vld [vmem:[#allocation5 + $0x4c8] sm:$0xf]
    %v448 = vld [vmem:[#allocation5 + $0x4cc] sm:$0xf]
    %v449 = vld [vmem:[#allocation5 + $0x4d0] sm:$0xf]
    %v450 = vld [vmem:[#allocation5 + $0x4d4] sm:$0xf]
    %v451 = vld [vmem:[#allocation5 + $0x4d8] sm:$0xf]
    %v452 = vld [vmem:[#allocation5 + $0x4dc] sm:$0xf]
    %v453 = vld [vmem:[#allocation5 + $0x4e0] sm:$0xf]
    %v454 = vld [vmem:[#allocation5 + $0x4e4] sm:$0xf]
    %v455 = vld [vmem:[#allocation5 + $0x4e8] sm:$0xf]
    %v456 = vld [vmem:[#allocation5 + $0x4ec] sm:$0xf]
    %v457 = vld [vmem:[#allocation5 + $0x4f0] sm:$0xf]
    %v458 = vld [vmem:[#allocation5 + $0x4f4] sm:$0xf]
    %v459 = vld [vmem:[#allocation5 + $0x4f8] sm:$0xf]
    %v460 = vld [vmem:[#allocation5 + $0x4fc] sm:$0xf]
    %v461 = vld [vmem:[#allocation5 + $0x500] sm:$0xf]
    %v462 = vld [vmem:[#allocation5 + $0x504] sm:$0xf]
    %v463 = vld [vmem:[#allocation5 + $0x508] sm:$0xf]
    %v464 = vld [vmem:[#allocation5 + $0x50c] sm:$0xf]
    %v465 = vld [vmem:[#allocation5 + $0x510] sm:$0xf]
    %v466 = vld [vmem:[#allocation5 + $0x514] sm:$0xf]
    %v467 = vld [vmem:[#allocation5 + $0x518] sm:$0xf]
    %v468 = vld [vmem:[#allocation5 + $0x51c] sm:$0xf]
    %v469 = vld [vmem:[#allocation5 + $0x520] sm:$0xf]
    %v470 = vld [vmem:[#allocation5 + $0x524] sm:$0xf]
    %v471 = vld [vmem:[#allocation5 + $0x528] sm:$0xf]
    %v472 = vld [vmem:[#allocation5 + $0x52c] sm:$0xf]
    %v473 = vld [vmem:[#allocation5 + $0x530] sm:$0xf]
    %v474 = vld [vmem:[#allocation5 + $0x534] sm:$0xf]
    %v475 = vld [vmem:[#allocation5 + $0x538] sm:$0xf]
    %v476 = vld [vmem:[#allocation5 + $0x53c] sm:$0xf]
    %v477 = vld [vmem:[#allocation5 + $0x540] sm:$0xf]
    %v478 = vld [vmem:[#allocation5 + $0x544] sm:$0xf]
    %v479 = vld [vmem:[#allocation5 + $0x548] sm:$0xf]
    %v480 = vld [vmem:[#allocation5 + $0x54c] sm:$0xf]
    %v481 = vld [vmem:[#allocation5 + $0x550] sm:$0xf]
    %v482 = vld [vmem:[#allocation5 + $0x554] sm:$0xf]
    %v483 = vld [vmem:[#allocation5 + $0x558] sm:$0xf]
    %v484 = vld [vmem:[#allocation5 + $0x55c] sm:$0xf]
    %v485 = vld [vmem:[#allocation5 + $0x560] sm:$0xf]
    %v486 = vld [vmem:[#allocation5 + $0x564] sm:$0xf]
    %v487 = vld [vmem:[#allocation5 + $0x568] sm:$0xf]
    %v488 = vld [vmem:[#allocation5 + $0x56c] sm:$0xf]
    %v489 = vld [vmem:[#allocation5 + $0x570] sm:$0xf]
    %v490 = vld [vmem:[#allocation5 + $0x574] sm:$0xf]
    %v491 = vld [vmem:[#allocation5 + $0x578] sm:$0xf]
    %v492 = vld [vmem:[#allocation5 + $0x57c] sm:$0xf]
    %v493 = vld [vmem:[#allocation5 + $0x580] sm:$0xf]
    %v494 = vld [vmem:[#allocation5 + $0x584] sm:$0xf]
    %v495 = vld [vmem:[#allocation5 + $0x588] sm:$0xf]
    %v496 = vld [vmem:[#allocation5 + $0x58c] sm:$0xf]
    %v497 = vld [vmem:[#allocation5 + $0x590] sm:$0xf]
    %v498 = vld [vmem:[#allocation5 + $0x594] sm:$0xf]
    %v499 = vld [vmem:[#allocation5 + $0x598] sm:$0xf]
    %v500 = vld [vmem:[#allocation5 + $0x59c] sm:$0xf]
    %v501 = vld [vmem:[#allocation5 + $0x5a0] sm:$0xf]
    %v502 = vld [vmem:[#allocation5 + $0x5a4] sm:$0xf]
    %v503 = vld [vmem:[#allocation5 + $0x5a8] sm:$0xf]
    %v504 = vld [vmem:[#allocation5 + $0x5ac] sm:$0xf]
    %v505 = vld [vmem:[#allocation5 + $0x5b0] sm:$0xf]
    %v506 = vld [vmem:[#allocation5 + $0x5b4] sm:$0xf]
    %v507 = vld [vmem:[#allocation5 + $0x5b8] sm:$0xf]
    %v508 = vld [vmem:[#allocation5 + $0x5bc] sm:$0xf]
    %v509 = vld [vmem:[#allocation5 + $0x5c0] sm:$0xf]
    %v510 = vld [vmem:[#allocation5 + $0x5c4] sm:$0xf]
    %v511 = vld [vmem:[#allocation5 + $0x5c8] sm:$0xf]
    %v512 = vld [vmem:[#allocation5 + $0x5cc] sm:$0xf]
    %v513 = vld [vmem:[#allocation5 + $0x5d0] sm:$0xf]
    %v514 = vld [vmem:[#allocation5 + $0x5d4] sm:$0xf]
    %v515 = vld [vmem:[#allocation5 + $0x5d8] sm:$0xf]
    %v516 = vld [vmem:[#allocation5 + $0x5dc] sm:$0xf]
    %v517 = vld [vmem:[#allocation5 + $0x5e0] sm:$0xf]
    %v518 = vld [vmem:[#allocation5 + $0x5e4] sm:$0xf]
    %v519 = vld [vmem:[#allocation5 + $0x5e8] sm:$0xf]
    %v520 = vld [vmem:[#allocation5 + $0x5ec] sm:$0xf]
    %v521 = vld [vmem:[#allocation5 + $0x5f0] sm:$0xf]
    %v522 = vld [vmem:[#allocation5 + $0x5f4] sm:$0xf]
    %v523 = vld [vmem:[#allocation5 + $0x5f8] sm:$0xf]
    %v524 = vld [vmem:[#allocation5 + $0x5fc] sm:$0xf]
    %v525 = vld [vmem:[#allocation5 + $0x600] sm:$0xf]
    %v526 = vld [vmem:[#allocation5 + $0x604] sm:$0xf]
    %v527 = vld [vmem:[#allocation5 + $0x608] sm:$0xf]
    %v528 = vld [vmem:[#allocation5 + $0x60c] sm:$0xf]
    %v529 = vld [vmem:[#allocation5 + $0x610] sm:$0xf]
    %v530 = vld [vmem:[#allocation5 + $0x614] sm:$0xf]
    %v531 = vld [vmem:[#allocation5 + $0x618] sm:$0xf]
    %v532 = vld [vmem:[#allocation5 + $0x61c] sm:$0xf]
    %v533 = vld [vmem:[#allocation5 + $0x620] sm:$0xf]
    %v534 = vld [vmem:[#allocation5 + $0x624] sm:$0xf]
    %v535 = vld [vmem:[#allocation5 + $0x628] sm:$0xf]
    %v536 = vld [vmem:[#allocation5 + $0x62c] sm:$0xf]
    %v537 = vld [vmem:[#allocation5 + $0x630] sm:$0xf]
    %v538 = vld [vmem:[#allocation5 + $0x634] sm:$0xf]
    %v539 = vld [vmem:[#allocation5 + $0x638] sm:$0xf]
    %v540 = vld [vmem:[#allocation5 + $0x63c] sm:$0xf]
    %v541 = vld [vmem:[#allocation5 + $0x640] sm:$0xf]
    %v542 = vld [vmem:[#allocation5 + $0x644] sm:$0xf]
    %v543 = vld [vmem:[#allocation5 + $0x648] sm:$0xf]
    %v544 = vld [vmem:[#allocation5 + $0x64c] sm:$0xf]
    %v545 = vld [vmem:[#allocation5 + $0x650] sm:$0xf]
    %v546 = vld [vmem:[#allocation5 + $0x654] sm:$0xf]
    %v547 = vld [vmem:[#allocation5 + $0x658] sm:$0xf]
    %v548 = vld [vmem:[#allocation5 + $0x65c] sm:$0xf]
    %v549 = vld [vmem:[#allocation5 + $0x660] sm:$0xf]
    %v550 = vld [vmem:[#allocation5 + $0x664] sm:$0xf]
    %v551 = vld [vmem:[#allocation5 + $0x668] sm:$0xf]
    %v552 = vld [vmem:[#allocation5 + $0x66c] sm:$0xf]
    %v553 = vld [vmem:[#allocation5 + $0x670] sm:$0xf]
    %v554 = vld [vmem:[#allocation5 + $0x674] sm:$0xf]
    %v555 = vld [vmem:[#allocation5 + $0x678] sm:$0xf]
    %v556 = vld [vmem:[#allocation5 + $0x67c] sm:$0xf]
    %v557 = vld [vmem:[#allocation5 + $0x680] sm:$0xf]
    %v558 = vld [vmem:[#allocation5 + $0x684] sm:$0xf]
    %v559 = vld [vmem:[#allocation5 + $0x688] sm:$0xf]
    %v560 = vld [vmem:[#allocation5 + $0x68c] sm:$0xf]
    %v561 = vld [vmem:[#allocation5 + $0x690] sm:$0xf]
    %v562 = vld [vmem:[#allocation5 + $0x694] sm:$0xf]
    %v563 = vld [vmem:[#allocation5 + $0x698] sm:$0xf]
    %v564 = vld [vmem:[#allocation5 + $0x69c] sm:$0xf]
    %v565 = vld [vmem:[#allocation5 + $0x6a0] sm:$0xf]
    %v566 = vld [vmem:[#allocation5 + $0x6a4] sm:$0xf]
    %v567 = vld [vmem:[#allocation5 + $0x6a8] sm:$0xf]
    %v568 = vld [vmem:[#allocation5 + $0x6ac] sm:$0xf]
    %v569 = vld [vmem:[#allocation5 + $0x6b0] sm:$0xf]
    %v570 = vld [vmem:[#allocation5 + $0x6b4] sm:$0xf]
    %v571 = vld [vmem:[#allocation5 + $0x6b8] sm:$0xf]
    %v572 = vld [vmem:[#allocation5 + $0x6bc] sm:$0xf]
    %v573 = vld [vmem:[#allocation5 + $0x6c0] sm:$0xf]
    %v574 = vld [vmem:[#allocation5 + $0x6c4] sm:$0xf]
    %v575 = vld [vmem:[#allocation5 + $0x6c8] sm:$0xf]
    %v576 = vld [vmem:[#allocation5 + $0x6cc] sm:$0xf]
    %v577 = vld [vmem:[#allocation5 + $0x6d0] sm:$0xf]
    %v578 = vld [vmem:[#allocation5 + $0x6d4] sm:$0xf]
    %v579 = vld [vmem:[#allocation5 + $0x6d8] sm:$0xf]
    %v580 = vld [vmem:[#allocation5 + $0x6dc] sm:$0xf]
    %v581 = vld [vmem:[#allocation5 + $0x6e0] sm:$0xf]
    %v582 = vld [vmem:[#allocation5 + $0x6e4] sm:$0xf]
    %v583 = vld [vmem:[#allocation5 + $0x6e8] sm:$0xf]
    %v584 = vld [vmem:[#allocation5 + $0x6ec] sm:$0xf]
    %v585 = vld [vmem:[#allocation5 + $0x6f0] sm:$0xf]
    %v586 = vld [vmem:[#allocation5 + $0x6f4] sm:$0xf]
    %v587 = vld [vmem:[#allocation5 + $0x6f8] sm:$0xf]
    %v588 = vld [vmem:[#allocation5 + $0x6fc] sm:$0xf]
    %v589 = vld [vmem:[#allocation5 + $0x700] sm:$0xf]
    %v590 = vld [vmem:[#allocation5 + $0x704] sm:$0xf]
    %v591 = vld [vmem:[#allocation5 + $0x708] sm:$0xf]
    %v592 = vld [vmem:[#allocation5 + $0x70c] sm:$0xf]
    %v593 = vld [vmem:[#allocation5 + $0x710] sm:$0xf]
    %v594 = vld [vmem:[#allocation5 + $0x714] sm:$0xf]
    %v595 = vld [vmem:[#allocation5 + $0x718] sm:$0xf]
    %v596 = vld [vmem:[#allocation5 + $0x71c] sm:$0xf]
    %v597 = vld [vmem:[#allocation5 + $0x720] sm:$0xf]
    %v598 = vld [vmem:[#allocation5 + $0x724] sm:$0xf]
    %v599 = vld [vmem:[#allocation5 + $0x728] sm:$0xf]
    %v600 = vld [vmem:[#allocation5 + $0x72c] sm:$0xf]
    %v601 = vld [vmem:[#allocation5 + $0x730] sm:$0xf]
    %v602 = vld [vmem:[#allocation5 + $0x734] sm:$0xf]
    %v603 = vld [vmem:[#allocation5 + $0x738] sm:$0xf]
    %v604 = vld [vmem:[#allocation5 + $0x73c] sm:$0xf]
    %v605 = vld [vmem:[#allocation5 + $0x740] sm:$0xf]
    %v606 = vld [vmem:[#allocation5 + $0x744] sm:$0xf]
    %v607 = vld [vmem:[#allocation5 + $0x748] sm:$0xf]
    %v608 = vld [vmem:[#allocation5 + $0x74c] sm:$0xf]
    %v609 = vld [vmem:[#allocation5 + $0x750] sm:$0xf]
    %v610 = vld [vmem:[#allocation5 + $0x754] sm:$0xf]
    %v611 = vld [vmem:[#allocation5 + $0x758] sm:$0xf]
    %v612 = vld [vmem:[#allocation5 + $0x75c] sm:$0xf]
    %v613 = vld [vmem:[#allocation5 + $0x760] sm:$0xf]
    %v614 = vld [vmem:[#allocation5 + $0x764] sm:$0xf]
    %v615 = vld [vmem:[#allocation5 + $0x768] sm:$0xf]
    %v616 = vld [vmem:[#allocation5 + $0x76c] sm:$0xf]
    %v617 = vld [vmem:[#allocation5 + $0x770] sm:$0xf]
    %v618 = vld [vmem:[#allocation5 + $0x774] sm:$0xf]
    %v619 = vld [vmem:[#allocation5 + $0x778] sm:$0xf]
    %v620 = vld [vmem:[#allocation5 + $0x77c] sm:$0xf]
    %v621 = vld [vmem:[#allocation5 + $0x780] sm:$0xf]
    %v622 = vld [vmem:[#allocation5 + $0x784] sm:$0xf]
    %v623 = vld [vmem:[#allocation5 + $0x788] sm:$0xf]
    %v624 = vld [vmem:[#allocation5 + $0x78c] sm:$0xf]
    %v625 = vld [vmem:[#allocation5 + $0x790] sm:$0xf]
    %v626 = vld [vmem:[#allocation5 + $0x794] sm:$0xf]
    %v627 = vld [vmem:[#allocation5 + $0x798] sm:$0xf]
    %v628 = vld [vmem:[#allocation5 + $0x79c] sm:$0xf]
    %v629 = vld [vmem:[#allocation5 + $0x7a0] sm:$0xf]
    %v630 = vld [vmem:[#allocation5 + $0x7a4] sm:$0xf]
    %v631 = vld [vmem:[#allocation5 + $0x7a8] sm:$0xf]
    %v632 = vld [vmem:[#allocation5 + $0x7ac] sm:$0xf]
    %v633 = vld [vmem:[#allocation5 + $0x7b0] sm:$0xf]
    %v634 = vld [vmem:[#allocation5 + $0x7b4] sm:$0xf]
    %v635 = vld [vmem:[#allocation5 + $0x7b8] sm:$0xf]
    %v636 = vld [vmem:[#allocation5 + $0x7bc] sm:$0xf]
    %v637 = vld [vmem:[#allocation5 + $0x7c0] sm:$0xf]
    %v638 = vld [vmem:[#allocation5 + $0x7c4] sm:$0xf]
    %v639 = vld [vmem:[#allocation5 + $0x7c8] sm:$0xf]
    %v640 = vld [vmem:[#allocation5 + $0x7cc] sm:$0xf]
    %v641 = vld [vmem:[#allocation5 + $0x7d0] sm:$0xf]
    %v642 = vld [vmem:[#allocation5 + $0x7d4] sm:$0xf]
    %v643 = vld [vmem:[#allocation5 + $0x7d8] sm:$0xf]
    %v644 = vld [vmem:[#allocation5 + $0x7dc] sm:$0xf]
    %v645 = vld [vmem:[#allocation5 + $0x7e0] sm:$0xf]
    %v646 = vld [vmem:[#allocation5 + $0x7e4] sm:$0xf]
    %v647 = vld [vmem:[#allocation5 + $0x7e8] sm:$0xf]
    %v648 = vld [vmem:[#allocation5 + $0x7ec] sm:$0xf]
    %v649 = vld [vmem:[#allocation5 + $0x7f0] sm:$0xf]
    %v650 = vld [vmem:[#allocation5 + $0x7f4] sm:$0xf]
    %v651 = vld [vmem:[#allocation5 + $0x7f8] sm:$0xf]
    %v652 = vld [vmem:[#allocation5 + $0x7fc] sm:$0xf]
    %v653 = vld [vmem:[#allocation5 + $0x800] sm:$0xf]
    %v654 = vld [vmem:[#allocation5 + $0x804] sm:$0xf]
    %v655 = vld [vmem:[#allocation5 + $0x808] sm:$0xf]
    %v656 = vld [vmem:[#allocation5 + $0x80c] sm:$0xf]
    %v657 = vld [vmem:[#allocation5 + $0x810] sm:$0xf]
    %v658 = vld [vmem:[#allocation5 + $0x814] sm:$0xf]
    %v659 = vld [vmem:[#allocation5 + $0x818] sm:$0xf]
    %v660 = vld [vmem:[#allocation5 + $0x81c] sm:$0xf]
    %v661 = vld [vmem:[#allocation5 + $0x820] sm:$0xf]
    %v662 = vld [vmem:[#allocation5 + $0x824] sm:$0xf]
    %v663 = vld [vmem:[#allocation5 + $0x828] sm:$0xf]
    %v664 = vld [vmem:[#allocation5 + $0x82c] sm:$0xf]
    %v665 = vld [vmem:[#allocation5 + $0x830] sm:$0xf]
    %v666 = vld [vmem:[#allocation5 + $0x834] sm:$0xf]
    %v667 = vld [vmem:[#allocation5 + $0x838] sm:$0xf]
    %v668 = vld [vmem:[#allocation5 + $0x83c] sm:$0xf]
    %v669 = vld [vmem:[#allocation5 + $0x840] sm:$0xf]
    %v670 = vld [vmem:[#allocation5 + $0x844] sm:$0xf]
    %v671 = vld [vmem:[#allocation5 + $0x848] sm:$0xf]
    %v672 = vld [vmem:[#allocation5 + $0x84c] sm:$0xf]
    %v673 = vld [vmem:[#allocation5 + $0x850] sm:$0xf]
    %v674 = vld [vmem:[#allocation5 + $0x854] sm:$0xf]
    %v675 = vld [vmem:[#allocation5 + $0x858] sm:$0xf]
    %v676 = vld [vmem:[#allocation5 + $0x85c] sm:$0xf]
    %v677 = vld [vmem:[#allocation5 + $0x860] sm:$0xf]
    %v678 = vld [vmem:[#allocation5 + $0x864] sm:$0xf]
    %v679 = vld [vmem:[#allocation5 + $0x868] sm:$0xf]
    %v680 = vld [vmem:[#allocation5 + $0x86c] sm:$0xf]
    %v681 = vld [vmem:[#allocation5 + $0x870] sm:$0xf]
    %v682 = vld [vmem:[#allocation5 + $0x874] sm:$0xf]
    %v683 = vld [vmem:[#allocation5 + $0x878] sm:$0xf]
    %v684 = vld [vmem:[#allocation5 + $0x87c] sm:$0xf]
    %v685 = vld [vmem:[#allocation5 + $0x880] sm:$0xf]
    %v686 = vld [vmem:[#allocation5 + $0x884] sm:$0xf]
    %v687 = vld [vmem:[#allocation5 + $0x888] sm:$0xf]
    %v688 = vld [vmem:[#allocation5 + $0x88c] sm:$0xf]
    %v689 = vld [vmem:[#allocation5 + $0x890] sm:$0xf]
    %v690 = vld [vmem:[#allocation5 + $0x894] sm:$0xf]
    %v691 = vld [vmem:[#allocation5 + $0x898] sm:$0xf]
    %v692 = vld [vmem:[#allocation5 + $0x89c] sm:$0xf]
    %v693 = vld [vmem:[#allocation5 + $0x8a0] sm:$0xf]
    %v694 = vld [vmem:[#allocation5 + $0x8a4] sm:$0xf]
    %v695 = vld [vmem:[#allocation5 + $0x8a8] sm:$0xf]
    %v696 = vld [vmem:[#allocation5 + $0x8ac] sm:$0xf]
    %v697 = vld [vmem:[#allocation5 + $0x8b0] sm:$0xf]
    %v698 = vld [vmem:[#allocation5 + $0x8b4] sm:$0xf]
    %v699 = vld [vmem:[#allocation5 + $0x8b8] sm:$0xf]
    %v700 = vld [vmem:[#allocation5 + $0x8bc] sm:$0xf]
    %v701 = vld [vmem:[#allocation5 + $0x8c0] sm:$0xf]
    %v702 = vld [vmem:[#allocation5 + $0x8c4] sm:$0xf]
    %v703 = vld [vmem:[#allocation5 + $0x8c8] sm:$0xf]
    %v704 = vld [vmem:[#allocation5 + $0x8cc] sm:$0xf]
    %v705 = vld [vmem:[#allocation5 + $0x8d0] sm:$0xf]
    %v706 = vld [vmem:[#allocation5 + $0x8d4] sm:$0xf]
    %v707 = vld [vmem:[#allocation5 + $0x8d8] sm:$0xf]
    %v708 = vld [vmem:[#allocation5 + $0x8dc] sm:$0xf]
    %v709 = vld [vmem:[#allocation5 + $0x8e0] sm:$0xf]
    %v710 = vld [vmem:[#allocation5 + $0x8e4] sm:$0xf]
    %v711 = vld [vmem:[#allocation5 + $0x8e8] sm:$0xf]
    %v712 = vld [vmem:[#allocation5 + $0x8ec] sm:$0xf]
    %v713 = vld [vmem:[#allocation5 + $0x8f0] sm:$0xf]
    %v714 = vld [vmem:[#allocation5 + $0x8f4] sm:$0xf]
    %v715 = vld [vmem:[#allocation5 + $0x8f8] sm:$0xf]
    %v716 = vld [vmem:[#allocation5 + $0x8fc] sm:$0xf]
    %v717 = vld [vmem:[#allocation5 + $0x900] sm:$0xf]
    %v718 = vld [vmem:[#allocation5 + $0x904] sm:$0xf]
    %v719 = vld [vmem:[#allocation5 + $0x908] sm:$0xf]
    %v720 = vld [vmem:[#allocation5 + $0x90c] sm:$0xf]
    %v721 = vld [vmem:[#allocation5 + $0x910] sm:$0xf]
    %v722 = vld [vmem:[#allocation5 + $0x914] sm:$0xf]
    %v723 = vld [vmem:[#allocation5 + $0x918] sm:$0xf]
    %v724 = vld [vmem:[#allocation5 + $0x91c] sm:$0xf]
    %v725 = vld [vmem:[#allocation5 + $0x920] sm:$0xf]
    %v726 = vld [vmem:[#allocation5 + $0x924] sm:$0xf]
    %v727 = vld [vmem:[#allocation5 + $0x928] sm:$0xf]
    %v728 = vld [vmem:[#allocation5 + $0x92c] sm:$0xf]
    %v729 = vld [vmem:[#allocation5 + $0x930] sm:$0xf]
    %v730 = vld [vmem:[#allocation5 + $0x934] sm:$0xf]
    %v731 = vld [vmem:[#allocation5 + $0x938] sm:$0xf]
    %v732 = vld [vmem:[#allocation5 + $0x93c] sm:$0xf]
    %v733 = vld [vmem:[#allocation5 + $0x940] sm:$0xf]
    %v734 = vld [vmem:[#allocation5 + $0x944] sm:$0xf]
    %v735 = vld [vmem:[#allocation5 + $0x948] sm:$0xf]
    %v736 = vld [vmem:[#allocation5 + $0x94c] sm:$0xf]
    %v737 = vld [vmem:[#allocation5 + $0x950] sm:$0xf]
    %v738 = vld [vmem:[#allocation5 + $0x954] sm:$0xf]
    %v739 = vld [vmem:[#allocation5 + $0x958] sm:$0xf]
    %v740 = vld [vmem:[#allocation5 + $0x95c] sm:$0xf]
    %v741 = vld [vmem:[#allocation5 + $0x960] sm:$0xf]
    %v742 = vld [vmem:[#allocation5 + $0x964] sm:$0xf]
    %v743 = vld [vmem:[#allocation5 + $0x968] sm:$0xf]
    %v744 = vld [vmem:[#allocation5 + $0x96c] sm:$0xf]
    %v745 = vld [vmem:[#allocation5 + $0x970] sm:$0xf]
    %v746 = vld [vmem:[#allocation5 + $0x974] sm:$0xf]
    %v747 = vld [vmem:[#allocation5 + $0x978] sm:$0xf]
    %v748 = vld [vmem:[#allocation5 + $0x97c] sm:$0xf]
    %v749 = vld [vmem:[#allocation5 + $0x980] sm:$0xf]
    %v750 = vld [vmem:[#allocation5 + $0x984] sm:$0xf]
    %v751 = vld [vmem:[#allocation5 + $0x988] sm:$0xf]
    %v752 = vld [vmem:[#allocation5 + $0x98c] sm:$0xf]
    %v753 = vld [vmem:[#allocation5 + $0x990] sm:$0xf]
    %v754 = vld [vmem:[#allocation5 + $0x994] sm:$0xf]
    %v755 = vld [vmem:[#allocation5 + $0x998] sm:$0xf]
    %v756 = vld [vmem:[#allocation5 + $0x99c] sm:$0xf]
    %v757 = vld [vmem:[#allocation5 + $0x9a0] sm:$0xf]
    %v758 = vld [vmem:[#allocation5 + $0x9a4] sm:$0xf]
    %v759 = vld [vmem:[#allocation5 + $0x9a8] sm:$0xf]
    %v760 = vld [vmem:[#allocation5 + $0x9ac] sm:$0xf]
    %v761 = vld [vmem:[#allocation5 + $0x9b0] sm:$0xf]
    %v762 = vld [vmem:[#allocation5 + $0x9b4] sm:$0xf]
    %v763 = vld [vmem:[#allocation5 + $0x9b8] sm:$0xf]
    %v764 = vld [vmem:[#allocation5 + $0x9bc] sm:$0xf]
    %v765 = vld [vmem:[#allocation5 + $0x9c0] sm:$0xf]
    %v766 = vld [vmem:[#allocation5 + $0x9c4] sm:$0xf]
    %v767 = vld [vmem:[#allocation5 + $0x9c8] sm:$0xf]
    %v768 = vld [vmem:[#allocation5 + $0x9cc] sm:$0xf]
    %v769 = vld [vmem:[#allocation5 + $0x9d0] sm:$0xf]
    %v770 = vld [vmem:[#allocation5 + $0x9d4] sm:$0xf]
    %v771 = vld [vmem:[#allocation5 + $0x9d8] sm:$0xf]
    %v772 = vld [vmem:[#allocation5 + $0x9dc] sm:$0xf]
    %v773 = vld [vmem:[#allocation5 + $0x9e0] sm:$0xf]
    %v774 = vld [vmem:[#allocation5 + $0x9e4] sm:$0xf]
    %v775 = vld [vmem:[#allocation5 + $0x9e8] sm:$0xf]
    %v776 = vld [vmem:[#allocation5 + $0x9ec] sm:$0xf]
    %v777 = vld [vmem:[#allocation5 + $0x9f0] sm:$0xf]
    %v778 = vld [vmem:[#allocation5 + $0x9f4] sm:$0xf]
    %v779 = vld [vmem:[#allocation5 + $0x9f8] sm:$0xf]
    %v780 = vld [vmem:[#allocation5 + $0x9fc] sm:$0xf]
    %v781 = vld [vmem:[#allocation5 + $0xa00] sm:$0xf]
    %v782 = vld [vmem:[#allocation5 + $0xa04] sm:$0xf]
    %v783 = vld [vmem:[#allocation5 + $0xa08] sm:$0xf]
    %v784 = vld [vmem:[#allocation5 + $0xa0c] sm:$0xf]
    %v785 = vld [vmem:[#allocation5 + $0xa10] sm:$0xf]
    %v786 = vld [vmem:[#allocation5 + $0xa14] sm:$0xf]
    %v787 = vld [vmem:[#allocation5 + $0xa18] sm:$0xf]
    %v788 = vld [vmem:[#allocation5 + $0xa1c] sm:$0xf]
    %v789 = vld [vmem:[#allocation5 + $0xa20] sm:$0xf]
    %v790 = vld [vmem:[#allocation5 + $0xa24] sm:$0xf]
    %v791 = vld [vmem:[#allocation5 + $0xa28] sm:$0xf]
    %v792 = vld [vmem:[#allocation5 + $0xa2c] sm:$0xf]
    %v793 = vld [vmem:[#allocation5 + $0xa30] sm:$0xf]
    %v794 = vld [vmem:[#allocation5 + $0xa34] sm:$0xf]
    %v795 = vld [vmem:[#allocation5 + $0xa38] sm:$0xf]
    %v796 = vld [vmem:[#allocation5 + $0xa3c] sm:$0xf]
    %v797 = vld [vmem:[#allocation5 + $0xa40] sm:$0xf]
    %v798 = vld [vmem:[#allocation5 + $0xa44] sm:$0xf]
    %v799 = vld [vmem:[#allocation5 + $0xa48] sm:$0xf]
    %v800 = vld [vmem:[#allocation5 + $0xa4c] sm:$0xf]
    %v801 = vld [vmem:[#allocation5 + $0xa50] sm:$0xf]
    %v802 = vld [vmem:[#allocation5 + $0xa54] sm:$0xf]
    %v803 = vld [vmem:[#allocation5 + $0xa58] sm:$0xf]
    %v804 = vld [vmem:[#allocation5 + $0xa5c] sm:$0xf]
    %v805 = vld [vmem:[#allocation5 + $0xa60] sm:$0xf]
    %v806 = vld [vmem:[#allocation5 + $0xa64] sm:$0xf]
    %v807 = vld [vmem:[#allocation5 + $0xa68] sm:$0xf]
    %v808 = vld [vmem:[#allocation5 + $0xa6c] sm:$0xf]
    %v809 = vld [vmem:[#allocation5 + $0xa70] sm:$0xf]
    %v810 = vld [vmem:[#allocation5 + $0xa74] sm:$0xf]
    %v811 = vld [vmem:[#allocation5 + $0xa78] sm:$0xf]
    %v812 = vld [vmem:[#allocation5 + $0xa7c] sm:$0xf]
    %v813 = vld [vmem:[#allocation5 + $0xa80] sm:$0xf]
    %v814 = vld [vmem:[#allocation5 + $0xa84] sm:$0xf]
    %v815 = vld [vmem:[#allocation5 + $0xa88] sm:$0xf]
    %v816 = vld [vmem:[#allocation5 + $0xa8c] sm:$0xf]
    %v817 = vld [vmem:[#allocation5 + $0xa90] sm:$0xf]
    %v818 = vld [vmem:[#allocation5 + $0xa94] sm:$0xf]
    %v819 = vld [vmem:[#allocation5 + $0xa98] sm:$0xf]
    %v820 = vld [vmem:[#allocation5 + $0xa9c] sm:$0xf]
    %v821 = vld [vmem:[#allocation5 + $0xaa0] sm:$0xf]
    %v822 = vld [vmem:[#allocation5 + $0xaa4] sm:$0xf]
    %v823 = vld [vmem:[#allocation5 + $0xaa8] sm:$0xf]
    %v824 = vld [vmem:[#allocation5 + $0xaac] sm:$0xf]
    %v825 = vld [vmem:[#allocation5 + $0xab0] sm:$0xf]
    %v826 = vld [vmem:[#allocation5 + $0xab4] sm:$0xf]
    %v827 = vld [vmem:[#allocation5 + $0xab8] sm:$0xf]
    %v828 = vld [vmem:[#allocation5 + $0xabc] sm:$0xf]
    %v829 = vld [vmem:[#allocation5 + $0xac0] sm:$0xf]
    %v830 = vld [vmem:[#allocation5 + $0xac4] sm:$0xf]
    %v831 = vld [vmem:[#allocation5 + $0xac8] sm:$0xf]
    %v832 = vld [vmem:[#allocation5 + $0xacc] sm:$0xf]
    %v833 = vld [vmem:[#allocation5 + $0xad0] sm:$0xf]
    %v834 = vld [vmem:[#allocation5 + $0xad4] sm:$0xf]
    %v835 = vld [vmem:[#allocation5 + $0xad8] sm:$0xf]
    %v836 = vld [vmem:[#allocation5 + $0xadc] sm:$0xf]
    %v837 = vld [vmem:[#allocation5 + $0xae0] sm:$0xf]
    %v838 = vld [vmem:[#allocation5 + $0xae4] sm:$0xf]
    %v839 = vld [vmem:[#allocation5 + $0xae8] sm:$0xf]
    %v840 = vld [vmem:[#allocation5 + $0xaec] sm:$0xf]
    %v841 = vld [vmem:[#allocation5 + $0xaf0] sm:$0xf]
    %v842 = vld [vmem:[#allocation5 + $0xaf4] sm:$0xf]
    %v843 = vld [vmem:[#allocation5 + $0xaf8] sm:$0xf]
    %v844 = vld [vmem:[#allocation5 + $0xafc] sm:$0xf]
    %v845 = vld [vmem:[#allocation5 + $0xb00] sm:$0xf]
    %v846 = vld [vmem:[#allocation5 + $0xb04] sm:$0xf]
    %v847 = vld [vmem:[#allocation5 + $0xb08] sm:$0xf]
    %v848 = vld [vmem:[#allocation5 + $0xb0c] sm:$0xf]
    %v849 = vld [vmem:[#allocation5 + $0xb10] sm:$0xf]
    %v850 = vld [vmem:[#allocation5 + $0xb14] sm:$0xf]
    %v851 = vld [vmem:[#allocation5 + $0xb18] sm:$0xf]
    %v852 = vld [vmem:[#allocation5 + $0xb1c] sm:$0xf]
    %v853 = vld [vmem:[#allocation5 + $0xb20] sm:$0xf]
    %v854 = vld [vmem:[#allocation5 + $0xb24] sm:$0xf]
    %v855 = vld [vmem:[#allocation5 + $0xb28] sm:$0xf]
    %v856 = vld [vmem:[#allocation5 + $0xb2c] sm:$0xf]
    %v857 = vld [vmem:[#allocation5 + $0xb30] sm:$0xf]
    %v858 = vld [vmem:[#allocation5 + $0xb34] sm:$0xf]
    %v859 = vld [vmem:[#allocation5 + $0xb38] sm:$0xf]
    %v860 = vld [vmem:[#allocation5 + $0xb3c] sm:$0xf]
    %v861 = vld [vmem:[#allocation5 + $0xb40] sm:$0xf]
    %v862 = vld [vmem:[#allocation5 + $0xb44] sm:$0xf]
    %v863 = vld [vmem:[#allocation5 + $0xb48] sm:$0xf]
    %v864 = vld [vmem:[#allocation5 + $0xb4c] sm:$0xf]
    %v865 = vld [vmem:[#allocation5 + $0xb50] sm:$0xf]
    %v866 = vld [vmem:[#allocation5 + $0xb54] sm:$0xf]
    %v867 = vld [vmem:[#allocation5 + $0xb58] sm:$0xf]
    %v868 = vld [vmem:[#allocation5 + $0xb5c] sm:$0xf]
    %v869 = vld [vmem:[#allocation5 + $0xb60] sm:$0xf]
    %v870 = vld [vmem:[#allocation5 + $0xb64] sm:$0xf]
    %v871 = vld [vmem:[#allocation5 + $0xb68] sm:$0xf]
    %v872 = vld [vmem:[#allocation5 + $0xb6c] sm:$0xf]
    %v873 = vld [vmem:[#allocation5 + $0xb70] sm:$0xf]
    %v874 = vld [vmem:[#allocation5 + $0xb74] sm:$0xf]
    %v875 = vld [vmem:[#allocation5 + $0xb78] sm:$0xf]
    %v876 = vld [vmem:[#allocation5 + $0xb7c] sm:$0xf]
    %v877 = vld [vmem:[#allocation5 + $0xb80] sm:$0xf]
    %v878 = vld [vmem:[#allocation5 + $0xb84] sm:$0xf]
    %v879 = vld [vmem:[#allocation5 + $0xb88] sm:$0xf]
    %v880 = vld [vmem:[#allocation5 + $0xb8c] sm:$0xf]
    %v881 = vld [vmem:[#allocation5 + $0xb90] sm:$0xf]
    %v882 = vld [vmem:[#allocation5 + $0xb94] sm:$0xf]
    %v883 = vld [vmem:[#allocation5 + $0xb98] sm:$0xf]
    %v884 = vld [vmem:[#allocation5 + $0xb9c] sm:$0xf]
    %v885 = vld [vmem:[#allocation5 + $0xba0] sm:$0xf]
    %v886 = vld [vmem:[#allocation5 + $0xba4] sm:$0xf]
    %v887 = vld [vmem:[#allocation5 + $0xba8] sm:$0xf]
    %v888 = vld [vmem:[#allocation5 + $0xbac] sm:$0xf]
    %v889 = vld [vmem:[#allocation5 + $0xbb0] sm:$0xf]
    %v890 = vld [vmem:[#allocation5 + $0xbb4] sm:$0xf]
    %v891 = vld [vmem:[#allocation5 + $0xbb8] sm:$0xf]
    %v892 = vld [vmem:[#allocation5 + $0xbbc] sm:$0xf]
    %v893 = vld [vmem:[#allocation5 + $0xbc0] sm:$0xf]
    %v894 = vld [vmem:[#allocation5 + $0xbc4] sm:$0xf]
    %v895 = vld [vmem:[#allocation5 + $0xbc8] sm:$0xf]
    %v896 = vld [vmem:[#allocation5 + $0xbcc] sm:$0xf]
    %v897 = vld [vmem:[#allocation5 + $0xbd0] sm:$0xf]
    %v898 = vld [vmem:[#allocation5 + $0xbd4] sm:$0xf]
    %v899 = vld [vmem:[#allocation5 + $0xbd8] sm:$0xf]
    %v900 = vld [vmem:[#allocation5 + $0xbdc] sm:$0xf]
    %v901 = vld [vmem:[#allocation5 + $0xbe0] sm:$0xf]
    %v902 = vld [vmem:[#allocation5 + $0xbe4] sm:$0xf]
    %v903 = vld [vmem:[#allocation5 + $0xbe8] sm:$0xf]
    %v904 = vld [vmem:[#allocation5 + $0xbec] sm:$0xf]
    %v905 = vld [vmem:[#allocation5 + $0xbf0] sm:$0xf]
    %v906 = vld [vmem:[#allocation5 + $0xbf4] sm:$0xf]
    %v907 = vld [vmem:[#allocation5 + $0xbf8] sm:$0xf]
    %v908 = vld [vmem:[#allocation5 + $0xbfc] sm:$0xf]
    %v909 = vld [vmem:[#allocation5 + $0xc00] sm:$0xf]
    %v910 = vld [vmem:[#allocation5 + $0xc04] sm:$0xf]
    %v911 = vld [vmem:[#allocation5 + $0xc08] sm:$0xf]
    %v912 = vld [vmem:[#allocation5 + $0xc0c] sm:$0xf]
    %v913 = vld [vmem:[#allocation5 + $0xc10] sm:$0xf]
    %v914 = vld [vmem:[#allocation5 + $0xc14] sm:$0xf]
    %v915 = vld [vmem:[#allocation5 + $0xc18] sm:$0xf]
    %v916 = vld [vmem:[#allocation5 + $0xc1c] sm:$0xf]
    %v917 = vld [vmem:[#allocation5 + $0xc20] sm:$0xf]
    %v918 = vld [vmem:[#allocation5 + $0xc24] sm:$0xf]
    %v919 = vld [vmem:[#allocation5 + $0xc28] sm:$0xf]
    %v920 = vld [vmem:[#allocation5 + $0xc2c] sm:$0xf]
    %v921 = vld [vmem:[#allocation5 + $0xc30] sm:$0xf]
    %v922 = vld [vmem:[#allocation5 + $0xc34] sm:$0xf]
    %v923 = vld [vmem:[#allocation5 + $0xc38] sm:$0xf]
    %v924 = vld [vmem:[#allocation5 + $0xc3c] sm:$0xf]
    %v925 = vld [vmem:[#allocation5 + $0xc40] sm:$0xf]
    %v926 = vld [vmem:[#allocation5 + $0xc44] sm:$0xf]
    %v927 = vld [vmem:[#allocation5 + $0xc48] sm:$0xf]
    %v928 = vld [vmem:[#allocation5 + $0xc4c] sm:$0xf]
    %v929 = vld [vmem:[#allocation5 + $0xc50] sm:$0xf]
    %v930 = vld [vmem:[#allocation5 + $0xc54] sm:$0xf]
    %v931 = vld [vmem:[#allocation5 + $0xc58] sm:$0xf]
    %v932 = vld [vmem:[#allocation5 + $0xc5c] sm:$0xf]
    %v933 = vld [vmem:[#allocation5 + $0xc60] sm:$0xf]
    %v934 = vld [vmem:[#allocation5 + $0xc64] sm:$0xf]
    %v935 = vld [vmem:[#allocation5 + $0xc68] sm:$0xf]
    %v936 = vld [vmem:[#allocation5 + $0xc6c] sm:$0xf]
    %v937 = vld [vmem:[#allocation5 + $0xc70] sm:$0xf]
    %v938 = vld [vmem:[#allocation5 + $0xc74] sm:$0xf]
    %v939 = vld [vmem:[#allocation5 + $0xc78] sm:$0xf]
    %v940 = vld [vmem:[#allocation5 + $0xc7c] sm:$0xf]
    %v941 = vld [vmem:[#allocation5 + $0xc80] sm:$0xf]
    %v942 = vld [vmem:[#allocation5 + $0xc84] sm:$0xf]
    %v943 = vld [vmem:[#allocation5 + $0xc88] sm:$0xf]
    %v944 = vld [vmem:[#allocation5 + $0xc8c] sm:$0xf]
    %v945 = vld [vmem:[#allocation5 + $0xc90] sm:$0xf]
    %v946 = vld [vmem:[#allocation5 + $0xc94] sm:$0xf]
    %v947 = vld [vmem:[#allocation5 + $0xc98] sm:$0xf]
    %v948 = vld [vmem:[#allocation5 + $0xc9c] sm:$0xf]
    %v949 = vld [vmem:[#allocation5 + $0xca0] sm:$0xf]
    %v950 = vld [vmem:[#allocation5 + $0xca4] sm:$0xf]
    %v951 = vld [vmem:[#allocation5 + $0xca8] sm:$0xf]
    %v952 = vld [vmem:[#allocation5 + $0xcac] sm:$0xf]
    %v953 = vld [vmem:[#allocation5 + $0xcb0] sm:$0xf]
    %v954 = vld [vmem:[#allocation5 + $0xcb4] sm:$0xf]
    %v955 = vld [vmem:[#allocation5 + $0xcb8] sm:$0xf]
    %v956 = vld [vmem:[#allocation5 + $0xcbc] sm:$0xf]
    %v957 = vld [vmem:[#allocation5 + $0xcc0] sm:$0xf]
    %v958 = vld [vmem:[#allocation5 + $0xcc4] sm:$0xf]
    %v959 = vld [vmem:[#allocation5 + $0xcc8] sm:$0xf]
    %v960 = vld [vmem:[#allocation5 + $0xccc] sm:$0xf]
    %v961 = vld [vmem:[#allocation5 + $0xcd0] sm:$0xf]
    %v962 = vld [vmem:[#allocation5 + $0xcd4] sm:$0xf]
    %v963 = vld [vmem:[#allocation5 + $0xcd8] sm:$0xf]
    %v964 = vld [vmem:[#allocation5 + $0xcdc] sm:$0xf]
    %v965 = vld [vmem:[#allocation5 + $0xce0] sm:$0xf]
    %v966 = vld [vmem:[#allocation5 + $0xce4] sm:$0xf]
    %v967 = vld [vmem:[#allocation5 + $0xce8] sm:$0xf]
    %v968 = vld [vmem:[#allocation5 + $0xcec] sm:$0xf]
    %v969 = vld [vmem:[#allocation5 + $0xcf0] sm:$0xf]
    %v970 = vld [vmem:[#allocation5 + $0xcf4] sm:$0xf]
    %v971 = vld [vmem:[#allocation5 + $0xcf8] sm:$0xf]
    %v972 = vld [vmem:[#allocation5 + $0xcfc] sm:$0xf]
    %v973 = vld [vmem:[#allocation5 + $0xd00] sm:$0xf]
    %v974 = vld [vmem:[#allocation5 + $0xd04] sm:$0xf]
    %v975 = vld [vmem:[#allocation5 + $0xd08] sm:$0xf]
    %v976 = vld [vmem:[#allocation5 + $0xd0c] sm:$0xf]
    %v977 = vld [vmem:[#allocation5 + $0xd10] sm:$0xf]
    %v978 = vld [vmem:[#allocation5 + $0xd14] sm:$0xf]
    %v979 = vld [vmem:[#allocation5 + $0xd18] sm:$0xf]
    %v980 = vld [vmem:[#allocation5 + $0xd1c] sm:$0xf]
    %v981 = vld [vmem:[#allocation5 + $0xd20] sm:$0xf]
    %v982 = vld [vmem:[#allocation5 + $0xd24] sm:$0xf]
    %v983 = vld [vmem:[#allocation5 + $0xd28] sm:$0xf]
    %v984 = vld [vmem:[#allocation5 + $0xd2c] sm:$0xf]
    %v985 = vld [vmem:[#allocation5 + $0xd30] sm:$0xf]
    %v986 = vld [vmem:[#allocation5 + $0xd34] sm:$0xf]
    %v987 = vld [vmem:[#allocation5 + $0xd38] sm:$0xf]
    %v988 = vld [vmem:[#allocation5 + $0xd3c] sm:$0xf]
    %v989 = vld [vmem:[#allocation5 + $0xd40] sm:$0xf]
    %v990 = vld [vmem:[#allocation5 + $0xd44] sm:$0xf]
    %v991 = vld [vmem:[#allocation5 + $0xd48] sm:$0xf]
    %v992 = vld [vmem:[#allocation5 + $0xd4c] sm:$0xf]
    %v993 = vld [vmem:[#allocation5 + $0xd50] sm:$0xf]
    %v994 = vld [vmem:[#allocation5 + $0xd54] sm:$0xf]
    %v995 = vld [vmem:[#allocation5 + $0xd58] sm:$0xf]
    %v996 = vld [vmem:[#allocation5 + $0xd5c] sm:$0xf]
    %v997 = vld [vmem:[#allocation5 + $0xd60] sm:$0xf]
    %v998 = vld [vmem:[#allocation5 + $0xd64] sm:$0xf]
    %v999 = vld [vmem:[#allocation5 + $0xd68] sm:$0xf]
    %v1000 = vld [vmem:[#allocation5 + $0xd6c] sm:$0xf]
    %v1001 = vld [vmem:[#allocation5 + $0xd70] sm:$0xf]
    %v1002 = vld [vmem:[#allocation5 + $0xd74] sm:$0xf]
    %v1003 = vld [vmem:[#allocation5 + $0xd78] sm:$0xf]
    %v1004 = vld [vmem:[#allocation5 + $0xd7c] sm:$0xf]
    %v1005 = vld [vmem:[#allocation5 + $0xd80] sm:$0xf]
    %v1006 = vld [vmem:[#allocation5 + $0xd84] sm:$0xf]
    %v1007 = vld [vmem:[#allocation5 + $0xd88] sm:$0xf]
    %v1008 = vld [vmem:[#allocation5 + $0xd8c] sm:$0xf]
    %v1009 = vld [vmem:[#allocation5 + $0xd90] sm:$0xf]
    %v1010 = vld [vmem:[#allocation5 + $0xd94] sm:$0xf]
    %v1011 = vld [vmem:[#allocation5 + $0xd98] sm:$0xf]
    %v1012 = vld [vmem:[#allocation5 + $0xd9c] sm:$0xf]
    %v1013 = vld [vmem:[#allocation5 + $0xda0] sm:$0xf]
    %v1014 = vld [vmem:[#allocation5 + $0xda4] sm:$0xf]
    %v1015 = vld [vmem:[#allocation5 + $0xda8] sm:$0xf]
    %v1016 = vld [vmem:[#allocation5 + $0xdac] sm:$0xf]
    %v1017 = vld [vmem:[#allocation5 + $0xdb0] sm:$0xf]
    %v1018 = vld [vmem:[#allocation5 + $0xdb4] sm:$0xf]
    %v1019 = vld [vmem:[#allocation5 + $0xdb8] sm:$0xf]
    %v1020 = vld [vmem:[#allocation5 + $0xdbc] sm:$0xf]
    %v1021 = vld [vmem:[#allocation5 + $0xdc0] sm:$0xf]
    %v1022 = vld [vmem:[#allocation5 + $0xdc4] sm:$0xf]
    %v1023 = vld [vmem:[#allocation5 + $0xdc8] sm:$0xf]
    %v1024 = vld [vmem:[#allocation5 + $0xdcc] sm:$0xf]
    %v1025 = vld [vmem:[#allocation5 + $0xdd0] sm:$0xf]
    %v1026 = vld [vmem:[#allocation5 + $0xdd4] sm:$0xf]
    %v1027 = vld [vmem:[#allocation5 + $0xdd8] sm:$0xf]
    %v1028 = vld [vmem:[#allocation5 + $0xddc] sm:$0xf]
    %v1029 = vld [vmem:[#allocation5 + $0xde0] sm:$0xf]
    %v1030 = vld [vmem:[#allocation5 + $0xde4] sm:$0xf]
    %v1031 = vld [vmem:[#allocation5 + $0xde8] sm:$0xf]
    %v1032 = vld [vmem:[#allocation5 + $0xdec] sm:$0xf]
    %v1033 = vld [vmem:[#allocation5 + $0xdf0] sm:$0xf]
    %v1034 = vld [vmem:[#allocation5 + $0xdf4] sm:$0xf]
    %v1035 = vld [vmem:[#allocation5 + $0xdf8] sm:$0xf]
    %v1036 = vld [vmem:[#allocation5 + $0xdfc] sm:$0xf]
    %v1037 = vld [vmem:[#allocation5 + $0xe00] sm:$0xf]
    %v1038 = vld [vmem:[#allocation5 + $0xe04] sm:$0xf]
    %v1039 = vld [vmem:[#allocation5 + $0xe08] sm:$0xf]
    %v1040 = vld [vmem:[#allocation5 + $0xe0c] sm:$0xf]
    %v1041 = vld [vmem:[#allocation5 + $0xe10] sm:$0xf]
    %v1042 = vld [vmem:[#allocation5 + $0xe14] sm:$0xf]
    %v1043 = vld [vmem:[#allocation5 + $0xe18] sm:$0xf]
    %v1044 = vld [vmem:[#allocation5 + $0xe1c] sm:$0xf]
    %v1045 = vld [vmem:[#allocation5 + $0xe20] sm:$0xf]
    %v1046 = vld [vmem:[#allocation5 + $0xe24] sm:$0xf]
    %v1047 = vld [vmem:[#allocation5 + $0xe28] sm:$0xf]
    %v1048 = vld [vmem:[#allocation5 + $0xe2c] sm:$0xf]
    %v1049 = vld [vmem:[#allocation5 + $0xe30] sm:$0xf]
    %v1050 = vld [vmem:[#allocation5 + $0xe34] sm:$0xf]
    %v1051 = vld [vmem:[#allocation5 + $0xe38] sm:$0xf]
    %v1052 = vld [vmem:[#allocation5 + $0xe3c] sm:$0xf]
    %v1053 = vld [vmem:[#allocation5 + $0xe40] sm:$0xf]
    %v1054 = vld [vmem:[#allocation5 + $0xe44] sm:$0xf]
    %v1055 = vld [vmem:[#allocation5 + $0xe48] sm:$0xf]
    %v1056 = vld [vmem:[#allocation5 + $0xe4c] sm:$0xf]
    %v1057 = vld [vmem:[#allocation5 + $0xe50] sm:$0xf]
    %v1058 = vld [vmem:[#allocation5 + $0xe54] sm:$0xf]
    %v1059 = vld [vmem:[#allocation5 + $0xe58] sm:$0xf]
    %v1060 = vld [vmem:[#allocation5 + $0xe5c] sm:$0xf]
    %v1061 = vld [vmem:[#allocation5 + $0xe60] sm:$0xf]
    %v1062 = vld [vmem:[#allocation5 + $0xe64] sm:$0xf]
    %v1063 = vld [vmem:[#allocation5 + $0xe68] sm:$0xf]
    %v1064 = vld [vmem:[#allocation5 + $0xe6c] sm:$0xf]
    %v1065 = vld [vmem:[#allocation5 + $0xe70] sm:$0xf]
    %v1066 = vld [vmem:[#allocation5 + $0xe74] sm:$0xf]
    %v1067 = vld [vmem:[#allocation5 + $0xe78] sm:$0xf]
    %v1068 = vld [vmem:[#allocation5 + $0xe7c] sm:$0xf]
    %v1069 = vld [vmem:[#allocation5 + $0xe80] sm:$0xf]
    %v1070 = vld [vmem:[#allocation5 + $0xe84] sm:$0xf]
    %v1071 = vld [vmem:[#allocation5 + $0xe88] sm:$0xf]
    %v1072 = vld [vmem:[#allocation5 + $0xe8c] sm:$0xf]
    %v1073 = vld [vmem:[#allocation5 + $0xe90] sm:$0xf]
    %v1074 = vld [vmem:[#allocation5 + $0xe94] sm:$0xf]
    %v1075 = vld [vmem:[#allocation5 + $0xe98] sm:$0xf]
    %v1076 = vld [vmem:[#allocation5 + $0xe9c] sm:$0xf]
    %v1077 = vld [vmem:[#allocation5 + $0xea0] sm:$0xf]
    %v1078 = vld [vmem:[#allocation5 + $0xea4] sm:$0xf]
    %v1079 = vld [vmem:[#allocation5 + $0xea8] sm:$0xf]
    %v1080 = vld [vmem:[#allocation5 + $0xeac] sm:$0xf]
    %v1081 = vld [vmem:[#allocation5 + $0xeb0] sm:$0xf]
    %v1082 = vld [vmem:[#allocation5 + $0xeb4] sm:$0xf]
    %v1083 = vld [vmem:[#allocation5 + $0xeb8] sm:$0xf]
    %v1084 = vld [vmem:[#allocation5 + $0xebc] sm:$0xf]
    %v1085 = vld [vmem:[#allocation5 + $0xec0] sm:$0xf]
    %v1086 = vld [vmem:[#allocation5 + $0xec4] sm:$0xf]
    %v1087 = vld [vmem:[#allocation5 + $0xec8] sm:$0xf]
    %v1088 = vld [vmem:[#allocation5 + $0xecc] sm:$0xf]
    %v1089 = vld [vmem:[#allocation5 + $0xed0] sm:$0xf]
    %v1090 = vld [vmem:[#allocation5 + $0xed4] sm:$0xf]
    %v1091 = vld [vmem:[#allocation5 + $0xed8] sm:$0xf]
    %v1092 = vld [vmem:[#allocation5 + $0xedc] sm:$0xf]
    %v1093 = vld [vmem:[#allocation5 + $0xee0] sm:$0xf]
    %v1094 = vld [vmem:[#allocation5 + $0xee4] sm:$0xf]
    %v1095 = vld [vmem:[#allocation5 + $0xee8] sm:$0xf]
    %v1096 = vld [vmem:[#allocation5 + $0xeec] sm:$0xf]
    %v1097 = vld [vmem:[#allocation5 + $0xef0] sm:$0xf]
    %v1098 = vld [vmem:[#allocation5 + $0xef4] sm:$0xf]
    %v1099 = vld [vmem:[#allocation5 + $0xef8] sm:$0xf]
    %v1100 = vld [vmem:[#allocation5 + $0xefc] sm:$0xf]
    %v1101 = vld [vmem:[#allocation5 + $0xf00] sm:$0xf]
    %v1102 = vld [vmem:[#allocation5 + $0xf04] sm:$0xf]
    %v1103 = vld [vmem:[#allocation5 + $0xf08] sm:$0xf]
    %v1104 = vld [vmem:[#allocation5 + $0xf0c] sm:$0xf]
    %v1105 = vld [vmem:[#allocation5 + $0xf10] sm:$0xf]
    %v1106 = vld [vmem:[#allocation5 + $0xf14] sm:$0xf]
    %v1107 = vld [vmem:[#allocation5 + $0xf18] sm:$0xf]
    %v1108 = vld [vmem:[#allocation5 + $0xf1c] sm:$0xf]
    %v1109 = vld [vmem:[#allocation5 + $0xf20] sm:$0xf]
    %v1110 = vld [vmem:[#allocation5 + $0xf24] sm:$0xf]
    %v1111 = vld [vmem:[#allocation5 + $0xf28] sm:$0xf]
    %v1112 = vld [vmem:[#allocation5 + $0xf2c] sm:$0xf]
    %v1113 = vld [vmem:[#allocation5 + $0xf30] sm:$0xf]
    %v1114 = vld [vmem:[#allocation5 + $0xf34] sm:$0xf]
    %v1115 = vld [vmem:[#allocation5 + $0xf38] sm:$0xf]
    %v1116 = vld [vmem:[#allocation5 + $0xf3c] sm:$0xf]
    %v1117 = vld [vmem:[#allocation5 + $0xf40] sm:$0xf]
    %v1118 = vld [vmem:[#allocation5 + $0xf44] sm:$0xf]
    %v1119 = vld [vmem:[#allocation5 + $0xf48] sm:$0xf]
    %v1120 = vld [vmem:[#allocation5 + $0xf4c] sm:$0xf]
    %v1121 = vld [vmem:[#allocation5 + $0xf50] sm:$0xf]
    %v1122 = vld [vmem:[#allocation5 + $0xf54] sm:$0xf]
    %v1123 = vld [vmem:[#allocation5 + $0xf58] sm:$0xf]
    %v1124 = vld [vmem:[#allocation5 + $0xf5c] sm:$0xf]
    %v1125 = vld [vmem:[#allocation5 + $0xf60] sm:$0xf]
    %v1126 = vld [vmem:[#allocation5 + $0xf64] sm:$0xf]
    %v1127 = vld [vmem:[#allocation5 + $0xf68] sm:$0xf]
    %v1128 = vld [vmem:[#allocation5 + $0xf6c] sm:$0xf]
    %v1129 = vld [vmem:[#allocation5 + $0xf70] sm:$0xf]
    %v1130 = vld [vmem:[#allocation5 + $0xf74] sm:$0xf]
    %v1131 = vld [vmem:[#allocation5 + $0xf78] sm:$0xf]
    %v1132 = vld [vmem:[#allocation5 + $0xf7c] sm:$0xf]
    %v1133 = vld [vmem:[#allocation5 + $0xf80] sm:$0xf]
    %v1134 = vld [vmem:[#allocation5 + $0xf84] sm:$0xf]
    %v1135 = vld [vmem:[#allocation5 + $0xf88] sm:$0xf]
    %v1136 = vld [vmem:[#allocation5 + $0xf8c] sm:$0xf]
    %v1137 = vld [vmem:[#allocation5 + $0xf90] sm:$0xf]
    %v1138 = vld [vmem:[#allocation5 + $0xf94] sm:$0xf]
    %v1139 = vld [vmem:[#allocation5 + $0xf98] sm:$0xf]
    %v1140 = vld [vmem:[#allocation5 + $0xf9c] sm:$0xf]
    %v1141 = vld [vmem:[#allocation5 + $0xfa0] sm:$0xf]
    %v1142 = vld [vmem:[#allocation5 + $0xfa4] sm:$0xf]
    %v1143 = vld [vmem:[#allocation5 + $0xfa8] sm:$0xf]
    %v1144 = vld [vmem:[#allocation5 + $0xfac] sm:$0xf]
    %v1145 = vld [vmem:[#allocation5 + $0xfb0] sm:$0xf]
    %v1146 = vld [vmem:[#allocation5 + $0xfb4] sm:$0xf]
    %v1147 = vld [vmem:[#allocation5 + $0xfb8] sm:$0xf]
    %v1148 = vld [vmem:[#allocation5 + $0xfbc] sm:$0xf]
    %v1149 = vld [vmem:[#allocation5 + $0xfc0] sm:$0xf]
    %v1150 = vld [vmem:[#allocation5 + $0xfc4] sm:$0xf]
    %v1151 = vld [vmem:[#allocation5 + $0xfc8] sm:$0xf]
    %v1152 = vld [vmem:[#allocation5 + $0xfcc] sm:$0xf]
    %v1153 = vld [vmem:[#allocation5 + $0xfd0] sm:$0xf]
    %v1154 = vld [vmem:[#allocation5 + $0xfd4] sm:$0xf]
    %v1155 = vld [vmem:[#allocation5 + $0xfd8] sm:$0xf]
    %v1156 = vld [vmem:[#allocation5 + $0xfdc] sm:$0xf]
    %v1157 = vld [vmem:[#allocation5 + $0xfe0] sm:$0xf]
    %v1158 = vld [vmem:[#allocation5 + $0xfe4] sm:$0xf]
    %v1159 = vld [vmem:[#allocation5 + $0xfe8] sm:$0xf]
    %v1160 = vld [vmem:[#allocation5 + $0xfec] sm:$0xf]
    %v1161 = vld [vmem:[#allocation5 + $0xff0] sm:$0xf]
    %v1162 = vld [vmem:[#allocation5 + $0xff4] sm:$0xf]
    %v1163 = vld [vmem:[#allocation5 + $0xff8] sm:$0xf]
    %v1164 = vld [vmem:[#allocation5 + $0xffc] sm:$0xf]
    %v1165 = vld [vmem:[#allocation5 + $0x1000] sm:$0xf]
    %v1166 = vld [vmem:[#allocation5 + $0x1004] sm:$0xf]
    %v1167 = vld [vmem:[#allocation5 + $0x1008] sm:$0xf]
    %v1168 = vld [vmem:[#allocation5 + $0x100c] sm:$0xf]
    %v1169 = vld [vmem:[#allocation5 + $0x1010] sm:$0xf]
    %v1170 = vld [vmem:[#allocation5 + $0x1014] sm:$0xf]
    %v1171 = vld [vmem:[#allocation5 + $0x1018] sm:$0xf]
    %v1172 = vld [vmem:[#allocation5 + $0x101c] sm:$0xf]
    %v1173 = vld [vmem:[#allocation5 + $0x1020] sm:$0xf]
    %v1174 = vld [vmem:[#allocation5 + $0x1024] sm:$0xf]
    %v1175 = vld [vmem:[#allocation5 + $0x1028] sm:$0xf]
    %v1176 = vld [vmem:[#allocation5 + $0x102c] sm:$0xf]
    %v1177 = vld [vmem:[#allocation5 + $0x1030] sm:$0xf]
    %v1178 = vld [vmem:[#allocation5 + $0x1034] sm:$0xf]
    %v1179 = vld [vmem:[#allocation5 + $0x1038] sm:$0xf]
    %v1180 = vld [vmem:[#allocation5 + $0x103c] sm:$0xf]
    %v1181 = vld [vmem:[#allocation5 + $0x1040] sm:$0xf]
    %v1182 = vld [vmem:[#allocation5 + $0x1044] sm:$0xf]
    %v1183 = vld [vmem:[#allocation5 + $0x1048] sm:$0xf]
    %v1184 = vld [vmem:[#allocation5 + $0x104c] sm:$0xf]
    %v1185 = vld [vmem:[#allocation5 + $0x1050] sm:$0xf]
    %v1186 = vld [vmem:[#allocation5 + $0x1054] sm:$0xf]
    %v1187 = vld [vmem:[#allocation5 + $0x1058] sm:$0xf]
    %v1188 = vld [vmem:[#allocation5 + $0x105c] sm:$0xf]
    %v1189 = vld [vmem:[#allocation5 + $0x1060] sm:$0xf]
    %v1190 = vld [vmem:[#allocation5 + $0x1064] sm:$0xf]
    %v1191 = vld [vmem:[#allocation5 + $0x1068] sm:$0xf]
    %v1192 = vld [vmem:[#allocation5 + $0x106c] sm:$0xf]
    %v1193 = vld [vmem:[#allocation5 + $0x1070] sm:$0xf]
    %v1194 = vld [vmem:[#allocation5 + $0x1074] sm:$0xf]
    %v1195 = vld [vmem:[#allocation5 + $0x1078] sm:$0xf]
    %v1196 = vld [vmem:[#allocation5 + $0x107c] sm:$0xf]
    %v1197 = vld [vmem:[#allocation5 + $0x1080] sm:$0xf]
    %v1198 = vld [vmem:[#allocation5 + $0x1084] sm:$0xf]
    %v1199 = vld [vmem:[#allocation5 + $0x1088] sm:$0xf]
    %v1200 = vld [vmem:[#allocation5 + $0x108c] sm:$0xf]
    %v1201 = vld [vmem:[#allocation5 + $0x1090] sm:$0xf]
    %v1202 = vld [vmem:[#allocation5 + $0x1094] sm:$0xf]
    %v1203 = vld [vmem:[#allocation5 + $0x1098] sm:$0xf]
    %v1204 = vld [vmem:[#allocation5 + $0x109c] sm:$0xf]
    %v1205 = vld [vmem:[#allocation5 + $0x10a0] sm:$0xf]
    %v1206 = vld [vmem:[#allocation5 + $0x10a4] sm:$0xf]
    %v1207 = vld [vmem:[#allocation5 + $0x10a8] sm:$0xf]
    %v1208 = vld [vmem:[#allocation5 + $0x10ac] sm:$0xf]
    %v1209 = vld [vmem:[#allocation5 + $0x10b0] sm:$0xf]
    %v1210 = vld [vmem:[#allocation5 + $0x10b4] sm:$0xf]
    %v1211 = vld [vmem:[#allocation5 + $0x10b8] sm:$0xf]
    %v1212 = vld [vmem:[#allocation5 + $0x10bc] sm:$0xf]
    %v1213 = vld [vmem:[#allocation5 + $0x10c0] sm:$0xf]
    %v1214 = vld [vmem:[#allocation5 + $0x10c4] sm:$0xf]
    %v1215 = vld [vmem:[#allocation5 + $0x10c8] sm:$0xf]
    %v1216 = vld [vmem:[#allocation5 + $0x10cc] sm:$0xf]
    %v1217 = vld [vmem:[#allocation5 + $0x10d0] sm:$0xf]
    %v1218 = vld [vmem:[#allocation5 + $0x10d4] sm:$0xf]
    %v1219 = vld [vmem:[#allocation5 + $0x10d8] sm:$0xf]
    %v1220 = vld [vmem:[#allocation5 + $0x10dc] sm:$0xf]
    %v1221 = vld [vmem:[#allocation5 + $0x10e0] sm:$0xf]
    %v1222 = vld [vmem:[#allocation5 + $0x10e4] sm:$0xf]
    %v1223 = vld [vmem:[#allocation5 + $0x10e8] sm:$0xf]
    %v1224 = vld [vmem:[#allocation5 + $0x10ec] sm:$0xf]
    %v1225 = vld [vmem:[#allocation5 + $0x10f0] sm:$0xf]
    %v1226 = vld [vmem:[#allocation5 + $0x10f4] sm:$0xf]
    %v1227 = vld [vmem:[#allocation5 + $0x10f8] sm:$0xf]
    %v1228 = vld [vmem:[#allocation5 + $0x10fc] sm:$0xf]
    %v1229 = vld [vmem:[#allocation5 + $0x1100] sm:$0xf]
    %v1230 = vld [vmem:[#allocation5 + $0x1104] sm:$0xf]
    %v1231 = vld [vmem:[#allocation5 + $0x1108] sm:$0xf]
    %v1232 = vld [vmem:[#allocation5 + $0x110c] sm:$0xf]
    %v1233 = vld [vmem:[#allocation5 + $0x1110] sm:$0xf]
    %v1234 = vld [vmem:[#allocation5 + $0x1114] sm:$0xf]
    %v1235 = vld [vmem:[#allocation5 + $0x1118] sm:$0xf]
    %v1236 = vld [vmem:[#allocation5 + $0x111c] sm:$0xf]
    %v1237 = vld [vmem:[#allocation5 + $0x1120] sm:$0xf]
    %v1238 = vld [vmem:[#allocation5 + $0x1124] sm:$0xf]
    %v1239 = vld [vmem:[#allocation5 + $0x1128] sm:$0xf]
    %v1240 = vld [vmem:[#allocation5 + $0x112c] sm:$0xf]
    %v1241 = vld [vmem:[#allocation5 + $0x1130] sm:$0xf]
    %v1242 = vld [vmem:[#allocation5 + $0x1134] sm:$0xf]
    %v1243 = vld [vmem:[#allocation5 + $0x1138] sm:$0xf]
    %v1244 = vld [vmem:[#allocation5 + $0x113c] sm:$0xf]
    %v1245 = vld [vmem:[#allocation5 + $0x1140] sm:$0xf]
    %v1246 = vld [vmem:[#allocation5 + $0x1144] sm:$0xf]
    %v1247 = vld [vmem:[#allocation5 + $0x1148] sm:$0xf]
    %v1248 = vld [vmem:[#allocation5 + $0x114c] sm:$0xf]
    %v1249 = vld [vmem:[#allocation5 + $0x1150] sm:$0xf]
    %v1250 = vld [vmem:[#allocation5 + $0x1154] sm:$0xf]
    %v1251 = vld [vmem:[#allocation5 + $0x1158] sm:$0xf]
    %v1252 = vld [vmem:[#allocation5 + $0x115c] sm:$0xf]
    %v1253 = vld [vmem:[#allocation5 + $0x1160] sm:$0xf]
    %v1254 = vld [vmem:[#allocation5 + $0x1164] sm:$0xf]
    %v1255 = vld [vmem:[#allocation5 + $0x1168] sm:$0xf]
    %v1256 = vld [vmem:[#allocation5 + $0x116c] sm:$0xf]
    %v1257 = vld [vmem:[#allocation5 + $0x1170] sm:$0xf]
    %v1258 = vld [vmem:[#allocation5 + $0x1174] sm:$0xf]
    %v1259 = vld [vmem:[#allocation5 + $0x1178] sm:$0xf]
    %v1260 = vld [vmem:[#allocation5 + $0x117c] sm:$0xf]
    %v1261 = vld [vmem:[#allocation5 + $0x1180] sm:$0xf]
    %v1262 = vld [vmem:[#allocation5 + $0x1184] sm:$0xf]
    %v1263 = vld [vmem:[#allocation5 + $0x1188] sm:$0xf]
    %v1264 = vld [vmem:[#allocation5 + $0x118c] sm:$0xf]
    %v1265 = vld [vmem:[#allocation5 + $0x1190] sm:$0xf]
    %v1266 = vld [vmem:[#allocation5 + $0x1194] sm:$0xf]
    %v1267 = vld [vmem:[#allocation5 + $0x1198] sm:$0xf]
    %v1268 = vld [vmem:[#allocation5 + $0x119c] sm:$0xf]
    %v1269 = vld [vmem:[#allocation5 + $0x11a0] sm:$0xf]
    %v1270 = vld [vmem:[#allocation5 + $0x11a4] sm:$0xf]
    %v1271 = vld [vmem:[#allocation5 + $0x11a8] sm:$0xf]
    %v1272 = vld [vmem:[#allocation5 + $0x11ac] sm:$0xf]
    %v1273 = vld [vmem:[#allocation5 + $0x11b0] sm:$0xf]
    %v1274 = vld [vmem:[#allocation5 + $0x11b4] sm:$0xf]
    %v1275 = vld [vmem:[#allocation5 + $0x11b8] sm:$0xf]
    %v1276 = vld [vmem:[#allocation5 + $0x11bc] sm:$0xf]
    %v1277 = vld [vmem:[#allocation5 + $0x11c0] sm:$0xf]
    %v1278 = vld [vmem:[#allocation5 + $0x11c4] sm:$0xf]
    %v1279 = vld [vmem:[#allocation5 + $0x11c8] sm:$0xf]
    %v1280 = vld [vmem:[#allocation5 + $0x11cc] sm:$0xf]
    %v1281 = vld [vmem:[#allocation5 + $0x11d0] sm:$0xf]
    %v1282 = vld [vmem:[#allocation5 + $0x11d4] sm:$0xf]
    %v1283 = vld [vmem:[#allocation5 + $0x11d8] sm:$0xf]
    %v1284 = vld [vmem:[#allocation5 + $0x11dc] sm:$0xf]
    %v1285 = vld [vmem:[#allocation5 + $0x11e0] sm:$0xf]
    %v1286 = vld [vmem:[#allocation5 + $0x11e4] sm:$0xf]
    %v1287 = vld [vmem:[#allocation5 + $0x11e8] sm:$0xf]
    %v1288 = vld [vmem:[#allocation5 + $0x11ec] sm:$0xf]
    %v1289 = vld [vmem:[#allocation5 + $0x11f0] sm:$0xf]
    %v1290 = vld [vmem:[#allocation5 + $0x11f4] sm:$0xf]
    %v1291 = vld [vmem:[#allocation5 + $0x11f8] sm:$0xf]
    %v1292 = vld [vmem:[#allocation5 + $0x11fc] sm:$0xf]
    %v1293 = vld [vmem:[#allocation5 + $0x1200] sm:$0xf]
    %v1294 = vld [vmem:[#allocation5 + $0x1204] sm:$0xf]
    %v1295 = vld [vmem:[#allocation5 + $0x1208] sm:$0xf]
    %v1296 = vld [vmem:[#allocation5 + $0x120c] sm:$0xf]
    %v1297 = vld [vmem:[#allocation5 + $0x1210] sm:$0xf]
    %v1298 = vld [vmem:[#allocation5 + $0x1214] sm:$0xf]
    %v1299 = vld [vmem:[#allocation5 + $0x1218] sm:$0xf]
    %v1300 = vld [vmem:[#allocation5 + $0x121c] sm:$0xf]
    %v1301 = vld [vmem:[#allocation5 + $0x1220] sm:$0xf]
    %v1302 = vld [vmem:[#allocation5 + $0x1224] sm:$0xf]
    %v1303 = vld [vmem:[#allocation5 + $0x1228] sm:$0xf]
    %v1304 = vld [vmem:[#allocation5 + $0x122c] sm:$0xf]
    %v1305 = vld [vmem:[#allocation5 + $0x1230] sm:$0xf]
    %v1306 = vld [vmem:[#allocation5 + $0x1234] sm:$0xf]
    %v1307 = vld [vmem:[#allocation5 + $0x1238] sm:$0xf]
    %v1308 = vld [vmem:[#allocation5 + $0x123c] sm:$0xf]
    %v1309 = vld [vmem:[#allocation5 + $0x1240] sm:$0xf]
    %v1310 = vld [vmem:[#allocation5 + $0x1244] sm:$0xf]
    %v1311 = vld [vmem:[#allocation5 + $0x1248] sm:$0xf]
    %v1312 = vld [vmem:[#allocation5 + $0x124c] sm:$0xf]
    %v1313 = vld [vmem:[#allocation5 + $0x1250] sm:$0xf]
    %v1314 = vld [vmem:[#allocation5 + $0x1254] sm:$0xf]
    %v1315 = vld [vmem:[#allocation5 + $0x1258] sm:$0xf]
    %v1316 = vld [vmem:[#allocation5 + $0x125c] sm:$0xf]
    %v1317 = vld [vmem:[#allocation5 + $0x1260] sm:$0xf]
    %v1318 = vld [vmem:[#allocation5 + $0x1264] sm:$0xf]
    %v1319 = vld [vmem:[#allocation5 + $0x1268] sm:$0xf]
    %v1320 = vld [vmem:[#allocation5 + $0x126c] sm:$0xf]
    %v1321 = vld [vmem:[#allocation5 + $0x1270] sm:$0xf]
    %v1322 = vld [vmem:[#allocation5 + $0x1274] sm:$0xf]
    %v1323 = vld [vmem:[#allocation5 + $0x1278] sm:$0xf]
    %v1324 = vld [vmem:[#allocation5 + $0x127c] sm:$0xf]
    %v1325 = vld [vmem:[#allocation5 + $0x1280] sm:$0xf]
    %v1326 = vld [vmem:[#allocation5 + $0x1284] sm:$0xf]
    %v1327 = vld [vmem:[#allocation5 + $0x1288] sm:$0xf]
    %v1328 = vld [vmem:[#allocation5 + $0x128c] sm:$0xf]
    %v1329 = vld [vmem:[#allocation5 + $0x1290] sm:$0xf]
    %v1330 = vld [vmem:[#allocation5 + $0x1294] sm:$0xf]
    %v1331 = vld [vmem:[#allocation5 + $0x1298] sm:$0xf]
    %v1332 = vld [vmem:[#allocation5 + $0x129c] sm:$0xf]
    %v1333 = vld [vmem:[#allocation5 + $0x12a0] sm:$0xf]
    %v1334 = vld [vmem:[#allocation5 + $0x12a4] sm:$0xf]
    %v1335 = vld [vmem:[#allocation5 + $0x12a8] sm:$0xf]
    %v1336 = vld [vmem:[#allocation5 + $0x12ac] sm:$0xf]
    %v1337 = vld [vmem:[#allocation5 + $0x12b0] sm:$0xf]
    %v1338 = vld [vmem:[#allocation5 + $0x12b4] sm:$0xf]
    %v1339 = vld [vmem:[#allocation5 + $0x12b8] sm:$0xf]
    %v1340 = vld [vmem:[#allocation5 + $0x12bc] sm:$0xf]
    %v1341 = vld [vmem:[#allocation5 + $0x12c0] sm:$0xf]
    %v1342 = vld [vmem:[#allocation5 + $0x12c4] sm:$0xf]
    %v1343 = vld [vmem:[#allocation5 + $0x12c8] sm:$0xf]
    %v1344 = vld [vmem:[#allocation5 + $0x12cc] sm:$0xf]
    %v1345 = vld [vmem:[#allocation5 + $0x12d0] sm:$0xf]
    %v1346 = vld [vmem:[#allocation5 + $0x12d4] sm:$0xf]
    %v1347 = vld [vmem:[#allocation5 + $0x12d8] sm:$0xf]
    %v1348 = vld [vmem:[#allocation5 + $0x12dc] sm:$0xf]
    %v1349 = vld [vmem:[#allocation5 + $0x12e0] sm:$0xf]
    %v1350 = vld [vmem:[#allocation5 + $0x12e4] sm:$0xf]
    %v1351 = vld [vmem:[#allocation5 + $0x12e8] sm:$0xf]
    %v1352 = vld [vmem:[#allocation5 + $0x12ec] sm:$0xf]
    %v1353 = vld [vmem:[#allocation5 + $0x12f0] sm:$0xf]
    %v1354 = vld [vmem:[#allocation5 + $0x12f4] sm:$0xf]
    %v1355 = vld [vmem:[#allocation5 + $0x12f8] sm:$0xf]
    %v1356 = vld [vmem:[#allocation5 + $0x12fc] sm:$0xf]
    %v1357 = vld [vmem:[#allocation5 + $0x1300] sm:$0xf]
    %v1358 = vld [vmem:[#allocation5 + $0x1304] sm:$0xf]
    %v1359 = vld [vmem:[#allocation5 + $0x1308] sm:$0xf]
    %v1360 = vld [vmem:[#allocation5 + $0x130c] sm:$0xf]
    %v1361 = vld [vmem:[#allocation5 + $0x1310] sm:$0xf]
    %v1362 = vld [vmem:[#allocation5 + $0x1314] sm:$0xf]
    %v1363 = vld [vmem:[#allocation5 + $0x1318] sm:$0xf]
    %v1364 = vld [vmem:[#allocation5 + $0x131c] sm:$0xf]
    %v1365 = vld [vmem:[#allocation5 + $0x1320] sm:$0xf]
    %v1366 = vld [vmem:[#allocation5 + $0x1324] sm:$0xf]
    %v1367 = vld [vmem:[#allocation5 + $0x1328] sm:$0xf]
    %v1368 = vld [vmem:[#allocation5 + $0x132c] sm:$0xf]
    %v1369 = vld [vmem:[#allocation5 + $0x1330] sm:$0xf]
    %v1370 = vld [vmem:[#allocation5 + $0x1334] sm:$0xf]
    %v1371 = vld [vmem:[#allocation5 + $0x1338] sm:$0xf]
    %v1372 = vld [vmem:[#allocation5 + $0x133c] sm:$0xf]
    %v1373 = vld [vmem:[#allocation5 + $0x1340] sm:$0xf]
    %v1374 = vld [vmem:[#allocation5 + $0x1344] sm:$0xf]
    %v1375 = vld [vmem:[#allocation5 + $0x1348] sm:$0xf]
    %v1376 = vld [vmem:[#allocation5 + $0x134c] sm:$0xf]
    %v1377 = vld [vmem:[#allocation5 + $0x1350] sm:$0xf]
    %v1378 = vld [vmem:[#allocation5 + $0x1354] sm:$0xf]
    %v1379 = vld [vmem:[#allocation5 + $0x1358] sm:$0xf]
    %v1380 = vld [vmem:[#allocation5 + $0x135c] sm:$0xf]
    %v1381 = vld [vmem:[#allocation5 + $0x1360] sm:$0xf]
    %v1382 = vld [vmem:[#allocation5 + $0x1364] sm:$0xf]
    %v1383 = vld [vmem:[#allocation5 + $0x1368] sm:$0xf]
    %v1384 = vld [vmem:[#allocation5 + $0x136c] sm:$0xf]
    %v1385 = vld [vmem:[#allocation5 + $0x1370] sm:$0xf]
    %v1386 = vld [vmem:[#allocation5 + $0x1374] sm:$0xf]
    %v1387 = vld [vmem:[#allocation5 + $0x1378] sm:$0xf]
    %v1388 = vld [vmem:[#allocation5 + $0x137c] sm:$0xf]
    %v1389 = vld [vmem:[#allocation5 + $0x1380] sm:$0xf]
    %v1390 = vld [vmem:[#allocation5 + $0x1384] sm:$0xf]
    %v1391 = vld [vmem:[#allocation5 + $0x1388] sm:$0xf]
    %v1392 = vld [vmem:[#allocation5 + $0x138c] sm:$0xf]
    %v1393 = vld [vmem:[#allocation5 + $0x1390] sm:$0xf]
    %v1394 = vld [vmem:[#allocation5 + $0x1394] sm:$0xf]
    %v1395 = vld [vmem:[#allocation5 + $0x1398] sm:$0xf]
    %v1396 = vld [vmem:[#allocation5 + $0x139c] sm:$0xf]
    %v1397 = vld [vmem:[#allocation5 + $0x13a0] sm:$0xf]
    %v1398 = vld [vmem:[#allocation5 + $0x13a4] sm:$0xf]
    %v1399 = vld [vmem:[#allocation5 + $0x13a8] sm:$0xf]
    %v1400 = vld [vmem:[#allocation5 + $0x13ac] sm:$0xf]
    %v1401 = vld [vmem:[#allocation5 + $0x13b0] sm:$0xf]
    %v1402 = vld [vmem:[#allocation5 + $0x13b4] sm:$0xf]
    %v1403 = vld [vmem:[#allocation5 + $0x13b8] sm:$0xf]
    %v1404 = vld [vmem:[#allocation5 + $0x13bc] sm:$0xf]
    %v1405 = vld [vmem:[#allocation5 + $0x13c0] sm:$0xf]
    %v1406 = vld [vmem:[#allocation5 + $0x13c4] sm:$0xf]
    %v1407 = vld [vmem:[#allocation5 + $0x13c8] sm:$0xf]
    %v1408 = vld [vmem:[#allocation5 + $0x13cc] sm:$0xf]
    %v1409 = vld [vmem:[#allocation5 + $0x13d0] sm:$0xf]
    %v1410 = vld [vmem:[#allocation5 + $0x13d4] sm:$0xf]
    %v1411 = vld [vmem:[#allocation5 + $0x13d8] sm:$0xf]
    %v1412 = vld [vmem:[#allocation5 + $0x13dc] sm:$0xf]
    %v1413 = vld [vmem:[#allocation5 + $0x13e0] sm:$0xf]
    %v1414 = vld [vmem:[#allocation5 + $0x13e4] sm:$0xf]
    %v1415 = vld [vmem:[#allocation5 + $0x13e8] sm:$0xf]
    %v1416 = vld [vmem:[#allocation5 + $0x13ec] sm:$0xf]
    %v1417 = vld [vmem:[#allocation5 + $0x13f0] sm:$0xf]
    %v1418 = vld [vmem:[#allocation5 + $0x13f4] sm:$0xf]
    %v1419 = vld [vmem:[#allocation5 + $0x13f8] sm:$0xf]
    %v1420 = vld [vmem:[#allocation5 + $0x13fc] sm:$0xf]
    %v1421 = vld [vmem:[#allocation5 + $0x1400] sm:$0xf]
    %v1422 = vld [vmem:[#allocation5 + $0x1404] sm:$0xf]
    %v1423 = vld [vmem:[#allocation5 + $0x1408] sm:$0xf]
    %v1424 = vld [vmem:[#allocation5 + $0x140c] sm:$0xf]
    %v1425 = vld [vmem:[#allocation5 + $0x1410] sm:$0xf]
    %v1426 = vld [vmem:[#allocation5 + $0x1414] sm:$0xf]
    %v1427 = vld [vmem:[#allocation5 + $0x1418] sm:$0xf]
    %v1428 = vld [vmem:[#allocation5 + $0x141c] sm:$0xf]
    %v1429 = vld [vmem:[#allocation5 + $0x1420] sm:$0xf]
    %v1430 = vld [vmem:[#allocation5 + $0x1424] sm:$0xf]
    %v1431 = vld [vmem:[#allocation5 + $0x1428] sm:$0xf]
    %v1432 = vld [vmem:[#allocation5 + $0x142c] sm:$0xf]
    %v1433 = vld [vmem:[#allocation5 + $0x1430] sm:$0xf]
    %v1434 = vld [vmem:[#allocation5 + $0x1434] sm:$0xf]
    %v1435 = vld [vmem:[#allocation5 + $0x1438] sm:$0xf]
    %v1436 = vld [vmem:[#allocation5 + $0x143c] sm:$0xf]
    %v1437 = vld [vmem:[#allocation5 + $0x1440] sm:$0xf]
    %v1438 = vld [vmem:[#allocation5 + $0x1444] sm:$0xf]
    %v1439 = vld [vmem:[#allocation5 + $0x1448] sm:$0xf]
    %v1440 = vld [vmem:[#allocation5 + $0x144c] sm:$0xf]
    %v1441 = vld [vmem:[#allocation5 + $0x1450] sm:$0xf]
    %v1442 = vld [vmem:[#allocation5 + $0x1454] sm:$0xf]
    %v1443 = vld [vmem:[#allocation5 + $0x1458] sm:$0xf]
    %v1444 = vld [vmem:[#allocation5 + $0x145c] sm:$0xf]
    %v1445 = vld [vmem:[#allocation5 + $0x1460] sm:$0xf]
    %v1446 = vld [vmem:[#allocation5 + $0x1464] sm:$0xf]
    %v1447 = vld [vmem:[#allocation5 + $0x1468] sm:$0xf]
    %v1448 = vld [vmem:[#allocation5 + $0x146c] sm:$0xf]
    %v1449 = vld [vmem:[#allocation5 + $0x1470] sm:$0xf]
    %v1450 = vld [vmem:[#allocation5 + $0x1474] sm:$0xf]
    %v1451 = vld [vmem:[#allocation5 + $0x1478] sm:$0xf]
    %v1452 = vld [vmem:[#allocation5 + $0x147c] sm:$0xf]
    %v1453 = vld [vmem:[#allocation5 + $0x1480] sm:$0xf]
    %v1454 = vld [vmem:[#allocation5 + $0x1484] sm:$0xf]
    %v1455 = vld [vmem:[#allocation5 + $0x1488] sm:$0xf]
    %v1456 = vld [vmem:[#allocation5 + $0x148c] sm:$0xf]
    %v1457 = vld [vmem:[#allocation5 + $0x1490] sm:$0xf]
    %v1458 = vld [vmem:[#allocation5 + $0x1494] sm:$0xf]
    %v1459 = vld [vmem:[#allocation5 + $0x1498] sm:$0xf]
    %v1460 = vld [vmem:[#allocation5 + $0x149c] sm:$0xf]
    %v1461 = vld [vmem:[#allocation5 + $0x14a0] sm:$0xf]
    %v1462 = vld [vmem:[#allocation5 + $0x14a4] sm:$0xf]
    %v1463 = vld [vmem:[#allocation5 + $0x14a8] sm:$0xf]
    %v1464 = vld [vmem:[#allocation5 + $0x14ac] sm:$0xf]
    %v1465 = vld [vmem:[#allocation5 + $0x14b0] sm:$0xf]
    %v1466 = vld [vmem:[#allocation5 + $0x14b4] sm:$0xf]
    %v1467 = vld [vmem:[#allocation5 + $0x14b8] sm:$0xf]
    %v1468 = vld [vmem:[#allocation5 + $0x14bc] sm:$0xf]
    %v1469 = vld [vmem:[#allocation5 + $0x14c0] sm:$0xf]
    %v1470 = vld [vmem:[#allocation5 + $0x14c4] sm:$0xf]
    %v1471 = vld [vmem:[#allocation5 + $0x14c8] sm:$0xf]
    %v1472 = vld [vmem:[#allocation5 + $0x14cc] sm:$0xf]
    %v1473 = vld [vmem:[#allocation5 + $0x14d0] sm:$0xf]
    %v1474 = vld [vmem:[#allocation5 + $0x14d4] sm:$0xf]
    %v1475 = vld [vmem:[#allocation5 + $0x14d8] sm:$0xf]
    %v1476 = vld [vmem:[#allocation5 + $0x14dc] sm:$0xf]
    %v1477 = vld [vmem:[#allocation5 + $0x14e0] sm:$0xf]
    %v1478 = vld [vmem:[#allocation5 + $0x14e4] sm:$0xf]
    %v1479 = vld [vmem:[#allocation5 + $0x14e8] sm:$0xf]
    %v1480 = vld [vmem:[#allocation5 + $0x14ec] sm:$0xf]
    %v1481 = vld [vmem:[#allocation5 + $0x14f0] sm:$0xf]
    %v1482 = vld [vmem:[#allocation5 + $0x14f4] sm:$0xf]
    %v1483 = vld [vmem:[#allocation5 + $0x14f8] sm:$0xf]
    %v1484 = vld [vmem:[#allocation5 + $0x14fc] sm:$0xf]
    %v1485 = vld [vmem:[#allocation5 + $0x1500] sm:$0xf]
    %v1486 = vld [vmem:[#allocation5 + $0x1504] sm:$0xf]
    %v1487 = vld [vmem:[#allocation5 + $0x1508] sm:$0xf]
    %v1488 = vld [vmem:[#allocation5 + $0x150c] sm:$0xf]
    %v1489 = vld [vmem:[#allocation5 + $0x1510] sm:$0xf]
    %v1490 = vld [vmem:[#allocation5 + $0x1514] sm:$0xf]
    %v1491 = vld [vmem:[#allocation5 + $0x1518] sm:$0xf]
    %v1492 = vld [vmem:[#allocation5 + $0x151c] sm:$0xf]
    %v1493 = vld [vmem:[#allocation5 + $0x1520] sm:$0xf]
    %v1494 = vld [vmem:[#allocation5 + $0x1524] sm:$0xf]
    %v1495 = vld [vmem:[#allocation5 + $0x1528] sm:$0xf]
    %v1496 = vld [vmem:[#allocation5 + $0x152c] sm:$0xf]
    %v1497 = vld [vmem:[#allocation5 + $0x1530] sm:$0xf]
    %v1498 = vld [vmem:[#allocation5 + $0x1534] sm:$0xf]
    %v1499 = vld [vmem:[#allocation5 + $0x1538] sm:$0xf]
    %v1500 = vld [vmem:[#allocation5 + $0x153c] sm:$0xf]
    %v1501 = vld [vmem:[#allocation5 + $0x1540] sm:$0xf]
    %v1502 = vld [vmem:[#allocation5 + $0x1544] sm:$0xf]
    %v1503 = vld [vmem:[#allocation5 + $0x1548] sm:$0xf]
    %v1504 = vld [vmem:[#allocation5 + $0x154c] sm:$0xf]
    %v1505 = vld [vmem:[#allocation5 + $0x1550] sm:$0xf]
    %v1506 = vld [vmem:[#allocation5 + $0x1554] sm:$0xf]
    %v1507 = vld [vmem:[#allocation5 + $0x1558] sm:$0xf]
    %v1508 = vld [vmem:[#allocation5 + $0x155c] sm:$0xf]
    %v1509 = vld [vmem:[#allocation5 + $0x1560] sm:$0xf]
    %v1510 = vld [vmem:[#allocation5 + $0x1564] sm:$0xf]
    %v1511 = vld [vmem:[#allocation5 + $0x1568] sm:$0xf]
    %v1512 = vld [vmem:[#allocation5 + $0x156c] sm:$0xf]
    %v1513 = vld [vmem:[#allocation5 + $0x1570] sm:$0xf]
    %v1514 = vld [vmem:[#allocation5 + $0x1574] sm:$0xf]
    %v1515 = vld [vmem:[#allocation5 + $0x1578] sm:$0xf]
    %v1516 = vld [vmem:[#allocation5 + $0x157c] sm:$0xf]
    %v1517 = vld [vmem:[#allocation5 + $0x1580] sm:$0xf]
    %v1518 = vld [vmem:[#allocation5 + $0x1584] sm:$0xf]
    %v1519 = vld [vmem:[#allocation5 + $0x1588] sm:$0xf]
    %v1520 = vld [vmem:[#allocation5 + $0x158c] sm:$0xf]
    %v1521 = vld [vmem:[#allocation5 + $0x1590] sm:$0xf]
    %v1522 = vld [vmem:[#allocation5 + $0x1594] sm:$0xf]
    %v1523 = vld [vmem:[#allocation5 + $0x1598] sm:$0xf]
    %v1524 = vld [vmem:[#allocation5 + $0x159c] sm:$0xf]
    %v1525 = vld [vmem:[#allocation5 + $0x15a0] sm:$0xf]
    %v1526 = vld [vmem:[#allocation5 + $0x15a4] sm:$0xf]
    %v1527 = vld [vmem:[#allocation5 + $0x15a8] sm:$0xf]
    %v1528 = vld [vmem:[#allocation5 + $0x15ac] sm:$0xf]
    %v1529 = vld [vmem:[#allocation5 + $0x15b0] sm:$0xf]
    %v1530 = vld [vmem:[#allocation5 + $0x15b4] sm:$0xf]
    %v1531 = vld [vmem:[#allocation5 + $0x15b8] sm:$0xf]
    %v1532 = vld [vmem:[#allocation5 + $0x15bc] sm:$0xf]
    %v1533 = vld [vmem:[#allocation5 + $0x15c0] sm:$0xf]
    %v1534 = vld [vmem:[#allocation5 + $0x15c4] sm:$0xf]
    %v1535 = vld [vmem:[#allocation5 + $0x15c8] sm:$0xf]
    %v1536 = vld [vmem:[#allocation5 + $0x15cc] sm:$0xf]
    %v1537 = vld [vmem:[#allocation5 + $0x15d0] sm:$0xf]
    %v1538 = vld [vmem:[#allocation5 + $0x15d4] sm:$0xf]
    %v1539 = vld [vmem:[#allocation5 + $0x15d8] sm:$0xf]
    %v1540 = vld [vmem:[#allocation5 + $0x15dc] sm:$0xf]
    %v1541 = vld [vmem:[#allocation5 + $0x15e0] sm:$0xf]
    %v1542 = vld [vmem:[#allocation5 + $0x15e4] sm:$0xf]
    %v1543 = vld [vmem:[#allocation5 + $0x15e8] sm:$0xf]
    %v1544 = vld [vmem:[#allocation5 + $0x15ec] sm:$0xf]
    %v1545 = vld [vmem:[#allocation5 + $0x15f0] sm:$0xf]
    %v1546 = vld [vmem:[#allocation5 + $0x15f4] sm:$0xf]
    %v1547 = vld [vmem:[#allocation5 + $0x15f8] sm:$0xf]
    %v1548 = vld [vmem:[#allocation5 + $0x15fc] sm:$0xf]
    %v1549 = vld [vmem:[#allocation5 + $0x1600] sm:$0xf]
    %v1550 = vld [vmem:[#allocation5 + $0x1604] sm:$0xf]
    %v1551 = vld [vmem:[#allocation5 + $0x1608] sm:$0xf]
    %v1552 = vld [vmem:[#allocation5 + $0x160c] sm:$0xf]
    %v1553 = vld [vmem:[#allocation5 + $0x1610] sm:$0xf]
    %v1554 = vld [vmem:[#allocation5 + $0x1614] sm:$0xf]
    %v1555 = vld [vmem:[#allocation5 + $0x1618] sm:$0xf]
    %v1556 = vld [vmem:[#allocation5 + $0x161c] sm:$0xf]
    %v1557 = vld [vmem:[#allocation5 + $0x1620] sm:$0xf]
    %v1558 = vld [vmem:[#allocation5 + $0x1624] sm:$0xf]
    %v1559 = vld [vmem:[#allocation5 + $0x1628] sm:$0xf]
    %v1560 = vld [vmem:[#allocation5 + $0x162c] sm:$0xf]
    %v1561 = vld [vmem:[#allocation5 + $0x1630] sm:$0xf]
    %v1562 = vld [vmem:[#allocation5 + $0x1634] sm:$0xf]
    %v1563 = vld [vmem:[#allocation5 + $0x1638] sm:$0xf]
    %v1564 = vld [vmem:[#allocation5 + $0x163c] sm:$0xf]
    %v1565 = vld [vmem:[#allocation5 + $0x1640] sm:$0xf]
    %v1566 = vld [vmem:[#allocation5 + $0x1644] sm:$0xf]
    %v1567 = vld [vmem:[#allocation5 + $0x1648] sm:$0xf]
    %v1568 = vld [vmem:[#allocation5 + $0x164c] sm:$0xf]
    %v1569 = vld [vmem:[#allocation5 + $0x1650] sm:$0xf]
    %v1570 = vld [vmem:[#allocation5 + $0x1654] sm:$0xf]
    %v1571 = vld [vmem:[#allocation5 + $0x1658] sm:$0xf]
    %v1572 = vld [vmem:[#allocation5 + $0x165c] sm:$0xf]
    %v1573 = vld [vmem:[#allocation5 + $0x1660] sm:$0xf]
    %v1574 = vld [vmem:[#allocation5 + $0x1664] sm:$0xf]
    %v1575 = vld [vmem:[#allocation5 + $0x1668] sm:$0xf]
    %v1576 = vld [vmem:[#allocation5 + $0x166c] sm:$0xf]
    %v1577 = vld [vmem:[#allocation5 + $0x1670] sm:$0xf]
    %v1578 = vld [vmem:[#allocation5 + $0x1674] sm:$0xf]
    %v1579 = vld [vmem:[#allocation5 + $0x1678] sm:$0xf]
    %v1580 = vld [vmem:[#allocation5 + $0x167c] sm:$0xf]
    %v1581 = vld [vmem:[#allocation5 + $0x1680] sm:$0xf]
    %v1582 = vld [vmem:[#allocation5 + $0x1684] sm:$0xf]
    %v1583 = vld [vmem:[#allocation5 + $0x1688] sm:$0xf]
    %v1584 = vld [vmem:[#allocation5 + $0x168c] sm:$0xf]
    %v1585 = vld [vmem:[#allocation5 + $0x1690] sm:$0xf]
    %v1586 = vld [vmem:[#allocation5 + $0x1694] sm:$0xf]
    %v1587 = vld [vmem:[#allocation5 + $0x1698] sm:$0xf]
    %v1588 = vld [vmem:[#allocation5 + $0x169c] sm:$0xf]
    %v1589 = vld [vmem:[#allocation5 + $0x16a0] sm:$0xf]
    %v1590 = vld [vmem:[#allocation5 + $0x16a4] sm:$0xf]
    %v1591 = vld [vmem:[#allocation5 + $0x16a8] sm:$0xf]
    %v1592 = vld [vmem:[#allocation5 + $0x16ac] sm:$0xf]
    %v1593 = vld [vmem:[#allocation5 + $0x16b0] sm:$0xf]
    %v1594 = vld [vmem:[#allocation5 + $0x16b4] sm:$0xf]
    %v1595 = vld [vmem:[#allocation5 + $0x16b8] sm:$0xf]
    %v1596 = vld [vmem:[#allocation5 + $0x16bc] sm:$0xf]
    %v1597 = vld [vmem:[#allocation5 + $0x16c0] sm:$0xf]
    %v1598 = vld [vmem:[#allocation5 + $0x16c4] sm:$0xf]
    %v1599 = vld [vmem:[#allocation5 + $0x16c8] sm:$0xf]
    %v1600 = vld [vmem:[#allocation5 + $0x16cc] sm:$0xf]
    %v1601 = vld [vmem:[#allocation5 + $0x16d0] sm:$0xf]
    %v1602 = vld [vmem:[#allocation5 + $0x16d4] sm:$0xf]
    %v1603 = vld [vmem:[#allocation5 + $0x16d8] sm:$0xf]
    %v1604 = vld [vmem:[#allocation5 + $0x16dc] sm:$0xf]
    %v1605 = vld [vmem:[#allocation5 + $0x16e0] sm:$0xf]
    %v1606 = vld [vmem:[#allocation5 + $0x16e4] sm:$0xf]
    %v1607 = vld [vmem:[#allocation5 + $0x16e8] sm:$0xf]
    %v1608 = vld [vmem:[#allocation5 + $0x16ec] sm:$0xf]
    %v1609 = vld [vmem:[#allocation5 + $0x16f0] sm:$0xf]
    %v1610 = vld [vmem:[#allocation5 + $0x16f4] sm:$0xf]
    %v1611 = vld [vmem:[#allocation5 + $0x16f8] sm:$0xf]
    %v1612 = vld [vmem:[#allocation5 + $0x16fc] sm:$0xf]
    %v1613 = vld [vmem:[#allocation5 + $0x1700] sm:$0xf]
    %v1614 = vld [vmem:[#allocation5 + $0x1704] sm:$0xf]
    %v1615 = vld [vmem:[#allocation5 + $0x1708] sm:$0xf]
    %v1616 = vld [vmem:[#allocation5 + $0x170c] sm:$0xf]
    %v1617 = vld [vmem:[#allocation5 + $0x1710] sm:$0xf]
    %v1618 = vld [vmem:[#allocation5 + $0x1714] sm:$0xf]
    %v1619 = vld [vmem:[#allocation5 + $0x1718] sm:$0xf]
    %v1620 = vld [vmem:[#allocation5 + $0x171c] sm:$0xf]
    %v1621 = vld [vmem:[#allocation5 + $0x1720] sm:$0xf]
    %v1622 = vld [vmem:[#allocation5 + $0x1724] sm:$0xf]
    %v1623 = vld [vmem:[#allocation5 + $0x1728] sm:$0xf]
    %v1624 = vld [vmem:[#allocation5 + $0x172c] sm:$0xf]
    %v1625 = vld [vmem:[#allocation5 + $0x1730] sm:$0xf]
    %v1626 = vld [vmem:[#allocation5 + $0x1734] sm:$0xf]
    %v1627 = vld [vmem:[#allocation5 + $0x1738] sm:$0xf]
    %v1628 = vld [vmem:[#allocation5 + $0x173c] sm:$0xf]
    %v1629 = vld [vmem:[#allocation5 + $0x1740] sm:$0xf]
    %v1630 = vld [vmem:[#allocation5 + $0x1744] sm:$0xf]
    %v1631 = vld [vmem:[#allocation5 + $0x1748] sm:$0xf]
    %v1632 = vld [vmem:[#allocation5 + $0x174c] sm:$0xf]
    %v1633 = vld [vmem:[#allocation5 + $0x1750] sm:$0xf]
    %v1634 = vld [vmem:[#allocation5 + $0x1754] sm:$0xf]
    %v1635 = vld [vmem:[#allocation5 + $0x1758] sm:$0xf]
    %v1636 = vld [vmem:[#allocation5 + $0x175c] sm:$0xf]
    %v1637 = vld [vmem:[#allocation5 + $0x1760] sm:$0xf]
    %v1638 = vld [vmem:[#allocation5 + $0x1764] sm:$0xf]
    %v1639 = vld [vmem:[#allocation5 + $0x1768] sm:$0xf]
    %v1640 = vld [vmem:[#allocation5 + $0x176c] sm:$0xf]
    %v1641 = vld [vmem:[#allocation5 + $0x1770] sm:$0xf]
    %v1642 = vld [vmem:[#allocation5 + $0x1774] sm:$0xf]
    %v1643 = vld [vmem:[#allocation5 + $0x1778] sm:$0xf]
    %v1644 = vld [vmem:[#allocation5 + $0x177c] sm:$0xf]
    %v1645 = vld [vmem:[#allocation5 + $0x1780] sm:$0xf]
    %v1646 = vld [vmem:[#allocation5 + $0x1784] sm:$0xf]
    %v1647 = vld [vmem:[#allocation5 + $0x1788] sm:$0xf]
    %v1648 = vld [vmem:[#allocation5 + $0x178c] sm:$0xf]
    %v1649 = vld [vmem:[#allocation5 + $0x1790] sm:$0xf]
    %v1650 = vld [vmem:[#allocation5 + $0x1794] sm:$0xf]
    %v1651 = vld [vmem:[#allocation5 + $0x1798] sm:$0xf]
    %v1652 = vld [vmem:[#allocation5 + $0x179c] sm:$0xf]
    %v1653 = vld [vmem:[#allocation5 + $0x17a0] sm:$0xf]
    %v1654 = vld [vmem:[#allocation5 + $0x17a4] sm:$0xf]
    %v1655 = vld [vmem:[#allocation5 + $0x17a8] sm:$0xf]
    %v1656 = vld [vmem:[#allocation5 + $0x17ac] sm:$0xf]
    %v1657 = vld [vmem:[#allocation5 + $0x17b0] sm:$0xf]
    %v1658 = vld [vmem:[#allocation5 + $0x17b4] sm:$0xf]
    %v1659 = vld [vmem:[#allocation5 + $0x17b8] sm:$0xf]
    %v1660 = vld [vmem:[#allocation5 + $0x17bc] sm:$0xf]
    %v1661 = vld [vmem:[#allocation5 + $0x17c0] sm:$0xf]
    %v1662 = vld [vmem:[#allocation5 + $0x17c4] sm:$0xf]
    %v1663 = vld [vmem:[#allocation5 + $0x17c8] sm:$0xf]
    %v1664 = vld [vmem:[#allocation5 + $0x17cc] sm:$0xf]
    %v1665 = vld [vmem:[#allocation5 + $0x17d0] sm:$0xf]
    %v1666 = vld [vmem:[#allocation5 + $0x17d4] sm:$0xf]
    %v1667 = vld [vmem:[#allocation5 + $0x17d8] sm:$0xf]
    %v1668 = vld [vmem:[#allocation5 + $0x17dc] sm:$0xf]
    %v1669 = vld [vmem:[#allocation5 + $0x17e0] sm:$0xf]
    %v1670 = vld [vmem:[#allocation5 + $0x17e4] sm:$0xf]
    %v1671 = vld [vmem:[#allocation5 + $0x17e8] sm:$0xf]
    %v1672 = vld [vmem:[#allocation5 + $0x17ec] sm:$0xf]
    %v1673 = vld [vmem:[#allocation5 + $0x17f0] sm:$0xf]
    %v1674 = vld [vmem:[#allocation5 + $0x17f4] sm:$0xf]
    %v1675 = vld [vmem:[#allocation5 + $0x17f8] sm:$0xf]
    %v1676 = vld [vmem:[#allocation5 + $0x17fc] sm:$0xf]
    %v1677 = vld [vmem:[#allocation7] sm:$0x1]
    %v1679 = vperm.slane %v1677, 0
    %v1729 = vunpack.c.l.b16 %v93
    %v1730 = vunpack.c.h.b16 %v93
    %v1731 = vunpack.c.l.b16 %v94
    %v1732 = vunpack.c.h.b16 %v94
    %v1733 = vunpack.c.l.b16 %v95
    %v1734 = vunpack.c.h.b16 %v95
    %v1735 = vunpack.c.l.b16 %v96
    %v1736 = vunpack.c.h.b16 %v96
    %v1737 = vunpack.c.l.b16 %v97
    %v1738 = vunpack.c.h.b16 %v97
    %v1739 = vunpack.c.l.b16 %v98
    %v1740 = vunpack.c.h.b16 %v98
    %v1741 = vunpack.c.l.b16 %v99
    %v1742 = vunpack.c.h.b16 %v99
    %v1743 = vunpack.c.l.b16 %v100
    %v1744 = vunpack.c.h.b16 %v100
    %v1745 = vunpack.c.l.b16 %v101
    %v1746 = vunpack.c.h.b16 %v101
    %v1747 = vunpack.c.l.b16 %v102
    %v1748 = vunpack.c.h.b16 %v102
    %v1749 = vunpack.c.l.b16 %v103
    %v1750 = vunpack.c.h.b16 %v103
    %v1751 = vunpack.c.l.b16 %v104
    %v1752 = vunpack.c.h.b16 %v104
    %v1753 = vunpack.c.l.b16 %v105
    %v1754 = vunpack.c.h.b16 %v105
    %v1755 = vunpack.c.l.b16 %v106
    %v1756 = vunpack.c.h.b16 %v106
    %v1757 = vunpack.c.l.b16 %v107
    %v1758 = vunpack.c.h.b16 %v107
    %v1759 = vunpack.c.l.b16 %v108
    %v1760 = vunpack.c.h.b16 %v108
    %v1761 = vunpack.c.l.b16 %v109
    %v1762 = vunpack.c.h.b16 %v109
    %v1763 = vunpack.c.l.b16 %v110
    %v1764 = vunpack.c.h.b16 %v110
    %v1765 = vunpack.c.l.b16 %v111
    %v1766 = vunpack.c.h.b16 %v111
    %v1767 = vunpack.c.l.b16 %v112
    %v1768 = vunpack.c.h.b16 %v112
    %v1769 = vunpack.c.l.b16 %v113
    %v1770 = vunpack.c.h.b16 %v113
    %v1771 = vunpack.c.l.b16 %v114
    %v1772 = vunpack.c.h.b16 %v114
    %v1773 = vunpack.c.l.b16 %v115
    %v1774 = vunpack.c.h.b16 %v115
    %v1775 = vunpack.c.l.b16 %v116
    %v1776 = vunpack.c.h.b16 %v116
    %v1777 = vunpack.c.l.b16 %v117
    %v1778 = vunpack.c.h.b16 %v117
    %v1779 = vunpack.c.l.b16 %v118
    %v1780 = vunpack.c.h.b16 %v118
    %v1781 = vunpack.c.l.b16 %v119
    %v1782 = vunpack.c.h.b16 %v119
    %v1783 = vunpack.c.l.b16 %v120
    %v1784 = vunpack.c.h.b16 %v120
    %v1785 = vunpack.c.l.b16 %v121
    %v1786 = vunpack.c.h.b16 %v121
    %v1787 = vunpack.c.l.b16 %v122
    %v1788 = vunpack.c.h.b16 %v122
    %v1789 = vunpack.c.l.b16 %v123
    %v1790 = vunpack.c.h.b16 %v123
    %v1791 = vunpack.c.l.b16 %v124
    %v1792 = vunpack.c.h.b16 %v124
    %v1793 = vunpack.c.l.b16 %v125
    %v1794 = vunpack.c.h.b16 %v125
    %v1795 = vunpack.c.l.b16 %v126
    %v1796 = vunpack.c.h.b16 %v126
    %v1797 = vunpack.c.l.b16 %v127
    %v1798 = vunpack.c.h.b16 %v127
    %v1799 = vunpack.c.l.b16 %v128
    %v1800 = vunpack.c.h.b16 %v128
    %v1801 = vunpack.c.l.b16 %v129
    %v1802 = vunpack.c.h.b16 %v129
    %v1803 = vunpack.c.l.b16 %v130
    %v1804 = vunpack.c.h.b16 %v130
    %v1805 = vunpack.c.l.b16 %v131
    %v1806 = vunpack.c.h.b16 %v131
    %v1807 = vunpack.c.l.b16 %v132
    %v1808 = vunpack.c.h.b16 %v132
    %v1809 = vunpack.c.l.b16 %v133
    %v1810 = vunpack.c.h.b16 %v133
    %v1811 = vunpack.c.l.b16 %v134
    %v1812 = vunpack.c.h.b16 %v134
    %v1813 = vunpack.c.l.b16 %v135
    %v1814 = vunpack.c.h.b16 %v135
    %v1815 = vunpack.c.l.b16 %v136
    %v1816 = vunpack.c.h.b16 %v136
    %v1817 = vunpack.c.l.b16 %v137
    %v1818 = vunpack.c.h.b16 %v137
    %v1819 = vunpack.c.l.b16 %v138
    %v1820 = vunpack.c.h.b16 %v138
    %v1821 = vunpack.c.l.b16 %v139
    %v1822 = vunpack.c.h.b16 %v139
    %v1823 = vunpack.c.l.b16 %v140
    %v1824 = vunpack.c.h.b16 %v140
    %v1825 = vpack.c.b16 %v1729, %v1729
    %v1826 = vpack.c.b16 %v1730, %v1730
    %v1827 = vpack.c.b16 %v1731, %v1731
    %v1828 = vpack.c.b16 %v1732, %v1732
    %v1829 = vpack.c.b16 %v1733, %v1733
    %v1830 = vpack.c.b16 %v1734, %v1734
    %v1831 = vpack.c.b16 %v1735, %v1735
    %v1832 = vpack.c.b16 %v1736, %v1736
    %v1833 = vpack.c.b16 %v1737, %v1737
    %v1834 = vpack.c.b16 %v1738, %v1738
    %v1835 = vpack.c.b16 %v1739, %v1739
    %v1836 = vpack.c.b16 %v1740, %v1740
    %v1837 = vpack.c.b16 %v1741, %v1741
    %v1838 = vpack.c.b16 %v1742, %v1742
    %v1839 = vpack.c.b16 %v1743, %v1743
    %v1840 = vpack.c.b16 %v1744, %v1744
    %v1841 = vpack.c.b16 %v1745, %v1745
    %v1842 = vpack.c.b16 %v1746, %v1746
    %v1843 = vpack.c.b16 %v1747, %v1747
    %v1844 = vpack.c.b16 %v1748, %v1748
    %v1845 = vpack.c.b16 %v1749, %v1749
    %v1846 = vpack.c.b16 %v1750, %v1750
    %v1847 = vpack.c.b16 %v1751, %v1751
    %v1848 = vpack.c.b16 %v1752, %v1752
    %v1849 = vpack.c.b16 %v1753, %v1753
    %v1850 = vpack.c.b16 %v1754, %v1754
    %v1851 = vpack.c.b16 %v1755, %v1755
    %v1852 = vpack.c.b16 %v1756, %v1756
    %v1853 = vpack.c.b16 %v1757, %v1757
    %v1854 = vpack.c.b16 %v1758, %v1758
    %v1855 = vpack.c.b16 %v1759, %v1759
    %v1856 = vpack.c.b16 %v1760, %v1760
    %v1857 = vpack.c.b16 %v1761, %v1761
    %v1858 = vpack.c.b16 %v1762, %v1762
    %v1859 = vpack.c.b16 %v1763, %v1763
    %v1860 = vpack.c.b16 %v1764, %v1764
    %v1861 = vpack.c.b16 %v1765, %v1765
    %v1862 = vpack.c.b16 %v1766, %v1766
    %v1863 = vpack.c.b16 %v1767, %v1767
    %v1864 = vpack.c.b16 %v1768, %v1768
    %v1865 = vpack.c.b16 %v1769, %v1769
    %v1866 = vpack.c.b16 %v1770, %v1770
    %v1867 = vpack.c.b16 %v1771, %v1771
    %v1868 = vpack.c.b16 %v1772, %v1772
    %v1869 = vpack.c.b16 %v1773, %v1773
    %v1870 = vpack.c.b16 %v1774, %v1774
    %v1871 = vpack.c.b16 %v1775, %v1775
    %v1872 = vpack.c.b16 %v1776, %v1776
    %v1873 = vpack.c.b16 %v1777, %v1777
    %v1874 = vpack.c.b16 %v1778, %v1778
    %v1875 = vpack.c.b16 %v1779, %v1779
    %v1876 = vpack.c.b16 %v1780, %v1780
    %v1877 = vpack.c.b16 %v1781, %v1781
    %v1878 = vpack.c.b16 %v1782, %v1782
    %v1879 = vpack.c.b16 %v1783, %v1783
    %v1880 = vpack.c.b16 %v1784, %v1784
    %v1881 = vpack.c.b16 %v1785, %v1785
    %v1882 = vpack.c.b16 %v1786, %v1786
    %v1883 = vpack.c.b16 %v1787, %v1787
    %v1884 = vpack.c.b16 %v1788, %v1788
    %v1885 = vpack.c.b16 %v1789, %v1789
    %v1886 = vpack.c.b16 %v1790, %v1790
    %v1887 = vpack.c.b16 %v1791, %v1791
    %v1888 = vpack.c.b16 %v1792, %v1792
    %v1889 = vpack.c.b16 %v1793, %v1793
    %v1890 = vpack.c.b16 %v1794, %v1794
    %v1891 = vpack.c.b16 %v1795, %v1795
    %v1892 = vpack.c.b16 %v1796, %v1796
    %v1893 = vpack.c.b16 %v1797, %v1797
    %v1894 = vpack.c.b16 %v1798, %v1798
    %v1895 = vpack.c.b16 %v1799, %v1799
    %v1896 = vpack.c.b16 %v1800, %v1800
    %v1897 = vpack.c.b16 %v1801, %v1801
    %v1898 = vpack.c.b16 %v1802, %v1802
    %v1899 = vpack.c.b16 %v1803, %v1803
    %v1900 = vpack.c.b16 %v1804, %v1804
    %v1901 = vpack.c.b16 %v1805, %v1805
    %v1902 = vpack.c.b16 %v1806, %v1806
    %v1903 = vpack.c.b16 %v1807, %v1807
    %v1904 = vpack.c.b16 %v1808, %v1808
    %v1905 = vpack.c.b16 %v1809, %v1809
    %v1906 = vpack.c.b16 %v1810, %v1810
    %v1907 = vpack.c.b16 %v1811, %v1811
    %v1908 = vpack.c.b16 %v1812, %v1812
    %v1909 = vpack.c.b16 %v1813, %v1813
    %v1910 = vpack.c.b16 %v1814, %v1814
    %v1911 = vpack.c.b16 %v1815, %v1815
    %v1912 = vpack.c.b16 %v1816, %v1816
    %v1913 = vpack.c.b16 %v1817, %v1817
    %v1914 = vpack.c.b16 %v1818, %v1818
    %v1915 = vpack.c.b16 %v1819, %v1819
    %v1916 = vpack.c.b16 %v1820, %v1820
    %v1917 = vpack.c.b16 %v1821, %v1821
    %v1918 = vpack.c.b16 %v1822, %v1822
    %v1919 = vpack.c.b16 %v1823, %v1823
    %v1920 = vpack.c.b16 %v1824, %v1824
    %v3553 = vunpack.c.l.b16 %v141
    %v3554 = vunpack.c.l.b16 %v142
    %v3555 = vunpack.c.l.b16 %v143
    %v3556 = vunpack.c.l.b16 %v144
    %v3557 = vunpack.c.l.b16 %v145
    %v3558 = vunpack.c.l.b16 %v146
    %v3559 = vunpack.c.l.b16 %v147
    %v3560 = vunpack.c.l.b16 %v148
    %v3561 = vunpack.c.l.b16 %v149
    %v3562 = vunpack.c.l.b16 %v150
    %v3563 = vunpack.c.l.b16 %v151
    %v3564 = vunpack.c.l.b16 %v152
    %v3565 = vunpack.c.l.b16 %v153
    %v3566 = vunpack.c.l.b16 %v154
    %v3567 = vunpack.c.l.b16 %v155
    %v3568 = vunpack.c.l.b16 %v156
    %v3569 = vunpack.c.l.b16 %v157
    %v3570 = vunpack.c.l.b16 %v158
    %v3571 = vunpack.c.l.b16 %v159
    %v3572 = vunpack.c.l.b16 %v160
    %v3573 = vunpack.c.l.b16 %v161
    %v3574 = vunpack.c.l.b16 %v162
    %v3575 = vunpack.c.l.b16 %v163
    %v3576 = vunpack.c.l.b16 %v164
    %v3577 = vunpack.c.l.b16 %v165
    %v3578 = vunpack.c.l.b16 %v166
    %v3579 = vunpack.c.l.b16 %v167
    %v3580 = vunpack.c.l.b16 %v168
    %v3581 = vunpack.c.l.b16 %v169
    %v3582 = vunpack.c.l.b16 %v170
    %v3583 = vunpack.c.l.b16 %v171
    %v3584 = vunpack.c.l.b16 %v172
    %v3585 = vunpack.c.l.b16 %v173
    %v3586 = vunpack.c.l.b16 %v174
    %v3587 = vunpack.c.l.b16 %v175
    %v3588 = vunpack.c.l.b16 %v176
    %v3589 = vunpack.c.l.b16 %v177
    %v3590 = vunpack.c.l.b16 %v178
    %v3591 = vunpack.c.l.b16 %v179
    %v3592 = vunpack.c.l.b16 %v180
    %v3593 = vunpack.c.l.b16 %v181
    %v3594 = vunpack.c.l.b16 %v182
    %v3595 = vunpack.c.l.b16 %v183
    %v3596 = vunpack.c.l.b16 %v184
    %v3597 = vunpack.c.l.b16 %v185
    %v3598 = vunpack.c.l.b16 %v186
    %v3599 = vunpack.c.l.b16 %v187
    %v3600 = vunpack.c.l.b16 %v188
    %v3601 = vunpack.c.l.b16 %v189
    %v3602 = vunpack.c.l.b16 %v190
    %v3603 = vunpack.c.l.b16 %v191
    %v3604 = vunpack.c.l.b16 %v192
    %v3605 = vunpack.c.l.b16 %v193
    %v3606 = vunpack.c.l.b16 %v194
    %v3607 = vunpack.c.l.b16 %v195
    %v3608 = vunpack.c.l.b16 %v196
    %v3609 = vunpack.c.l.b16 %v197
    %v3610 = vunpack.c.l.b16 %v198
    %v3611 = vunpack.c.l.b16 %v199
    %v3612 = vunpack.c.l.b16 %v200
    %v3613 = vunpack.c.l.b16 %v201
    %v3614 = vunpack.c.l.b16 %v202
    %v3615 = vunpack.c.l.b16 %v203
    %v3616 = vunpack.c.l.b16 %v204
    %v3617 = vunpack.c.l.b16 %v205
    %v3618 = vunpack.c.l.b16 %v206
    %v3619 = vunpack.c.l.b16 %v207
    %v3620 = vunpack.c.l.b16 %v208
    %v3621 = vunpack.c.l.b16 %v209
    %v3622 = vunpack.c.l.b16 %v210
    %v3623 = vunpack.c.l.b16 %v211
    %v3624 = vunpack.c.l.b16 %v212
    %v3625 = vunpack.c.l.b16 %v213
    %v3626 = vunpack.c.l.b16 %v214
    %v3627 = vunpack.c.l.b16 %v215
    %v3628 = vunpack.c.l.b16 %v216
    %v3629 = vunpack.c.l.b16 %v217
    %v3630 = vunpack.c.l.b16 %v218
    %v3631 = vunpack.c.l.b16 %v219
    %v3632 = vunpack.c.l.b16 %v220
    %v3633 = vunpack.c.l.b16 %v221
    %v3634 = vunpack.c.l.b16 %v222
    %v3635 = vunpack.c.l.b16 %v223
    %v3636 = vunpack.c.l.b16 %v224
    %v3637 = vunpack.c.l.b16 %v225
    %v3638 = vunpack.c.l.b16 %v226
    %v3639 = vunpack.c.l.b16 %v227
    %v3640 = vunpack.c.l.b16 %v228
    %v3641 = vunpack.c.l.b16 %v229
    %v3642 = vunpack.c.l.b16 %v230
    %v3643 = vunpack.c.l.b16 %v231
    %v3644 = vunpack.c.l.b16 %v232
    %v3645 = vunpack.c.l.b16 %v233
    %v3646 = vunpack.c.l.b16 %v234
    %v3647 = vunpack.c.l.b16 %v235
    %v3648 = vunpack.c.l.b16 %v236
    %v3649 = vunpack.c.l.b16 %v237
    %v3650 = vunpack.c.l.b16 %v238
    %v3651 = vunpack.c.l.b16 %v239
    %v3652 = vunpack.c.l.b16 %v240
    %v3653 = vunpack.c.l.b16 %v241
    %v3654 = vunpack.c.l.b16 %v242
    %v3655 = vunpack.c.l.b16 %v243
    %v3656 = vunpack.c.l.b16 %v244
    %v3657 = vunpack.c.l.b16 %v245
    %v3658 = vunpack.c.l.b16 %v246
    %v3659 = vunpack.c.l.b16 %v247
    %v3660 = vunpack.c.l.b16 %v248
    %v3661 = vunpack.c.l.b16 %v249
    %v3662 = vunpack.c.l.b16 %v250
    %v3663 = vunpack.c.l.b16 %v251
    %v3664 = vunpack.c.l.b16 %v252
    %v3665 = vunpack.c.l.b16 %v253
    %v3666 = vunpack.c.l.b16 %v254
    %v3667 = vunpack.c.l.b16 %v255
    %v3668 = vunpack.c.l.b16 %v256
    %v3669 = vunpack.c.l.b16 %v257
    %v3670 = vunpack.c.l.b16 %v258
    %v3671 = vunpack.c.l.b16 %v259
    %v3672 = vunpack.c.l.b16 %v260
    %v3673 = vunpack.c.l.b16 %v261
    %v3674 = vunpack.c.l.b16 %v262
    %v3675 = vunpack.c.l.b16 %v263
    %v3676 = vunpack.c.l.b16 %v264
    %v3677 = vunpack.c.l.b16 %v265
    %v3678 = vunpack.c.l.b16 %v266
    %v3679 = vunpack.c.l.b16 %v267
    %v3680 = vunpack.c.l.b16 %v268
    %v3681 = vunpack.c.l.b16 %v269
    %v3682 = vunpack.c.l.b16 %v270
    %v3683 = vunpack.c.l.b16 %v271
    %v3684 = vunpack.c.l.b16 %v272
    %v3685 = vunpack.c.l.b16 %v273
    %v3686 = vunpack.c.l.b16 %v274
    %v3687 = vunpack.c.l.b16 %v275
    %v3688 = vunpack.c.l.b16 %v276
    %v3689 = vunpack.c.l.b16 %v277
    %v3690 = vunpack.c.l.b16 %v278
    %v3691 = vunpack.c.l.b16 %v279
    %v3692 = vunpack.c.l.b16 %v280
    %v3693 = vunpack.c.l.b16 %v281
    %v3694 = vunpack.c.l.b16 %v282
    %v3695 = vunpack.c.l.b16 %v283
    %v3696 = vunpack.c.l.b16 %v284
    %v3697 = vunpack.c.l.b16 %v285
    %v3698 = vunpack.c.l.b16 %v286
    %v3699 = vunpack.c.l.b16 %v287
    %v3700 = vunpack.c.l.b16 %v288
    %v3701 = vunpack.c.l.b16 %v289
    %v3702 = vunpack.c.l.b16 %v290
    %v3703 = vunpack.c.l.b16 %v291
    %v3704 = vunpack.c.l.b16 %v292
    %v3705 = vunpack.c.l.b16 %v293
    %v3706 = vunpack.c.l.b16 %v294
    %v3707 = vunpack.c.l.b16 %v295
    %v3708 = vunpack.c.l.b16 %v296
    %v3709 = vunpack.c.l.b16 %v297
    %v3710 = vunpack.c.l.b16 %v298
    %v3711 = vunpack.c.l.b16 %v299
    %v3712 = vunpack.c.l.b16 %v300
    %v3713 = vunpack.c.l.b16 %v301
    %v3714 = vunpack.c.l.b16 %v302
    %v3715 = vunpack.c.l.b16 %v303
    %v3716 = vunpack.c.l.b16 %v304
    %v3717 = vunpack.c.l.b16 %v305
    %v3718 = vunpack.c.l.b16 %v306
    %v3719 = vunpack.c.l.b16 %v307
    %v3720 = vunpack.c.l.b16 %v308
    %v3721 = vunpack.c.l.b16 %v309
    %v3722 = vunpack.c.l.b16 %v310
    %v3723 = vunpack.c.l.b16 %v311
    %v3724 = vunpack.c.l.b16 %v312
    %v3725 = vunpack.c.l.b16 %v313
    %v3726 = vunpack.c.l.b16 %v314
    %v3727 = vunpack.c.l.b16 %v315
    %v3728 = vunpack.c.l.b16 %v316
    %v3729 = vunpack.c.l.b16 %v317
    %v3730 = vunpack.c.l.b16 %v318
    %v3731 = vunpack.c.l.b16 %v319
    %v3732 = vunpack.c.l.b16 %v320
    %v3733 = vunpack.c.l.b16 %v321
    %v3734 = vunpack.c.l.b16 %v322
    %v3735 = vunpack.c.l.b16 %v323
    %v3736 = vunpack.c.l.b16 %v324
    %v3737 = vunpack.c.l.b16 %v325
    %v3738 = vunpack.c.l.b16 %v326
    %v3739 = vunpack.c.l.b16 %v327
    %v3740 = vunpack.c.l.b16 %v328
    %v3741 = vunpack.c.l.b16 %v329
    %v3742 = vunpack.c.l.b16 %v330
    %v3743 = vunpack.c.l.b16 %v331
    %v3744 = vunpack.c.l.b16 %v332
    %v3745 = vunpack.c.l.b16 %v333
    %v3746 = vunpack.c.l.b16 %v334
    %v3747 = vunpack.c.l.b16 %v335
    %v3748 = vunpack.c.l.b16 %v336
    %v3749 = vunpack.c.l.b16 %v337
    %v3750 = vunpack.c.l.b16 %v338
    %v3751 = vunpack.c.l.b16 %v339
    %v3752 = vunpack.c.l.b16 %v340
    %v3753 = vunpack.c.l.b16 %v341
    %v3754 = vunpack.c.l.b16 %v342
    %v3755 = vunpack.c.l.b16 %v343
    %v3756 = vunpack.c.l.b16 %v344
    %v3757 = vunpack.c.l.b16 %v345
    %v3758 = vunpack.c.l.b16 %v346
    %v3759 = vunpack.c.l.b16 %v347
    %v3760 = vunpack.c.l.b16 %v348
    %v3761 = vunpack.c.l.b16 %v349
    %v3762 = vunpack.c.l.b16 %v350
    %v3763 = vunpack.c.l.b16 %v351
    %v3764 = vunpack.c.l.b16 %v352
    %v3765 = vunpack.c.l.b16 %v353
    %v3766 = vunpack.c.l.b16 %v354
    %v3767 = vunpack.c.l.b16 %v355
    %v3768 = vunpack.c.l.b16 %v356
    %v3769 = vunpack.c.l.b16 %v357
    %v3770 = vunpack.c.l.b16 %v358
    %v3771 = vunpack.c.l.b16 %v359
    %v3772 = vunpack.c.l.b16 %v360
    %v3773 = vunpack.c.l.b16 %v361
    %v3774 = vunpack.c.l.b16 %v362
    %v3775 = vunpack.c.l.b16 %v363
    %v3776 = vunpack.c.l.b16 %v364
    %v3777 = vunpack.c.l.b16 %v365
    %v3778 = vunpack.c.l.b16 %v366
    %v3779 = vunpack.c.l.b16 %v367
    %v3780 = vunpack.c.l.b16 %v368
    %v3781 = vunpack.c.l.b16 %v369
    %v3782 = vunpack.c.l.b16 %v370
    %v3783 = vunpack.c.l.b16 %v371
    %v3784 = vunpack.c.l.b16 %v372
    %v3785 = vunpack.c.l.b16 %v373
    %v3786 = vunpack.c.l.b16 %v374
    %v3787 = vunpack.c.l.b16 %v375
    %v3788 = vunpack.c.l.b16 %v376
    %v3789 = vunpack.c.l.b16 %v377
    %v3790 = vunpack.c.l.b16 %v378
    %v3791 = vunpack.c.l.b16 %v379
    %v3792 = vunpack.c.l.b16 %v380
    %v3793 = vunpack.c.l.b16 %v381
    %v3794 = vunpack.c.l.b16 %v382
    %v3795 = vunpack.c.l.b16 %v383
    %v3796 = vunpack.c.l.b16 %v384
    %v3797 = vunpack.c.l.b16 %v385
    %v3798 = vunpack.c.l.b16 %v386
    %v3799 = vunpack.c.l.b16 %v387
    %v3800 = vunpack.c.l.b16 %v388
    %v3801 = vunpack.c.l.b16 %v389
    %v3802 = vunpack.c.l.b16 %v390
    %v3803 = vunpack.c.l.b16 %v391
    %v3804 = vunpack.c.l.b16 %v392
    %v3805 = vunpack.c.l.b16 %v393
    %v3806 = vunpack.c.l.b16 %v394
    %v3807 = vunpack.c.l.b16 %v395
    %v3808 = vunpack.c.l.b16 %v396
    %v3809 = vunpack.c.l.b16 %v397
    %v3810 = vunpack.c.l.b16 %v398
    %v3811 = vunpack.c.l.b16 %v399
    %v3812 = vunpack.c.l.b16 %v400
    %v3813 = vunpack.c.l.b16 %v401
    %v3814 = vunpack.c.l.b16 %v402
    %v3815 = vunpack.c.l.b16 %v403
    %v3816 = vunpack.c.l.b16 %v404
    %v3817 = vunpack.c.l.b16 %v405
    %v3818 = vunpack.c.l.b16 %v406
    %v3819 = vunpack.c.l.b16 %v407
    %v3820 = vunpack.c.l.b16 %v408
    %v3821 = vunpack.c.l.b16 %v409
    %v3822 = vunpack.c.l.b16 %v410
    %v3823 = vunpack.c.l.b16 %v411
    %v3824 = vunpack.c.l.b16 %v412
    %v3825 = vunpack.c.l.b16 %v413
    %v3826 = vunpack.c.l.b16 %v414
    %v3827 = vunpack.c.l.b16 %v415
    %v3828 = vunpack.c.l.b16 %v416
    %v3829 = vunpack.c.l.b16 %v417
    %v3830 = vunpack.c.l.b16 %v418
    %v3831 = vunpack.c.l.b16 %v419
    %v3832 = vunpack.c.l.b16 %v420
    %v3833 = vunpack.c.l.b16 %v421
    %v3834 = vunpack.c.l.b16 %v422
    %v3835 = vunpack.c.l.b16 %v423
    %v3836 = vunpack.c.l.b16 %v424
    %v3837 = vunpack.c.l.b16 %v425
    %v3838 = vunpack.c.l.b16 %v426
    %v3839 = vunpack.c.l.b16 %v427
    %v3840 = vunpack.c.l.b16 %v428
    %v3841 = vunpack.c.l.b16 %v429
    %v3842 = vunpack.c.l.b16 %v430
    %v3843 = vunpack.c.l.b16 %v431
    %v3844 = vunpack.c.l.b16 %v432
    %v3845 = vunpack.c.l.b16 %v433
    %v3846 = vunpack.c.l.b16 %v434
    %v3847 = vunpack.c.l.b16 %v435
    %v3848 = vunpack.c.l.b16 %v436
    %v3849 = vunpack.c.l.b16 %v437
    %v3850 = vunpack.c.l.b16 %v438
    %v3851 = vunpack.c.l.b16 %v439
    %v3852 = vunpack.c.l.b16 %v440
    %v3853 = vunpack.c.l.b16 %v441
    %v3854 = vunpack.c.l.b16 %v442
    %v3855 = vunpack.c.l.b16 %v443
    %v3856 = vunpack.c.l.b16 %v444
    %v3857 = vunpack.c.l.b16 %v445
    %v3858 = vunpack.c.l.b16 %v446
    %v3859 = vunpack.c.l.b16 %v447
    %v3860 = vunpack.c.l.b16 %v448
    %v3861 = vunpack.c.l.b16 %v449
    %v3862 = vunpack.c.l.b16 %v450
    %v3863 = vunpack.c.l.b16 %v451
    %v3864 = vunpack.c.l.b16 %v452
    %v3865 = vunpack.c.l.b16 %v453
    %v3866 = vunpack.c.l.b16 %v454
    %v3867 = vunpack.c.l.b16 %v455
    %v3868 = vunpack.c.l.b16 %v456
    %v3869 = vunpack.c.l.b16 %v457
    %v3870 = vunpack.c.l.b16 %v458
    %v3871 = vunpack.c.l.b16 %v459
    %v3872 = vunpack.c.l.b16 %v460
    %v3873 = vunpack.c.l.b16 %v461
    %v3874 = vunpack.c.l.b16 %v462
    %v3875 = vunpack.c.l.b16 %v463
    %v3876 = vunpack.c.l.b16 %v464
    %v3877 = vunpack.c.l.b16 %v465
    %v3878 = vunpack.c.l.b16 %v466
    %v3879 = vunpack.c.l.b16 %v467
    %v3880 = vunpack.c.l.b16 %v468
    %v3881 = vunpack.c.l.b16 %v469
    %v3882 = vunpack.c.l.b16 %v470
    %v3883 = vunpack.c.l.b16 %v471
    %v3884 = vunpack.c.l.b16 %v472
    %v3885 = vunpack.c.l.b16 %v473
    %v3886 = vunpack.c.l.b16 %v474
    %v3887 = vunpack.c.l.b16 %v475
    %v3888 = vunpack.c.l.b16 %v476
    %v3889 = vunpack.c.l.b16 %v477
    %v3890 = vunpack.c.l.b16 %v478
    %v3891 = vunpack.c.l.b16 %v479
    %v3892 = vunpack.c.l.b16 %v480
    %v3893 = vunpack.c.l.b16 %v481
    %v3894 = vunpack.c.l.b16 %v482
    %v3895 = vunpack.c.l.b16 %v483
    %v3896 = vunpack.c.l.b16 %v484
    %v3897 = vunpack.c.l.b16 %v485
    %v3898 = vunpack.c.l.b16 %v486
    %v3899 = vunpack.c.l.b16 %v487
    %v3900 = vunpack.c.l.b16 %v488
    %v3901 = vunpack.c.l.b16 %v489
    %v3902 = vunpack.c.l.b16 %v490
    %v3903 = vunpack.c.l.b16 %v491
    %v3904 = vunpack.c.l.b16 %v492
    %v3905 = vunpack.c.l.b16 %v493
    %v3906 = vunpack.c.l.b16 %v494
    %v3907 = vunpack.c.l.b16 %v495
    %v3908 = vunpack.c.l.b16 %v496
    %v3909 = vunpack.c.l.b16 %v497
    %v3910 = vunpack.c.l.b16 %v498
    %v3911 = vunpack.c.l.b16 %v499
    %v3912 = vunpack.c.l.b16 %v500
    %v3913 = vunpack.c.l.b16 %v501
    %v3914 = vunpack.c.l.b16 %v502
    %v3915 = vunpack.c.l.b16 %v503
    %v3916 = vunpack.c.l.b16 %v504
    %v3917 = vunpack.c.l.b16 %v505
    %v3918 = vunpack.c.l.b16 %v506
    %v3919 = vunpack.c.l.b16 %v507
    %v3920 = vunpack.c.l.b16 %v508
    %v3921 = vunpack.c.l.b16 %v509
    %v3922 = vunpack.c.l.b16 %v510
    %v3923 = vunpack.c.l.b16 %v511
    %v3924 = vunpack.c.l.b16 %v512
    %v3925 = vunpack.c.l.b16 %v513
    %v3926 = vunpack.c.l.b16 %v514
    %v3927 = vunpack.c.l.b16 %v515
    %v3928 = vunpack.c.l.b16 %v516
    %v3929 = vunpack.c.l.b16 %v517
    %v3930 = vunpack.c.l.b16 %v518
    %v3931 = vunpack.c.l.b16 %v519
    %v3932 = vunpack.c.l.b16 %v520
    %v3933 = vunpack.c.l.b16 %v521
    %v3934 = vunpack.c.l.b16 %v522
    %v3935 = vunpack.c.l.b16 %v523
    %v3936 = vunpack.c.l.b16 %v524
    %v3937 = vunpack.c.l.b16 %v525
    %v3938 = vunpack.c.l.b16 %v526
    %v3939 = vunpack.c.l.b16 %v527
    %v3940 = vunpack.c.l.b16 %v528
    %v3941 = vunpack.c.l.b16 %v529
    %v3942 = vunpack.c.l.b16 %v530
    %v3943 = vunpack.c.l.b16 %v531
    %v3944 = vunpack.c.l.b16 %v532
    %v3945 = vunpack.c.l.b16 %v533
    %v3946 = vunpack.c.l.b16 %v534
    %v3947 = vunpack.c.l.b16 %v535
    %v3948 = vunpack.c.l.b16 %v536
    %v3949 = vunpack.c.l.b16 %v537
    %v3950 = vunpack.c.l.b16 %v538
    %v3951 = vunpack.c.l.b16 %v539
    %v3952 = vunpack.c.l.b16 %v540
    %v3953 = vunpack.c.l.b16 %v541
    %v3954 = vunpack.c.l.b16 %v542
    %v3955 = vunpack.c.l.b16 %v543
    %v3956 = vunpack.c.l.b16 %v544
    %v3957 = vunpack.c.l.b16 %v545
    %v3958 = vunpack.c.l.b16 %v546
    %v3959 = vunpack.c.l.b16 %v547
    %v3960 = vunpack.c.l.b16 %v548
    %v3961 = vunpack.c.l.b16 %v549
    %v3962 = vunpack.c.l.b16 %v550
    %v3963 = vunpack.c.l.b16 %v551
    %v3964 = vunpack.c.l.b16 %v552
    %v3965 = vunpack.c.l.b16 %v553
    %v3966 = vunpack.c.l.b16 %v554
    %v3967 = vunpack.c.l.b16 %v555
    %v3968 = vunpack.c.l.b16 %v556
    %v3969 = vunpack.c.l.b16 %v557
    %v3970 = vunpack.c.l.b16 %v558
    %v3971 = vunpack.c.l.b16 %v559
    %v3972 = vunpack.c.l.b16 %v560
    %v3973 = vunpack.c.l.b16 %v561
    %v3974 = vunpack.c.l.b16 %v562
    %v3975 = vunpack.c.l.b16 %v563
    %v3976 = vunpack.c.l.b16 %v564
    %v3977 = vunpack.c.l.b16 %v565
    %v3978 = vunpack.c.l.b16 %v566
    %v3979 = vunpack.c.l.b16 %v567
    %v3980 = vunpack.c.l.b16 %v568
    %v3981 = vunpack.c.l.b16 %v569
    %v3982 = vunpack.c.l.b16 %v570
    %v3983 = vunpack.c.l.b16 %v571
    %v3984 = vunpack.c.l.b16 %v572
    %v3985 = vunpack.c.l.b16 %v573
    %v3986 = vunpack.c.l.b16 %v574
    %v3987 = vunpack.c.l.b16 %v575
    %v3988 = vunpack.c.l.b16 %v576
    %v3989 = vunpack.c.l.b16 %v577
    %v3990 = vunpack.c.l.b16 %v578
    %v3991 = vunpack.c.l.b16 %v579
    %v3992 = vunpack.c.l.b16 %v580
    %v3993 = vunpack.c.l.b16 %v581
    %v3994 = vunpack.c.l.b16 %v582
    %v3995 = vunpack.c.l.b16 %v583
    %v3996 = vunpack.c.l.b16 %v584
    %v3997 = vunpack.c.l.b16 %v585
    %v3998 = vunpack.c.l.b16 %v586
    %v3999 = vunpack.c.l.b16 %v587
    %v4000 = vunpack.c.l.b16 %v588
    %v4001 = vunpack.c.l.b16 %v589
    %v4002 = vunpack.c.l.b16 %v590
    %v4003 = vunpack.c.l.b16 %v591
    %v4004 = vunpack.c.l.b16 %v592
    %v4005 = vunpack.c.l.b16 %v593
    %v4006 = vunpack.c.l.b16 %v594
    %v4007 = vunpack.c.l.b16 %v595
    %v4008 = vunpack.c.l.b16 %v596
    %v4009 = vunpack.c.l.b16 %v597
    %v4010 = vunpack.c.l.b16 %v598
    %v4011 = vunpack.c.l.b16 %v599
    %v4012 = vunpack.c.l.b16 %v600
    %v4013 = vunpack.c.l.b16 %v601
    %v4014 = vunpack.c.l.b16 %v602
    %v4015 = vunpack.c.l.b16 %v603
    %v4016 = vunpack.c.l.b16 %v604
    %v4017 = vunpack.c.l.b16 %v605
    %v4018 = vunpack.c.l.b16 %v606
    %v4019 = vunpack.c.l.b16 %v607
    %v4020 = vunpack.c.l.b16 %v608
    %v4021 = vunpack.c.l.b16 %v609
    %v4022 = vunpack.c.l.b16 %v610
    %v4023 = vunpack.c.l.b16 %v611
    %v4024 = vunpack.c.l.b16 %v612
    %v4025 = vunpack.c.l.b16 %v613
    %v4026 = vunpack.c.l.b16 %v614
    %v4027 = vunpack.c.l.b16 %v615
    %v4028 = vunpack.c.l.b16 %v616
    %v4029 = vunpack.c.l.b16 %v617
    %v4030 = vunpack.c.l.b16 %v618
    %v4031 = vunpack.c.l.b16 %v619
    %v4032 = vunpack.c.l.b16 %v620
    %v4033 = vunpack.c.l.b16 %v621
    %v4034 = vunpack.c.l.b16 %v622
    %v4035 = vunpack.c.l.b16 %v623
    %v4036 = vunpack.c.l.b16 %v624
    %v4037 = vunpack.c.l.b16 %v625
    %v4038 = vunpack.c.l.b16 %v626
    %v4039 = vunpack.c.l.b16 %v627
    %v4040 = vunpack.c.l.b16 %v628
    %v4041 = vunpack.c.l.b16 %v629
    %v4042 = vunpack.c.l.b16 %v630
    %v4043 = vunpack.c.l.b16 %v631
    %v4044 = vunpack.c.l.b16 %v632
    %v4045 = vunpack.c.l.b16 %v633
    %v4046 = vunpack.c.l.b16 %v634
    %v4047 = vunpack.c.l.b16 %v635
    %v4048 = vunpack.c.l.b16 %v636
    %v4049 = vunpack.c.l.b16 %v637
    %v4050 = vunpack.c.l.b16 %v638
    %v4051 = vunpack.c.l.b16 %v639
    %v4052 = vunpack.c.l.b16 %v640
    %v4053 = vunpack.c.l.b16 %v641
    %v4054 = vunpack.c.l.b16 %v642
    %v4055 = vunpack.c.l.b16 %v643
    %v4056 = vunpack.c.l.b16 %v644
    %v4057 = vunpack.c.l.b16 %v645
    %v4058 = vunpack.c.l.b16 %v646
    %v4059 = vunpack.c.l.b16 %v647
    %v4060 = vunpack.c.l.b16 %v648
    %v4061 = vunpack.c.l.b16 %v649
    %v4062 = vunpack.c.l.b16 %v650
    %v4063 = vunpack.c.l.b16 %v651
    %v4064 = vunpack.c.l.b16 %v652
    %v4065 = vunpack.c.l.b16 %v653
    %v4066 = vunpack.c.l.b16 %v654
    %v4067 = vunpack.c.l.b16 %v655
    %v4068 = vunpack.c.l.b16 %v656
    %v4069 = vunpack.c.l.b16 %v657
    %v4070 = vunpack.c.l.b16 %v658
    %v4071 = vunpack.c.l.b16 %v659
    %v4072 = vunpack.c.l.b16 %v660
    %v4073 = vunpack.c.l.b16 %v661
    %v4074 = vunpack.c.l.b16 %v662
    %v4075 = vunpack.c.l.b16 %v663
    %v4076 = vunpack.c.l.b16 %v664
    %v4077 = vunpack.c.l.b16 %v665
    %v4078 = vunpack.c.l.b16 %v666
    %v4079 = vunpack.c.l.b16 %v667
    %v4080 = vunpack.c.l.b16 %v668
    %v4081 = vunpack.c.l.b16 %v669
    %v4082 = vunpack.c.l.b16 %v670
    %v4083 = vunpack.c.l.b16 %v671
    %v4084 = vunpack.c.l.b16 %v672
    %v4085 = vunpack.c.l.b16 %v673
    %v4086 = vunpack.c.l.b16 %v674
    %v4087 = vunpack.c.l.b16 %v675
    %v4088 = vunpack.c.l.b16 %v676
    %v4089 = vunpack.c.l.b16 %v677
    %v4090 = vunpack.c.l.b16 %v678
    %v4091 = vunpack.c.l.b16 %v679
    %v4092 = vunpack.c.l.b16 %v680
    %v4093 = vunpack.c.l.b16 %v681
    %v4094 = vunpack.c.l.b16 %v682
    %v4095 = vunpack.c.l.b16 %v683
    %v4096 = vunpack.c.l.b16 %v684
    %v4097 = vunpack.c.l.b16 %v685
    %v4098 = vunpack.c.l.b16 %v686
    %v4099 = vunpack.c.l.b16 %v687
    %v4100 = vunpack.c.l.b16 %v688
    %v4101 = vunpack.c.l.b16 %v689
    %v4102 = vunpack.c.l.b16 %v690
    %v4103 = vunpack.c.l.b16 %v691
    %v4104 = vunpack.c.l.b16 %v692
    %v4105 = vunpack.c.l.b16 %v693
    %v4106 = vunpack.c.l.b16 %v694
    %v4107 = vunpack.c.l.b16 %v695
    %v4108 = vunpack.c.l.b16 %v696
    %v4109 = vunpack.c.l.b16 %v697
    %v4110 = vunpack.c.l.b16 %v698
    %v4111 = vunpack.c.l.b16 %v699
    %v4112 = vunpack.c.l.b16 %v700
    %v4113 = vunpack.c.l.b16 %v701
    %v4114 = vunpack.c.l.b16 %v702
    %v4115 = vunpack.c.l.b16 %v703
    %v4116 = vunpack.c.l.b16 %v704
    %v4117 = vunpack.c.l.b16 %v705
    %v4118 = vunpack.c.l.b16 %v706
    %v4119 = vunpack.c.l.b16 %v707
    %v4120 = vunpack.c.l.b16 %v708
    %v4121 = vunpack.c.l.b16 %v709
    %v4122 = vunpack.c.l.b16 %v710
    %v4123 = vunpack.c.l.b16 %v711
    %v4124 = vunpack.c.l.b16 %v712
    %v4125 = vunpack.c.l.b16 %v713
    %v4126 = vunpack.c.l.b16 %v714
    %v4127 = vunpack.c.l.b16 %v715
    %v4128 = vunpack.c.l.b16 %v716
    %v4129 = vunpack.c.l.b16 %v717
    %v4130 = vunpack.c.l.b16 %v718
    %v4131 = vunpack.c.l.b16 %v719
    %v4132 = vunpack.c.l.b16 %v720
    %v4133 = vunpack.c.l.b16 %v721
    %v4134 = vunpack.c.l.b16 %v722
    %v4135 = vunpack.c.l.b16 %v723
    %v4136 = vunpack.c.l.b16 %v724
    %v4137 = vunpack.c.l.b16 %v725
    %v4138 = vunpack.c.l.b16 %v726
    %v4139 = vunpack.c.l.b16 %v727
    %v4140 = vunpack.c.l.b16 %v728
    %v4141 = vunpack.c.l.b16 %v729
    %v4142 = vunpack.c.l.b16 %v730
    %v4143 = vunpack.c.l.b16 %v731
    %v4144 = vunpack.c.l.b16 %v732
    %v4145 = vunpack.c.l.b16 %v733
    %v4146 = vunpack.c.l.b16 %v734
    %v4147 = vunpack.c.l.b16 %v735
    %v4148 = vunpack.c.l.b16 %v736
    %v4149 = vunpack.c.l.b16 %v737
    %v4150 = vunpack.c.l.b16 %v738
    %v4151 = vunpack.c.l.b16 %v739
    %v4152 = vunpack.c.l.b16 %v740
    %v4153 = vunpack.c.l.b16 %v741
    %v4154 = vunpack.c.l.b16 %v742
    %v4155 = vunpack.c.l.b16 %v743
    %v4156 = vunpack.c.l.b16 %v744
    %v4157 = vunpack.c.l.b16 %v745
    %v4158 = vunpack.c.l.b16 %v746
    %v4159 = vunpack.c.l.b16 %v747
    %v4160 = vunpack.c.l.b16 %v748
    %v4161 = vunpack.c.l.b16 %v749
    %v4162 = vunpack.c.l.b16 %v750
    %v4163 = vunpack.c.l.b16 %v751
    %v4164 = vunpack.c.l.b16 %v752
    %v4165 = vunpack.c.l.b16 %v753
    %v4166 = vunpack.c.l.b16 %v754
    %v4167 = vunpack.c.l.b16 %v755
    %v4168 = vunpack.c.l.b16 %v756
    %v4169 = vunpack.c.l.b16 %v757
    %v4170 = vunpack.c.l.b16 %v758
    %v4171 = vunpack.c.l.b16 %v759
    %v4172 = vunpack.c.l.b16 %v760
    %v4173 = vunpack.c.l.b16 %v761
    %v4174 = vunpack.c.l.b16 %v762
    %v4175 = vunpack.c.l.b16 %v763
    %v4176 = vunpack.c.l.b16 %v764
    %v4177 = vunpack.c.l.b16 %v765
    %v4178 = vunpack.c.l.b16 %v766
    %v4179 = vunpack.c.l.b16 %v767
    %v4180 = vunpack.c.l.b16 %v768
    %v4181 = vunpack.c.l.b16 %v769
    %v4182 = vunpack.c.l.b16 %v770
    %v4183 = vunpack.c.l.b16 %v771
    %v4184 = vunpack.c.l.b16 %v772
    %v4185 = vunpack.c.l.b16 %v773
    %v4186 = vunpack.c.l.b16 %v774
    %v4187 = vunpack.c.l.b16 %v775
    %v4188 = vunpack.c.l.b16 %v776
    %v4189 = vunpack.c.l.b16 %v777
    %v4190 = vunpack.c.l.b16 %v778
    %v4191 = vunpack.c.l.b16 %v779
    %v4192 = vunpack.c.l.b16 %v780
    %v4193 = vunpack.c.l.b16 %v781
    %v4194 = vunpack.c.l.b16 %v782
    %v4195 = vunpack.c.l.b16 %v783
    %v4196 = vunpack.c.l.b16 %v784
    %v4197 = vunpack.c.l.b16 %v785
    %v4198 = vunpack.c.l.b16 %v786
    %v4199 = vunpack.c.l.b16 %v787
    %v4200 = vunpack.c.l.b16 %v788
    %v4201 = vunpack.c.l.b16 %v789
    %v4202 = vunpack.c.l.b16 %v790
    %v4203 = vunpack.c.l.b16 %v791
    %v4204 = vunpack.c.l.b16 %v792
    %v4205 = vunpack.c.l.b16 %v793
    %v4206 = vunpack.c.l.b16 %v794
    %v4207 = vunpack.c.l.b16 %v795
    %v4208 = vunpack.c.l.b16 %v796
    %v4209 = vunpack.c.l.b16 %v797
    %v4210 = vunpack.c.l.b16 %v798
    %v4211 = vunpack.c.l.b16 %v799
    %v4212 = vunpack.c.l.b16 %v800
    %v4213 = vunpack.c.l.b16 %v801
    %v4214 = vunpack.c.l.b16 %v802
    %v4215 = vunpack.c.l.b16 %v803
    %v4216 = vunpack.c.l.b16 %v804
    %v4217 = vunpack.c.l.b16 %v805
    %v4218 = vunpack.c.l.b16 %v806
    %v4219 = vunpack.c.l.b16 %v807
    %v4220 = vunpack.c.l.b16 %v808
    %v4221 = vunpack.c.l.b16 %v809
    %v4222 = vunpack.c.l.b16 %v810
    %v4223 = vunpack.c.l.b16 %v811
    %v4224 = vunpack.c.l.b16 %v812
    %v4225 = vunpack.c.l.b16 %v813
    %v4226 = vunpack.c.l.b16 %v814
    %v4227 = vunpack.c.l.b16 %v815
    %v4228 = vunpack.c.l.b16 %v816
    %v4229 = vunpack.c.l.b16 %v817
    %v4230 = vunpack.c.l.b16 %v818
    %v4231 = vunpack.c.l.b16 %v819
    %v4232 = vunpack.c.l.b16 %v820
    %v4233 = vunpack.c.l.b16 %v821
    %v4234 = vunpack.c.l.b16 %v822
    %v4235 = vunpack.c.l.b16 %v823
    %v4236 = vunpack.c.l.b16 %v824
    %v4237 = vunpack.c.l.b16 %v825
    %v4238 = vunpack.c.l.b16 %v826
    %v4239 = vunpack.c.l.b16 %v827
    %v4240 = vunpack.c.l.b16 %v828
    %v4241 = vunpack.c.l.b16 %v829
    %v4242 = vunpack.c.l.b16 %v830
    %v4243 = vunpack.c.l.b16 %v831
    %v4244 = vunpack.c.l.b16 %v832
    %v4245 = vunpack.c.l.b16 %v833
    %v4246 = vunpack.c.l.b16 %v834
    %v4247 = vunpack.c.l.b16 %v835
    %v4248 = vunpack.c.l.b16 %v836
    %v4249 = vunpack.c.l.b16 %v837
    %v4250 = vunpack.c.l.b16 %v838
    %v4251 = vunpack.c.l.b16 %v839
    %v4252 = vunpack.c.l.b16 %v840
    %v4253 = vunpack.c.l.b16 %v841
    %v4254 = vunpack.c.l.b16 %v842
    %v4255 = vunpack.c.l.b16 %v843
    %v4256 = vunpack.c.l.b16 %v844
    %v4257 = vunpack.c.l.b16 %v845
    %v4258 = vunpack.c.l.b16 %v846
    %v4259 = vunpack.c.l.b16 %v847
    %v4260 = vunpack.c.l.b16 %v848
    %v4261 = vunpack.c.l.b16 %v849
    %v4262 = vunpack.c.l.b16 %v850
    %v4263 = vunpack.c.l.b16 %v851
    %v4264 = vunpack.c.l.b16 %v852
    %v4265 = vunpack.c.l.b16 %v853
    %v4266 = vunpack.c.l.b16 %v854
    %v4267 = vunpack.c.l.b16 %v855
    %v4268 = vunpack.c.l.b16 %v856
    %v4269 = vunpack.c.l.b16 %v857
    %v4270 = vunpack.c.l.b16 %v858
    %v4271 = vunpack.c.l.b16 %v859
    %v4272 = vunpack.c.l.b16 %v860
    %v4273 = vunpack.c.l.b16 %v861
    %v4274 = vunpack.c.l.b16 %v862
    %v4275 = vunpack.c.l.b16 %v863
    %v4276 = vunpack.c.l.b16 %v864
    %v4277 = vunpack.c.l.b16 %v865
    %v4278 = vunpack.c.l.b16 %v866
    %v4279 = vunpack.c.l.b16 %v867
    %v4280 = vunpack.c.l.b16 %v868
    %v4281 = vunpack.c.l.b16 %v869
    %v4282 = vunpack.c.l.b16 %v870
    %v4283 = vunpack.c.l.b16 %v871
    %v4284 = vunpack.c.l.b16 %v872
    %v4285 = vunpack.c.l.b16 %v873
    %v4286 = vunpack.c.l.b16 %v874
    %v4287 = vunpack.c.l.b16 %v875
    %v4288 = vunpack.c.l.b16 %v876
    %v4289 = vunpack.c.l.b16 %v877
    %v4290 = vunpack.c.l.b16 %v878
    %v4291 = vunpack.c.l.b16 %v879
    %v4292 = vunpack.c.l.b16 %v880
    %v4293 = vunpack.c.l.b16 %v881
    %v4294 = vunpack.c.l.b16 %v882
    %v4295 = vunpack.c.l.b16 %v883
    %v4296 = vunpack.c.l.b16 %v884
    %v4297 = vunpack.c.l.b16 %v885
    %v4298 = vunpack.c.l.b16 %v886
    %v4299 = vunpack.c.l.b16 %v887
    %v4300 = vunpack.c.l.b16 %v888
    %v4301 = vunpack.c.l.b16 %v889
    %v4302 = vunpack.c.l.b16 %v890
    %v4303 = vunpack.c.l.b16 %v891
    %v4304 = vunpack.c.l.b16 %v892
    %v4305 = vunpack.c.l.b16 %v893
    %v4306 = vunpack.c.l.b16 %v894
    %v4307 = vunpack.c.l.b16 %v895
    %v4308 = vunpack.c.l.b16 %v896
    %v4309 = vunpack.c.l.b16 %v897
    %v4310 = vunpack.c.l.b16 %v898
    %v4311 = vunpack.c.l.b16 %v899
    %v4312 = vunpack.c.l.b16 %v900
    %v4313 = vunpack.c.l.b16 %v901
    %v4314 = vunpack.c.l.b16 %v902
    %v4315 = vunpack.c.l.b16 %v903
    %v4316 = vunpack.c.l.b16 %v904
    %v4317 = vunpack.c.l.b16 %v905
    %v4318 = vunpack.c.l.b16 %v906
    %v4319 = vunpack.c.l.b16 %v907
    %v4320 = vunpack.c.l.b16 %v908
    %v4321 = vunpack.c.l.b16 %v909
    %v4322 = vunpack.c.l.b16 %v910
    %v4323 = vunpack.c.l.b16 %v911
    %v4324 = vunpack.c.l.b16 %v912
    %v4325 = vunpack.c.l.b16 %v913
    %v4326 = vunpack.c.l.b16 %v914
    %v4327 = vunpack.c.l.b16 %v915
    %v4328 = vunpack.c.l.b16 %v916
    %v4329 = vunpack.c.l.b16 %v917
    %v4330 = vunpack.c.l.b16 %v918
    %v4331 = vunpack.c.l.b16 %v919
    %v4332 = vunpack.c.l.b16 %v920
    %v4333 = vunpack.c.l.b16 %v921
    %v4334 = vunpack.c.l.b16 %v922
    %v4335 = vunpack.c.l.b16 %v923
    %v4336 = vunpack.c.l.b16 %v924
    %v4337 = vunpack.c.l.b16 %v925
    %v4338 = vunpack.c.l.b16 %v926
    %v4339 = vunpack.c.l.b16 %v927
    %v4340 = vunpack.c.l.b16 %v928
    %v4341 = vunpack.c.l.b16 %v929
    %v4342 = vunpack.c.l.b16 %v930
    %v4343 = vunpack.c.l.b16 %v931
    %v4344 = vunpack.c.l.b16 %v932
    %v4345 = vunpack.c.l.b16 %v933
    %v4346 = vunpack.c.l.b16 %v934
    %v4347 = vunpack.c.l.b16 %v935
    %v4348 = vunpack.c.l.b16 %v936
    %v4349 = vunpack.c.l.b16 %v937
    %v4350 = vunpack.c.l.b16 %v938
    %v4351 = vunpack.c.l.b16 %v939
    %v4352 = vunpack.c.l.b16 %v940
    %v4353 = vunpack.c.l.b16 %v941
    %v4354 = vunpack.c.l.b16 %v942
    %v4355 = vunpack.c.l.b16 %v943
    %v4356 = vunpack.c.l.b16 %v944
    %v4357 = vunpack.c.l.b16 %v945
    %v4358 = vunpack.c.l.b16 %v946
    %v4359 = vunpack.c.l.b16 %v947
    %v4360 = vunpack.c.l.b16 %v948
    %v4361 = vunpack.c.l.b16 %v949
    %v4362 = vunpack.c.l.b16 %v950
    %v4363 = vunpack.c.l.b16 %v951
    %v4364 = vunpack.c.l.b16 %v952
    %v4365 = vunpack.c.l.b16 %v953
    %v4366 = vunpack.c.l.b16 %v954
    %v4367 = vunpack.c.l.b16 %v955
    %v4368 = vunpack.c.l.b16 %v956
    %v4369 = vunpack.c.l.b16 %v957
    %v4370 = vunpack.c.l.b16 %v958
    %v4371 = vunpack.c.l.b16 %v959
    %v4372 = vunpack.c.l.b16 %v960
    %v4373 = vunpack.c.l.b16 %v961
    %v4374 = vunpack.c.l.b16 %v962
    %v4375 = vunpack.c.l.b16 %v963
    %v4376 = vunpack.c.l.b16 %v964
    %v4377 = vunpack.c.l.b16 %v965
    %v4378 = vunpack.c.l.b16 %v966
    %v4379 = vunpack.c.l.b16 %v967
    %v4380 = vunpack.c.l.b16 %v968
    %v4381 = vunpack.c.l.b16 %v969
    %v4382 = vunpack.c.l.b16 %v970
    %v4383 = vunpack.c.l.b16 %v971
    %v4384 = vunpack.c.l.b16 %v972
    %v4385 = vunpack.c.l.b16 %v973
    %v4386 = vunpack.c.l.b16 %v974
    %v4387 = vunpack.c.l.b16 %v975
    %v4388 = vunpack.c.l.b16 %v976
    %v4389 = vunpack.c.l.b16 %v977
    %v4390 = vunpack.c.l.b16 %v978
    %v4391 = vunpack.c.l.b16 %v979
    %v4392 = vunpack.c.l.b16 %v980
    %v4393 = vunpack.c.l.b16 %v981
    %v4394 = vunpack.c.l.b16 %v982
    %v4395 = vunpack.c.l.b16 %v983
    %v4396 = vunpack.c.l.b16 %v984
    %v4397 = vunpack.c.l.b16 %v985
    %v4398 = vunpack.c.l.b16 %v986
    %v4399 = vunpack.c.l.b16 %v987
    %v4400 = vunpack.c.l.b16 %v988
    %v4401 = vunpack.c.l.b16 %v989
    %v4402 = vunpack.c.l.b16 %v990
    %v4403 = vunpack.c.l.b16 %v991
    %v4404 = vunpack.c.l.b16 %v992
    %v4405 = vunpack.c.l.b16 %v993
    %v4406 = vunpack.c.l.b16 %v994
    %v4407 = vunpack.c.l.b16 %v995
    %v4408 = vunpack.c.l.b16 %v996
    %v4409 = vunpack.c.l.b16 %v997
    %v4410 = vunpack.c.l.b16 %v998
    %v4411 = vunpack.c.l.b16 %v999
    %v4412 = vunpack.c.l.b16 %v1000
    %v4413 = vunpack.c.l.b16 %v1001
    %v4414 = vunpack.c.l.b16 %v1002
    %v4415 = vunpack.c.l.b16 %v1003
    %v4416 = vunpack.c.l.b16 %v1004
    %v4417 = vunpack.c.l.b16 %v1005
    %v4418 = vunpack.c.l.b16 %v1006
    %v4419 = vunpack.c.l.b16 %v1007
    %v4420 = vunpack.c.l.b16 %v1008
    %v4421 = vunpack.c.l.b16 %v1009
    %v4422 = vunpack.c.l.b16 %v1010
    %v4423 = vunpack.c.l.b16 %v1011
    %v4424 = vunpack.c.l.b16 %v1012
    %v4425 = vunpack.c.l.b16 %v1013
    %v4426 = vunpack.c.l.b16 %v1014
    %v4427 = vunpack.c.l.b16 %v1015
    %v4428 = vunpack.c.l.b16 %v1016
    %v4429 = vunpack.c.l.b16 %v1017
    %v4430 = vunpack.c.l.b16 %v1018
    %v4431 = vunpack.c.l.b16 %v1019
    %v4432 = vunpack.c.l.b16 %v1020
    %v4433 = vunpack.c.l.b16 %v1021
    %v4434 = vunpack.c.l.b16 %v1022
    %v4435 = vunpack.c.l.b16 %v1023
    %v4436 = vunpack.c.l.b16 %v1024
    %v4437 = vunpack.c.l.b16 %v1025
    %v4438 = vunpack.c.l.b16 %v1026
    %v4439 = vunpack.c.l.b16 %v1027
    %v4440 = vunpack.c.l.b16 %v1028
    %v4441 = vunpack.c.l.b16 %v1029
    %v4442 = vunpack.c.l.b16 %v1030
    %v4443 = vunpack.c.l.b16 %v1031
    %v4444 = vunpack.c.l.b16 %v1032
    %v4445 = vunpack.c.l.b16 %v1033
    %v4446 = vunpack.c.l.b16 %v1034
    %v4447 = vunpack.c.l.b16 %v1035
    %v4448 = vunpack.c.l.b16 %v1036
    %v4449 = vunpack.c.l.b16 %v1037
    %v4450 = vunpack.c.l.b16 %v1038
    %v4451 = vunpack.c.l.b16 %v1039
    %v4452 = vunpack.c.l.b16 %v1040
    %v4453 = vunpack.c.l.b16 %v1041
    %v4454 = vunpack.c.l.b16 %v1042
    %v4455 = vunpack.c.l.b16 %v1043
    %v4456 = vunpack.c.l.b16 %v1044
    %v4457 = vunpack.c.l.b16 %v1045
    %v4458 = vunpack.c.l.b16 %v1046
    %v4459 = vunpack.c.l.b16 %v1047
    %v4460 = vunpack.c.l.b16 %v1048
    %v4461 = vunpack.c.l.b16 %v1049
    %v4462 = vunpack.c.l.b16 %v1050
    %v4463 = vunpack.c.l.b16 %v1051
    %v4464 = vunpack.c.l.b16 %v1052
    %v4465 = vunpack.c.l.b16 %v1053
    %v4466 = vunpack.c.l.b16 %v1054
    %v4467 = vunpack.c.l.b16 %v1055
    %v4468 = vunpack.c.l.b16 %v1056
    %v4469 = vunpack.c.l.b16 %v1057
    %v4470 = vunpack.c.l.b16 %v1058
    %v4471 = vunpack.c.l.b16 %v1059
    %v4472 = vunpack.c.l.b16 %v1060
    %v4473 = vunpack.c.l.b16 %v1061
    %v4474 = vunpack.c.l.b16 %v1062
    %v4475 = vunpack.c.l.b16 %v1063
    %v4476 = vunpack.c.l.b16 %v1064
    %v4477 = vunpack.c.l.b16 %v1065
    %v4478 = vunpack.c.l.b16 %v1066
    %v4479 = vunpack.c.l.b16 %v1067
    %v4480 = vunpack.c.l.b16 %v1068
    %v4481 = vunpack.c.l.b16 %v1069
    %v4482 = vunpack.c.l.b16 %v1070
    %v4483 = vunpack.c.l.b16 %v1071
    %v4484 = vunpack.c.l.b16 %v1072
    %v4485 = vunpack.c.l.b16 %v1073
    %v4486 = vunpack.c.l.b16 %v1074
    %v4487 = vunpack.c.l.b16 %v1075
    %v4488 = vunpack.c.l.b16 %v1076
    %v4489 = vunpack.c.l.b16 %v1077
    %v4490 = vunpack.c.l.b16 %v1078
    %v4491 = vunpack.c.l.b16 %v1079
    %v4492 = vunpack.c.l.b16 %v1080
    %v4493 = vunpack.c.l.b16 %v1081
    %v4494 = vunpack.c.l.b16 %v1082
    %v4495 = vunpack.c.l.b16 %v1083
    %v4496 = vunpack.c.l.b16 %v1084
    %v4497 = vunpack.c.l.b16 %v1085
    %v4498 = vunpack.c.l.b16 %v1086
    %v4499 = vunpack.c.l.b16 %v1087
    %v4500 = vunpack.c.l.b16 %v1088
    %v4501 = vunpack.c.l.b16 %v1089
    %v4502 = vunpack.c.l.b16 %v1090
    %v4503 = vunpack.c.l.b16 %v1091
    %v4504 = vunpack.c.l.b16 %v1092
    %v4505 = vunpack.c.l.b16 %v1093
    %v4506 = vunpack.c.l.b16 %v1094
    %v4507 = vunpack.c.l.b16 %v1095
    %v4508 = vunpack.c.l.b16 %v1096
    %v4509 = vunpack.c.l.b16 %v1097
    %v4510 = vunpack.c.l.b16 %v1098
    %v4511 = vunpack.c.l.b16 %v1099
    %v4512 = vunpack.c.l.b16 %v1100
    %v4513 = vunpack.c.l.b16 %v1101
    %v4514 = vunpack.c.l.b16 %v1102
    %v4515 = vunpack.c.l.b16 %v1103
    %v4516 = vunpack.c.l.b16 %v1104
    %v4517 = vunpack.c.l.b16 %v1105
    %v4518 = vunpack.c.l.b16 %v1106
    %v4519 = vunpack.c.l.b16 %v1107
    %v4520 = vunpack.c.l.b16 %v1108
    %v4521 = vunpack.c.l.b16 %v1109
    %v4522 = vunpack.c.l.b16 %v1110
    %v4523 = vunpack.c.l.b16 %v1111
    %v4524 = vunpack.c.l.b16 %v1112
    %v4525 = vunpack.c.l.b16 %v1113
    %v4526 = vunpack.c.l.b16 %v1114
    %v4527 = vunpack.c.l.b16 %v1115
    %v4528 = vunpack.c.l.b16 %v1116
    %v4529 = vunpack.c.l.b16 %v1117
    %v4530 = vunpack.c.l.b16 %v1118
    %v4531 = vunpack.c.l.b16 %v1119
    %v4532 = vunpack.c.l.b16 %v1120
    %v4533 = vunpack.c.l.b16 %v1121
    %v4534 = vunpack.c.l.b16 %v1122
    %v4535 = vunpack.c.l.b16 %v1123
    %v4536 = vunpack.c.l.b16 %v1124
    %v4537 = vunpack.c.l.b16 %v1125
    %v4538 = vunpack.c.l.b16 %v1126
    %v4539 = vunpack.c.l.b16 %v1127
    %v4540 = vunpack.c.l.b16 %v1128
    %v4541 = vunpack.c.l.b16 %v1129
    %v4542 = vunpack.c.l.b16 %v1130
    %v4543 = vunpack.c.l.b16 %v1131
    %v4544 = vunpack.c.l.b16 %v1132
    %v4545 = vunpack.c.l.b16 %v1133
    %v4546 = vunpack.c.l.b16 %v1134
    %v4547 = vunpack.c.l.b16 %v1135
    %v4548 = vunpack.c.l.b16 %v1136
    %v4549 = vunpack.c.l.b16 %v1137
    %v4550 = vunpack.c.l.b16 %v1138
    %v4551 = vunpack.c.l.b16 %v1139
    %v4552 = vunpack.c.l.b16 %v1140
    %v4553 = vunpack.c.l.b16 %v1141
    %v4554 = vunpack.c.l.b16 %v1142
    %v4555 = vunpack.c.l.b16 %v1143
    %v4556 = vunpack.c.l.b16 %v1144
    %v4557 = vunpack.c.l.b16 %v1145
    %v4558 = vunpack.c.l.b16 %v1146
    %v4559 = vunpack.c.l.b16 %v1147
    %v4560 = vunpack.c.l.b16 %v1148
    %v4561 = vunpack.c.l.b16 %v1149
    %v4562 = vunpack.c.l.b16 %v1150
    %v4563 = vunpack.c.l.b16 %v1151
    %v4564 = vunpack.c.l.b16 %v1152
    %v4565 = vunpack.c.l.b16 %v1153
    %v4566 = vunpack.c.l.b16 %v1154
    %v4567 = vunpack.c.l.b16 %v1155
    %v4568 = vunpack.c.l.b16 %v1156
    %v4569 = vunpack.c.l.b16 %v1157
    %v4570 = vunpack.c.l.b16 %v1158
    %v4571 = vunpack.c.l.b16 %v1159
    %v4572 = vunpack.c.l.b16 %v1160
    %v4573 = vunpack.c.l.b16 %v1161
    %v4574 = vunpack.c.l.b16 %v1162
    %v4575 = vunpack.c.l.b16 %v1163
    %v4576 = vunpack.c.l.b16 %v1164
    %v4577 = vunpack.c.l.b16 %v1165
    %v4578 = vunpack.c.l.b16 %v1166
    %v4579 = vunpack.c.l.b16 %v1167
    %v4580 = vunpack.c.l.b16 %v1168
    %v4581 = vunpack.c.l.b16 %v1169
    %v4582 = vunpack.c.l.b16 %v1170
    %v4583 = vunpack.c.l.b16 %v1171
    %v4584 = vunpack.c.l.b16 %v1172
    %v4585 = vunpack.c.l.b16 %v1173
    %v4586 = vunpack.c.l.b16 %v1174
    %v4587 = vunpack.c.l.b16 %v1175
    %v4588 = vunpack.c.l.b16 %v1176
    %v4589 = vunpack.c.l.b16 %v1177
    %v4590 = vunpack.c.l.b16 %v1178
    %v4591 = vunpack.c.l.b16 %v1179
    %v4592 = vunpack.c.l.b16 %v1180
    %v4593 = vunpack.c.l.b16 %v1181
    %v4594 = vunpack.c.l.b16 %v1182
    %v4595 = vunpack.c.l.b16 %v1183
    %v4596 = vunpack.c.l.b16 %v1184
    %v4597 = vunpack.c.l.b16 %v1185
    %v4598 = vunpack.c.l.b16 %v1186
    %v4599 = vunpack.c.l.b16 %v1187
    %v4600 = vunpack.c.l.b16 %v1188
    %v4601 = vunpack.c.l.b16 %v1189
    %v4602 = vunpack.c.l.b16 %v1190
    %v4603 = vunpack.c.l.b16 %v1191
    %v4604 = vunpack.c.l.b16 %v1192
    %v4605 = vunpack.c.l.b16 %v1193
    %v4606 = vunpack.c.l.b16 %v1194
    %v4607 = vunpack.c.l.b16 %v1195
    %v4608 = vunpack.c.l.b16 %v1196
    %v4609 = vunpack.c.l.b16 %v1197
    %v4610 = vunpack.c.l.b16 %v1198
    %v4611 = vunpack.c.l.b16 %v1199
    %v4612 = vunpack.c.l.b16 %v1200
    %v4613 = vunpack.c.l.b16 %v1201
    %v4614 = vunpack.c.l.b16 %v1202
    %v4615 = vunpack.c.l.b16 %v1203
    %v4616 = vunpack.c.l.b16 %v1204
    %v4617 = vunpack.c.l.b16 %v1205
    %v4618 = vunpack.c.l.b16 %v1206
    %v4619 = vunpack.c.l.b16 %v1207
    %v4620 = vunpack.c.l.b16 %v1208
    %v4621 = vunpack.c.l.b16 %v1209
    %v4622 = vunpack.c.l.b16 %v1210
    %v4623 = vunpack.c.l.b16 %v1211
    %v4624 = vunpack.c.l.b16 %v1212
    %v4625 = vunpack.c.l.b16 %v1213
    %v4626 = vunpack.c.l.b16 %v1214
    %v4627 = vunpack.c.l.b16 %v1215
    %v4628 = vunpack.c.l.b16 %v1216
    %v4629 = vunpack.c.l.b16 %v1217
    %v4630 = vunpack.c.l.b16 %v1218
    %v4631 = vunpack.c.l.b16 %v1219
    %v4632 = vunpack.c.l.b16 %v1220
    %v4633 = vunpack.c.l.b16 %v1221
    %v4634 = vunpack.c.l.b16 %v1222
    %v4635 = vunpack.c.l.b16 %v1223
    %v4636 = vunpack.c.l.b16 %v1224
    %v4637 = vunpack.c.l.b16 %v1225
    %v4638 = vunpack.c.l.b16 %v1226
    %v4639 = vunpack.c.l.b16 %v1227
    %v4640 = vunpack.c.l.b16 %v1228
    %v4641 = vunpack.c.l.b16 %v1229
    %v4642 = vunpack.c.l.b16 %v1230
    %v4643 = vunpack.c.l.b16 %v1231
    %v4644 = vunpack.c.l.b16 %v1232
    %v4645 = vunpack.c.l.b16 %v1233
    %v4646 = vunpack.c.l.b16 %v1234
    %v4647 = vunpack.c.l.b16 %v1235
    %v4648 = vunpack.c.l.b16 %v1236
    %v4649 = vunpack.c.l.b16 %v1237
    %v4650 = vunpack.c.l.b16 %v1238
    %v4651 = vunpack.c.l.b16 %v1239
    %v4652 = vunpack.c.l.b16 %v1240
    %v4653 = vunpack.c.l.b16 %v1241
    %v4654 = vunpack.c.l.b16 %v1242
    %v4655 = vunpack.c.l.b16 %v1243
    %v4656 = vunpack.c.l.b16 %v1244
    %v4657 = vunpack.c.l.b16 %v1245
    %v4658 = vunpack.c.l.b16 %v1246
    %v4659 = vunpack.c.l.b16 %v1247
    %v4660 = vunpack.c.l.b16 %v1248
    %v4661 = vunpack.c.l.b16 %v1249
    %v4662 = vunpack.c.l.b16 %v1250
    %v4663 = vunpack.c.l.b16 %v1251
    %v4664 = vunpack.c.l.b16 %v1252
    %v4665 = vunpack.c.l.b16 %v1253
    %v4666 = vunpack.c.l.b16 %v1254
    %v4667 = vunpack.c.l.b16 %v1255
    %v4668 = vunpack.c.l.b16 %v1256
    %v4669 = vunpack.c.l.b16 %v1257
    %v4670 = vunpack.c.l.b16 %v1258
    %v4671 = vunpack.c.l.b16 %v1259
    %v4672 = vunpack.c.l.b16 %v1260
    %v4673 = vunpack.c.l.b16 %v1261
    %v4674 = vunpack.c.l.b16 %v1262
    %v4675 = vunpack.c.l.b16 %v1263
    %v4676 = vunpack.c.l.b16 %v1264
    %v4677 = vunpack.c.l.b16 %v1265
    %v4678 = vunpack.c.l.b16 %v1266
    %v4679 = vunpack.c.l.b16 %v1267
    %v4680 = vunpack.c.l.b16 %v1268
    %v4681 = vunpack.c.l.b16 %v1269
    %v4682 = vunpack.c.l.b16 %v1270
    %v4683 = vunpack.c.l.b16 %v1271
    %v4684 = vunpack.c.l.b16 %v1272
    %v4685 = vunpack.c.l.b16 %v1273
    %v4686 = vunpack.c.l.b16 %v1274
    %v4687 = vunpack.c.l.b16 %v1275
    %v4688 = vunpack.c.l.b16 %v1276
    %v4689 = vunpack.c.l.b16 %v1277
    %v4690 = vunpack.c.l.b16 %v1278
    %v4691 = vunpack.c.l.b16 %v1279
    %v4692 = vunpack.c.l.b16 %v1280
    %v4693 = vunpack.c.l.b16 %v1281
    %v4694 = vunpack.c.l.b16 %v1282
    %v4695 = vunpack.c.l.b16 %v1283
    %v4696 = vunpack.c.l.b16 %v1284
    %v4697 = vunpack.c.l.b16 %v1285
    %v4698 = vunpack.c.l.b16 %v1286
    %v4699 = vunpack.c.l.b16 %v1287
    %v4700 = vunpack.c.l.b16 %v1288
    %v4701 = vunpack.c.l.b16 %v1289
    %v4702 = vunpack.c.l.b16 %v1290
    %v4703 = vunpack.c.l.b16 %v1291
    %v4704 = vunpack.c.l.b16 %v1292
    %v4705 = vunpack.c.l.b16 %v1293
    %v4706 = vunpack.c.l.b16 %v1294
    %v4707 = vunpack.c.l.b16 %v1295
    %v4708 = vunpack.c.l.b16 %v1296
    %v4709 = vunpack.c.l.b16 %v1297
    %v4710 = vunpack.c.l.b16 %v1298
    %v4711 = vunpack.c.l.b16 %v1299
    %v4712 = vunpack.c.l.b16 %v1300
    %v4713 = vunpack.c.l.b16 %v1301
    %v4714 = vunpack.c.l.b16 %v1302
    %v4715 = vunpack.c.l.b16 %v1303
    %v4716 = vunpack.c.l.b16 %v1304
    %v4717 = vunpack.c.l.b16 %v1305
    %v4718 = vunpack.c.l.b16 %v1306
    %v4719 = vunpack.c.l.b16 %v1307
    %v4720 = vunpack.c.l.b16 %v1308
    %v4721 = vunpack.c.l.b16 %v1309
    %v4722 = vunpack.c.l.b16 %v1310
    %v4723 = vunpack.c.l.b16 %v1311
    %v4724 = vunpack.c.l.b16 %v1312
    %v4725 = vunpack.c.l.b16 %v1313
    %v4726 = vunpack.c.l.b16 %v1314
    %v4727 = vunpack.c.l.b16 %v1315
    %v4728 = vunpack.c.l.b16 %v1316
    %v4729 = vunpack.c.l.b16 %v1317
    %v4730 = vunpack.c.l.b16 %v1318
    %v4731 = vunpack.c.l.b16 %v1319
    %v4732 = vunpack.c.l.b16 %v1320
    %v4733 = vunpack.c.l.b16 %v1321
    %v4734 = vunpack.c.l.b16 %v1322
    %v4735 = vunpack.c.l.b16 %v1323
    %v4736 = vunpack.c.l.b16 %v1324
    %v4737 = vunpack.c.l.b16 %v1325
    %v4738 = vunpack.c.l.b16 %v1326
    %v4739 = vunpack.c.l.b16 %v1327
    %v4740 = vunpack.c.l.b16 %v1328
    %v4741 = vunpack.c.l.b16 %v1329
    %v4742 = vunpack.c.l.b16 %v1330
    %v4743 = vunpack.c.l.b16 %v1331
    %v4744 = vunpack.c.l.b16 %v1332
    %v4745 = vunpack.c.l.b16 %v1333
    %v4746 = vunpack.c.l.b16 %v1334
    %v4747 = vunpack.c.l.b16 %v1335
    %v4748 = vunpack.c.l.b16 %v1336
    %v4749 = vunpack.c.l.b16 %v1337
    %v4750 = vunpack.c.l.b16 %v1338
    %v4751 = vunpack.c.l.b16 %v1339
    %v4752 = vunpack.c.l.b16 %v1340
    %v4753 = vunpack.c.l.b16 %v1341
    %v4754 = vunpack.c.l.b16 %v1342
    %v4755 = vunpack.c.l.b16 %v1343
    %v4756 = vunpack.c.l.b16 %v1344
    %v4757 = vunpack.c.l.b16 %v1345
    %v4758 = vunpack.c.l.b16 %v1346
    %v4759 = vunpack.c.l.b16 %v1347
    %v4760 = vunpack.c.l.b16 %v1348
    %v4761 = vunpack.c.l.b16 %v1349
    %v4762 = vunpack.c.l.b16 %v1350
    %v4763 = vunpack.c.l.b16 %v1351
    %v4764 = vunpack.c.l.b16 %v1352
    %v4765 = vunpack.c.l.b16 %v1353
    %v4766 = vunpack.c.l.b16 %v1354
    %v4767 = vunpack.c.l.b16 %v1355
    %v4768 = vunpack.c.l.b16 %v1356
    %v4769 = vunpack.c.l.b16 %v1357
    %v4770 = vunpack.c.l.b16 %v1358
    %v4771 = vunpack.c.l.b16 %v1359
    %v4772 = vunpack.c.l.b16 %v1360
    %v4773 = vunpack.c.l.b16 %v1361
    %v4774 = vunpack.c.l.b16 %v1362
    %v4775 = vunpack.c.l.b16 %v1363
    %v4776 = vunpack.c.l.b16 %v1364
    %v4777 = vunpack.c.l.b16 %v1365
    %v4778 = vunpack.c.l.b16 %v1366
    %v4779 = vunpack.c.l.b16 %v1367
    %v4780 = vunpack.c.l.b16 %v1368
    %v4781 = vunpack.c.l.b16 %v1369
    %v4782 = vunpack.c.l.b16 %v1370
    %v4783 = vunpack.c.l.b16 %v1371
    %v4784 = vunpack.c.l.b16 %v1372
    %v4785 = vunpack.c.l.b16 %v1373
    %v4786 = vunpack.c.l.b16 %v1374
    %v4787 = vunpack.c.l.b16 %v1375
    %v4788 = vunpack.c.l.b16 %v1376
    %v4789 = vunpack.c.l.b16 %v1377
    %v4790 = vunpack.c.l.b16 %v1378
    %v4791 = vunpack.c.l.b16 %v1379
    %v4792 = vunpack.c.l.b16 %v1380
    %v4793 = vunpack.c.l.b16 %v1381
    %v4794 = vunpack.c.l.b16 %v1382
    %v4795 = vunpack.c.l.b16 %v1383
    %v4796 = vunpack.c.l.b16 %v1384
    %v4797 = vunpack.c.l.b16 %v1385
    %v4798 = vunpack.c.l.b16 %v1386
    %v4799 = vunpack.c.l.b16 %v1387
    %v4800 = vunpack.c.l.b16 %v1388
    %v4801 = vunpack.c.l.b16 %v1389
    %v4802 = vunpack.c.l.b16 %v1390
    %v4803 = vunpack.c.l.b16 %v1391
    %v4804 = vunpack.c.l.b16 %v1392
    %v4805 = vunpack.c.l.b16 %v1393
    %v4806 = vunpack.c.l.b16 %v1394
    %v4807 = vunpack.c.l.b16 %v1395
    %v4808 = vunpack.c.l.b16 %v1396
    %v4809 = vunpack.c.l.b16 %v1397
    %v4810 = vunpack.c.l.b16 %v1398
    %v4811 = vunpack.c.l.b16 %v1399
    %v4812 = vunpack.c.l.b16 %v1400
    %v4813 = vunpack.c.l.b16 %v1401
    %v4814 = vunpack.c.l.b16 %v1402
    %v4815 = vunpack.c.l.b16 %v1403
    %v4816 = vunpack.c.l.b16 %v1404
    %v4817 = vunpack.c.l.b16 %v1405
    %v4818 = vunpack.c.l.b16 %v1406
    %v4819 = vunpack.c.l.b16 %v1407
    %v4820 = vunpack.c.l.b16 %v1408
    %v4821 = vunpack.c.l.b16 %v1409
    %v4822 = vunpack.c.l.b16 %v1410
    %v4823 = vunpack.c.l.b16 %v1411
    %v4824 = vunpack.c.l.b16 %v1412
    %v4825 = vunpack.c.l.b16 %v1413
    %v4826 = vunpack.c.l.b16 %v1414
    %v4827 = vunpack.c.l.b16 %v1415
    %v4828 = vunpack.c.l.b16 %v1416
    %v4829 = vunpack.c.l.b16 %v1417
    %v4830 = vunpack.c.l.b16 %v1418
    %v4831 = vunpack.c.l.b16 %v1419
    %v4832 = vunpack.c.l.b16 %v1420
    %v4833 = vunpack.c.l.b16 %v1421
    %v4834 = vunpack.c.l.b16 %v1422
    %v4835 = vunpack.c.l.b16 %v1423
    %v4836 = vunpack.c.l.b16 %v1424
    %v4837 = vunpack.c.l.b16 %v1425
    %v4838 = vunpack.c.l.b16 %v1426
    %v4839 = vunpack.c.l.b16 %v1427
    %v4840 = vunpack.c.l.b16 %v1428
    %v4841 = vunpack.c.l.b16 %v1429
    %v4842 = vunpack.c.l.b16 %v1430
    %v4843 = vunpack.c.l.b16 %v1431
    %v4844 = vunpack.c.l.b16 %v1432
    %v4845 = vunpack.c.l.b16 %v1433
    %v4846 = vunpack.c.l.b16 %v1434
    %v4847 = vunpack.c.l.b16 %v1435
    %v4848 = vunpack.c.l.b16 %v1436
    %v4849 = vunpack.c.l.b16 %v1437
    %v4850 = vunpack.c.l.b16 %v1438
    %v4851 = vunpack.c.l.b16 %v1439
    %v4852 = vunpack.c.l.b16 %v1440
    %v4853 = vunpack.c.l.b16 %v1441
    %v4854 = vunpack.c.l.b16 %v1442
    %v4855 = vunpack.c.l.b16 %v1443
    %v4856 = vunpack.c.l.b16 %v1444
    %v4857 = vunpack.c.l.b16 %v1445
    %v4858 = vunpack.c.l.b16 %v1446
    %v4859 = vunpack.c.l.b16 %v1447
    %v4860 = vunpack.c.l.b16 %v1448
    %v4861 = vunpack.c.l.b16 %v1449
    %v4862 = vunpack.c.l.b16 %v1450
    %v4863 = vunpack.c.l.b16 %v1451
    %v4864 = vunpack.c.l.b16 %v1452
    %v4865 = vunpack.c.l.b16 %v1453
    %v4866 = vunpack.c.l.b16 %v1454
    %v4867 = vunpack.c.l.b16 %v1455
    %v4868 = vunpack.c.l.b16 %v1456
    %v4869 = vunpack.c.l.b16 %v1457
    %v4870 = vunpack.c.l.b16 %v1458
    %v4871 = vunpack.c.l.b16 %v1459
    %v4872 = vunpack.c.l.b16 %v1460
    %v4873 = vunpack.c.l.b16 %v1461
    %v4874 = vunpack.c.l.b16 %v1462
    %v4875 = vunpack.c.l.b16 %v1463
    %v4876 = vunpack.c.l.b16 %v1464
    %v4877 = vunpack.c.l.b16 %v1465
    %v4878 = vunpack.c.l.b16 %v1466
    %v4879 = vunpack.c.l.b16 %v1467
    %v4880 = vunpack.c.l.b16 %v1468
    %v4881 = vunpack.c.l.b16 %v1469
    %v4882 = vunpack.c.l.b16 %v1470
    %v4883 = vunpack.c.l.b16 %v1471
    %v4884 = vunpack.c.l.b16 %v1472
    %v4885 = vunpack.c.l.b16 %v1473
    %v4886 = vunpack.c.l.b16 %v1474
    %v4887 = vunpack.c.l.b16 %v1475
    %v4888 = vunpack.c.l.b16 %v1476
    %v4889 = vunpack.c.l.b16 %v1477
    %v4890 = vunpack.c.l.b16 %v1478
    %v4891 = vunpack.c.l.b16 %v1479
    %v4892 = vunpack.c.l.b16 %v1480
    %v4893 = vunpack.c.l.b16 %v1481
    %v4894 = vunpack.c.l.b16 %v1482
    %v4895 = vunpack.c.l.b16 %v1483
    %v4896 = vunpack.c.l.b16 %v1484
    %v4897 = vunpack.c.l.b16 %v1485
    %v4898 = vunpack.c.l.b16 %v1486
    %v4899 = vunpack.c.l.b16 %v1487
    %v4900 = vunpack.c.l.b16 %v1488
    %v4901 = vunpack.c.l.b16 %v1489
    %v4902 = vunpack.c.l.b16 %v1490
    %v4903 = vunpack.c.l.b16 %v1491
    %v4904 = vunpack.c.l.b16 %v1492
    %v4905 = vunpack.c.l.b16 %v1493
    %v4906 = vunpack.c.l.b16 %v1494
    %v4907 = vunpack.c.l.b16 %v1495
    %v4908 = vunpack.c.l.b16 %v1496
    %v4909 = vunpack.c.l.b16 %v1497
    %v4910 = vunpack.c.l.b16 %v1498
    %v4911 = vunpack.c.l.b16 %v1499
    %v4912 = vunpack.c.l.b16 %v1500
    %v4913 = vunpack.c.l.b16 %v1501
    %v4914 = vunpack.c.l.b16 %v1502
    %v4915 = vunpack.c.l.b16 %v1503
    %v4916 = vunpack.c.l.b16 %v1504
    %v4917 = vunpack.c.l.b16 %v1505
    %v4918 = vunpack.c.l.b16 %v1506
    %v4919 = vunpack.c.l.b16 %v1507
    %v4920 = vunpack.c.l.b16 %v1508
    %v4921 = vunpack.c.l.b16 %v1509
    %v4922 = vunpack.c.l.b16 %v1510
    %v4923 = vunpack.c.l.b16 %v1511
    %v4924 = vunpack.c.l.b16 %v1512
    %v4925 = vunpack.c.l.b16 %v1513
    %v4926 = vunpack.c.l.b16 %v1514
    %v4927 = vunpack.c.l.b16 %v1515
    %v4928 = vunpack.c.l.b16 %v1516
    %v4929 = vunpack.c.l.b16 %v1517
    %v4930 = vunpack.c.l.b16 %v1518
    %v4931 = vunpack.c.l.b16 %v1519
    %v4932 = vunpack.c.l.b16 %v1520
    %v4933 = vunpack.c.l.b16 %v1521
    %v4934 = vunpack.c.l.b16 %v1522
    %v4935 = vunpack.c.l.b16 %v1523
    %v4936 = vunpack.c.l.b16 %v1524
    %v4937 = vunpack.c.l.b16 %v1525
    %v4938 = vunpack.c.l.b16 %v1526
    %v4939 = vunpack.c.l.b16 %v1527
    %v4940 = vunpack.c.l.b16 %v1528
    %v4941 = vunpack.c.l.b16 %v1529
    %v4942 = vunpack.c.l.b16 %v1530
    %v4943 = vunpack.c.l.b16 %v1531
    %v4944 = vunpack.c.l.b16 %v1532
    %v4945 = vunpack.c.l.b16 %v1533
    %v4946 = vunpack.c.l.b16 %v1534
    %v4947 = vunpack.c.l.b16 %v1535
    %v4948 = vunpack.c.l.b16 %v1536
    %v4949 = vunpack.c.l.b16 %v1537
    %v4950 = vunpack.c.l.b16 %v1538
    %v4951 = vunpack.c.l.b16 %v1539
    %v4952 = vunpack.c.l.b16 %v1540
    %v4953 = vunpack.c.l.b16 %v1541
    %v4954 = vunpack.c.l.b16 %v1542
    %v4955 = vunpack.c.l.b16 %v1543
    %v4956 = vunpack.c.l.b16 %v1544
    %v4957 = vunpack.c.l.b16 %v1545
    %v4958 = vunpack.c.l.b16 %v1546
    %v4959 = vunpack.c.l.b16 %v1547
    %v4960 = vunpack.c.l.b16 %v1548
    %v4961 = vunpack.c.l.b16 %v1549
    %v4962 = vunpack.c.l.b16 %v1550
    %v4963 = vunpack.c.l.b16 %v1551
    %v4964 = vunpack.c.l.b16 %v1552
    %v4965 = vunpack.c.l.b16 %v1553
    %v4966 = vunpack.c.l.b16 %v1554
    %v4967 = vunpack.c.l.b16 %v1555
    %v4968 = vunpack.c.l.b16 %v1556
    %v4969 = vunpack.c.l.b16 %v1557
    %v4970 = vunpack.c.l.b16 %v1558
    %v4971 = vunpack.c.l.b16 %v1559
    %v4972 = vunpack.c.l.b16 %v1560
    %v4973 = vunpack.c.l.b16 %v1561
    %v4974 = vunpack.c.l.b16 %v1562
    %v4975 = vunpack.c.l.b16 %v1563
    %v4976 = vunpack.c.l.b16 %v1564
    %v4977 = vunpack.c.l.b16 %v1565
    %v4978 = vunpack.c.l.b16 %v1566
    %v4979 = vunpack.c.l.b16 %v1567
    %v4980 = vunpack.c.l.b16 %v1568
    %v4981 = vunpack.c.l.b16 %v1569
    %v4982 = vunpack.c.l.b16 %v1570
    %v4983 = vunpack.c.l.b16 %v1571
    %v4984 = vunpack.c.l.b16 %v1572
    %v4985 = vunpack.c.l.b16 %v1573
    %v4986 = vunpack.c.l.b16 %v1574
    %v4987 = vunpack.c.l.b16 %v1575
    %v4988 = vunpack.c.l.b16 %v1576
    %v4989 = vunpack.c.l.b16 %v1577
    %v4990 = vunpack.c.l.b16 %v1578
    %v4991 = vunpack.c.l.b16 %v1579
    %v4992 = vunpack.c.l.b16 %v1580
    %v4993 = vunpack.c.l.b16 %v1581
    %v4994 = vunpack.c.l.b16 %v1582
    %v4995 = vunpack.c.l.b16 %v1583
    %v4996 = vunpack.c.l.b16 %v1584
    %v4997 = vunpack.c.l.b16 %v1585
    %v4998 = vunpack.c.l.b16 %v1586
    %v4999 = vunpack.c.l.b16 %v1587
    %v5000 = vunpack.c.l.b16 %v1588
    %v5001 = vunpack.c.l.b16 %v1589
    %v5002 = vunpack.c.l.b16 %v1590
    %v5003 = vunpack.c.l.b16 %v1591
    %v5004 = vunpack.c.l.b16 %v1592
    %v5005 = vunpack.c.l.b16 %v1593
    %v5006 = vunpack.c.l.b16 %v1594
    %v5007 = vunpack.c.l.b16 %v1595
    %v5008 = vunpack.c.l.b16 %v1596
    %v5009 = vunpack.c.l.b16 %v1597
    %v5010 = vunpack.c.l.b16 %v1598
    %v5011 = vunpack.c.l.b16 %v1599
    %v5012 = vunpack.c.l.b16 %v1600
    %v5013 = vunpack.c.l.b16 %v1601
    %v5014 = vunpack.c.l.b16 %v1602
    %v5015 = vunpack.c.l.b16 %v1603
    %v5016 = vunpack.c.l.b16 %v1604
    %v5017 = vunpack.c.l.b16 %v1605
    %v5018 = vunpack.c.l.b16 %v1606
    %v5019 = vunpack.c.l.b16 %v1607
    %v5020 = vunpack.c.l.b16 %v1608
    %v5021 = vunpack.c.l.b16 %v1609
    %v5022 = vunpack.c.l.b16 %v1610
    %v5023 = vunpack.c.l.b16 %v1611
    %v5024 = vunpack.c.l.b16 %v1612
    %v5025 = vunpack.c.l.b16 %v1613
    %v5026 = vunpack.c.l.b16 %v1614
    %v5027 = vunpack.c.l.b16 %v1615
    %v5028 = vunpack.c.l.b16 %v1616
    %v5029 = vunpack.c.l.b16 %v1617
    %v5030 = vunpack.c.l.b16 %v1618
    %v5031 = vunpack.c.l.b16 %v1619
    %v5032 = vunpack.c.l.b16 %v1620
    %v5033 = vunpack.c.l.b16 %v1621
    %v5034 = vunpack.c.l.b16 %v1622
    %v5035 = vunpack.c.l.b16 %v1623
    %v5036 = vunpack.c.l.b16 %v1624
    %v5037 = vunpack.c.l.b16 %v1625
    %v5038 = vunpack.c.l.b16 %v1626
    %v5039 = vunpack.c.l.b16 %v1627
    %v5040 = vunpack.c.l.b16 %v1628
    %v5041 = vunpack.c.l.b16 %v1629
    %v5042 = vunpack.c.l.b16 %v1630
    %v5043 = vunpack.c.l.b16 %v1631
    %v5044 = vunpack.c.l.b16 %v1632
    %v5045 = vunpack.c.l.b16 %v1633
    %v5046 = vunpack.c.l.b16 %v1634
    %v5047 = vunpack.c.l.b16 %v1635
    %v5048 = vunpack.c.l.b16 %v1636
    %v5049 = vunpack.c.l.b16 %v1637
    %v5050 = vunpack.c.l.b16 %v1638
    %v5051 = vunpack.c.l.b16 %v1639
    %v5052 = vunpack.c.l.b16 %v1640
    %v5053 = vunpack.c.l.b16 %v1641
    %v5054 = vunpack.c.l.b16 %v1642
    %v5055 = vunpack.c.l.b16 %v1643
    %v5056 = vunpack.c.l.b16 %v1644
    %v5057 = vunpack.c.l.b16 %v1645
    %v5058 = vunpack.c.l.b16 %v1646
    %v5059 = vunpack.c.l.b16 %v1647
    %v5060 = vunpack.c.l.b16 %v1648
    %v5061 = vunpack.c.l.b16 %v1649
    %v5062 = vunpack.c.l.b16 %v1650
    %v5063 = vunpack.c.l.b16 %v1651
    %v5064 = vunpack.c.l.b16 %v1652
    %v5065 = vunpack.c.l.b16 %v1653
    %v5066 = vunpack.c.l.b16 %v1654
    %v5067 = vunpack.c.l.b16 %v1655
    %v5068 = vunpack.c.l.b16 %v1656
    %v5069 = vunpack.c.l.b16 %v1657
    %v5070 = vunpack.c.l.b16 %v1658
    %v5071 = vunpack.c.l.b16 %v1659
    %v5072 = vunpack.c.l.b16 %v1660
    %v5073 = vunpack.c.l.b16 %v1661
    %v5074 = vunpack.c.l.b16 %v1662
    %v5075 = vunpack.c.l.b16 %v1663
    %v5076 = vunpack.c.l.b16 %v1664
    %v5077 = vunpack.c.l.b16 %v1665
    %v5078 = vunpack.c.l.b16 %v1666
    %v5079 = vunpack.c.l.b16 %v1667
    %v5080 = vunpack.c.l.b16 %v1668
    %v5081 = vunpack.c.l.b16 %v1669
    %v5082 = vunpack.c.l.b16 %v1670
    %v5083 = vunpack.c.l.b16 %v1671
    %v5084 = vunpack.c.l.b16 %v1672
    %v5085 = vunpack.c.l.b16 %v1673
    %v5086 = vunpack.c.l.b16 %v1674
    %v5087 = vunpack.c.l.b16 %v1675
    %v5088 = vunpack.c.l.b16 %v1676
    %v5089 = vpack.c.b16 %v3554, %v3553
    %v5090 = vpack.c.b16 %v3556, %v3555
    %v5091 = vpack.c.b16 %v3558, %v3557
    %v5092 = vpack.c.b16 %v3560, %v3559
    %v5093 = vpack.c.b16 %v3562, %v3561
    %v5094 = vpack.c.b16 %v3564, %v3563
    %v5095 = vpack.c.b16 %v3566, %v3565
    %v5096 = vpack.c.b16 %v3568, %v3567
    %v5097 = vpack.c.b16 %v3570, %v3569
    %v5098 = vpack.c.b16 %v3572, %v3571
    %v5099 = vpack.c.b16 %v3574, %v3573
    %v5100 = vpack.c.b16 %v3576, %v3575
    %v5101 = vpack.c.b16 %v3578, %v3577
    %v5102 = vpack.c.b16 %v3580, %v3579
    %v5103 = vpack.c.b16 %v3582, %v3581
    %v5104 = vpack.c.b16 %v3584, %v3583
    %v5105 = vpack.c.b16 %v3586, %v3585
    %v5106 = vpack.c.b16 %v3588, %v3587
    %v5107 = vpack.c.b16 %v3590, %v3589
    %v5108 = vpack.c.b16 %v3592, %v3591
    %v5109 = vpack.c.b16 %v3594, %v3593
    %v5110 = vpack.c.b16 %v3596, %v3595
    %v5111 = vpack.c.b16 %v3598, %v3597
    %v5112 = vpack.c.b16 %v3600, %v3599
    %v5113 = vpack.c.b16 %v3602, %v3601
    %v5114 = vpack.c.b16 %v3604, %v3603
    %v5115 = vpack.c.b16 %v3606, %v3605
    %v5116 = vpack.c.b16 %v3608, %v3607
    %v5117 = vpack.c.b16 %v3610, %v3609
    %v5118 = vpack.c.b16 %v3612, %v3611
    %v5119 = vpack.c.b16 %v3614, %v3613
    %v5120 = vpack.c.b16 %v3616, %v3615
    %v5121 = vpack.c.b16 %v3618, %v3617
    %v5122 = vpack.c.b16 %v3620, %v3619
    %v5123 = vpack.c.b16 %v3622, %v3621
    %v5124 = vpack.c.b16 %v3624, %v3623
    %v5125 = vpack.c.b16 %v3626, %v3625
    %v5126 = vpack.c.b16 %v3628, %v3627
    %v5127 = vpack.c.b16 %v3630, %v3629
    %v5128 = vpack.c.b16 %v3632, %v3631
    %v5129 = vpack.c.b16 %v3634, %v3633
    %v5130 = vpack.c.b16 %v3636, %v3635
    %v5131 = vpack.c.b16 %v3638, %v3637
    %v5132 = vpack.c.b16 %v3640, %v3639
    %v5133 = vpack.c.b16 %v3642, %v3641
    %v5134 = vpack.c.b16 %v3644, %v3643
    %v5135 = vpack.c.b16 %v3646, %v3645
    %v5136 = vpack.c.b16 %v3648, %v3647
    %v5137 = vpack.c.b16 %v3650, %v3649
    %v5138 = vpack.c.b16 %v3652, %v3651
    %v5139 = vpack.c.b16 %v3654, %v3653
    %v5140 = vpack.c.b16 %v3656, %v3655
    %v5141 = vpack.c.b16 %v3658, %v3657
    %v5142 = vpack.c.b16 %v3660, %v3659
    %v5143 = vpack.c.b16 %v3662, %v3661
    %v5144 = vpack.c.b16 %v3664, %v3663
    %v5145 = vpack.c.b16 %v3666, %v3665
    %v5146 = vpack.c.b16 %v3668, %v3667
    %v5147 = vpack.c.b16 %v3670, %v3669
    %v5148 = vpack.c.b16 %v3672, %v3671
    %v5149 = vpack.c.b16 %v3674, %v3673
    %v5150 = vpack.c.b16 %v3676, %v3675
    %v5151 = vpack.c.b16 %v3678, %v3677
    %v5152 = vpack.c.b16 %v3680, %v3679
    %v5153 = vpack.c.b16 %v3682, %v3681
    %v5154 = vpack.c.b16 %v3684, %v3683
    %v5155 = vpack.c.b16 %v3686, %v3685
    %v5156 = vpack.c.b16 %v3688, %v3687
    %v5157 = vpack.c.b16 %v3690, %v3689
    %v5158 = vpack.c.b16 %v3692, %v3691
    %v5159 = vpack.c.b16 %v3694, %v3693
    %v5160 = vpack.c.b16 %v3696, %v3695
    %v5161 = vpack.c.b16 %v3698, %v3697
    %v5162 = vpack.c.b16 %v3700, %v3699
    %v5163 = vpack.c.b16 %v3702, %v3701
    %v5164 = vpack.c.b16 %v3704, %v3703
    %v5165 = vpack.c.b16 %v3706, %v3705
    %v5166 = vpack.c.b16 %v3708, %v3707
    %v5167 = vpack.c.b16 %v3710, %v3709
    %v5168 = vpack.c.b16 %v3712, %v3711
    %v5169 = vpack.c.b16 %v3714, %v3713
    %v5170 = vpack.c.b16 %v3716, %v3715
    %v5171 = vpack.c.b16 %v3718, %v3717
    %v5172 = vpack.c.b16 %v3720, %v3719
    %v5173 = vpack.c.b16 %v3722, %v3721
    %v5174 = vpack.c.b16 %v3724, %v3723
    %v5175 = vpack.c.b16 %v3726, %v3725
    %v5176 = vpack.c.b16 %v3728, %v3727
    %v5177 = vpack.c.b16 %v3730, %v3729
    %v5178 = vpack.c.b16 %v3732, %v3731
    %v5179 = vpack.c.b16 %v3734, %v3733
    %v5180 = vpack.c.b16 %v3736, %v3735
    %v5181 = vpack.c.b16 %v3738, %v3737
    %v5182 = vpack.c.b16 %v3740, %v3739
    %v5183 = vpack.c.b16 %v3742, %v3741
    %v5184 = vpack.c.b16 %v3744, %v3743
    %v5185 = vpack.c.b16 %v3746, %v3745
    %v5186 = vpack.c.b16 %v3748, %v3747
    %v5187 = vpack.c.b16 %v3750, %v3749
    %v5188 = vpack.c.b16 %v3752, %v3751
    %v5189 = vpack.c.b16 %v3754, %v3753
    %v5190 = vpack.c.b16 %v3756, %v3755
    %v5191 = vpack.c.b16 %v3758, %v3757
    %v5192 = vpack.c.b16 %v3760, %v3759
    %v5193 = vpack.c.b16 %v3762, %v3761
    %v5194 = vpack.c.b16 %v3764, %v3763
    %v5195 = vpack.c.b16 %v3766, %v3765
    %v5196 = vpack.c.b16 %v3768, %v3767
    %v5197 = vpack.c.b16 %v3770, %v3769
    %v5198 = vpack.c.b16 %v3772, %v3771
    %v5199 = vpack.c.b16 %v3774, %v3773
    %v5200 = vpack.c.b16 %v3776, %v3775
    %v5201 = vpack.c.b16 %v3778, %v3777
    %v5202 = vpack.c.b16 %v3780, %v3779
    %v5203 = vpack.c.b16 %v3782, %v3781
    %v5204 = vpack.c.b16 %v3784, %v3783
    %v5205 = vpack.c.b16 %v3786, %v3785
    %v5206 = vpack.c.b16 %v3788, %v3787
    %v5207 = vpack.c.b16 %v3790, %v3789
    %v5208 = vpack.c.b16 %v3792, %v3791
    %v5209 = vpack.c.b16 %v3794, %v3793
    %v5210 = vpack.c.b16 %v3796, %v3795
    %v5211 = vpack.c.b16 %v3798, %v3797
    %v5212 = vpack.c.b16 %v3800, %v3799
    %v5213 = vpack.c.b16 %v3802, %v3801
    %v5214 = vpack.c.b16 %v3804, %v3803
    %v5215 = vpack.c.b16 %v3806, %v3805
    %v5216 = vpack.c.b16 %v3808, %v3807
    %v5217 = vpack.c.b16 %v3810, %v3809
    %v5218 = vpack.c.b16 %v3812, %v3811
    %v5219 = vpack.c.b16 %v3814, %v3813
    %v5220 = vpack.c.b16 %v3816, %v3815
    %v5221 = vpack.c.b16 %v3818, %v3817
    %v5222 = vpack.c.b16 %v3820, %v3819
    %v5223 = vpack.c.b16 %v3822, %v3821
    %v5224 = vpack.c.b16 %v3824, %v3823
    %v5225 = vpack.c.b16 %v3826, %v3825
    %v5226 = vpack.c.b16 %v3828, %v3827
    %v5227 = vpack.c.b16 %v3830, %v3829
    %v5228 = vpack.c.b16 %v3832, %v3831
    %v5229 = vpack.c.b16 %v3834, %v3833
    %v5230 = vpack.c.b16 %v3836, %v3835
    %v5231 = vpack.c.b16 %v3838, %v3837
    %v5232 = vpack.c.b16 %v3840, %v3839
    %v5233 = vpack.c.b16 %v3842, %v3841
    %v5234 = vpack.c.b16 %v3844, %v3843
    %v5235 = vpack.c.b16 %v3846, %v3845
    %v5236 = vpack.c.b16 %v3848, %v3847
    %v5237 = vpack.c.b16 %v3850, %v3849
    %v5238 = vpack.c.b16 %v3852, %v3851
    %v5239 = vpack.c.b16 %v3854, %v3853
    %v5240 = vpack.c.b16 %v3856, %v3855
    %v5241 = vpack.c.b16 %v3858, %v3857
    %v5242 = vpack.c.b16 %v3860, %v3859
    %v5243 = vpack.c.b16 %v3862, %v3861
    %v5244 = vpack.c.b16 %v3864, %v3863
    %v5245 = vpack.c.b16 %v3866, %v3865
    %v5246 = vpack.c.b16 %v3868, %v3867
    %v5247 = vpack.c.b16 %v3870, %v3869
    %v5248 = vpack.c.b16 %v3872, %v3871
    %v5249 = vpack.c.b16 %v3874, %v3873
    %v5250 = vpack.c.b16 %v3876, %v3875
    %v5251 = vpack.c.b16 %v3878, %v3877
    %v5252 = vpack.c.b16 %v3880, %v3879
    %v5253 = vpack.c.b16 %v3882, %v3881
    %v5254 = vpack.c.b16 %v3884, %v3883
    %v5255 = vpack.c.b16 %v3886, %v3885
    %v5256 = vpack.c.b16 %v3888, %v3887
    %v5257 = vpack.c.b16 %v3890, %v3889
    %v5258 = vpack.c.b16 %v3892, %v3891
    %v5259 = vpack.c.b16 %v3894, %v3893
    %v5260 = vpack.c.b16 %v3896, %v3895
    %v5261 = vpack.c.b16 %v3898, %v3897
    %v5262 = vpack.c.b16 %v3900, %v3899
    %v5263 = vpack.c.b16 %v3902, %v3901
    %v5264 = vpack.c.b16 %v3904, %v3903
    %v5265 = vpack.c.b16 %v3906, %v3905
    %v5266 = vpack.c.b16 %v3908, %v3907
    %v5267 = vpack.c.b16 %v3910, %v3909
    %v5268 = vpack.c.b16 %v3912, %v3911
    %v5269 = vpack.c.b16 %v3914, %v3913
    %v5270 = vpack.c.b16 %v3916, %v3915
    %v5271 = vpack.c.b16 %v3918, %v3917
    %v5272 = vpack.c.b16 %v3920, %v3919
    %v5273 = vpack.c.b16 %v3922, %v3921
    %v5274 = vpack.c.b16 %v3924, %v3923
    %v5275 = vpack.c.b16 %v3926, %v3925
    %v5276 = vpack.c.b16 %v3928, %v3927
    %v5277 = vpack.c.b16 %v3930, %v3929
    %v5278 = vpack.c.b16 %v3932, %v3931
    %v5279 = vpack.c.b16 %v3934, %v3933
    %v5280 = vpack.c.b16 %v3936, %v3935
    %v5281 = vpack.c.b16 %v3938, %v3937
    %v5282 = vpack.c.b16 %v3940, %v3939
    %v5283 = vpack.c.b16 %v3942, %v3941
    %v5284 = vpack.c.b16 %v3944, %v3943
    %v5285 = vpack.c.b16 %v3946, %v3945
    %v5286 = vpack.c.b16 %v3948, %v3947
    %v5287 = vpack.c.b16 %v3950, %v3949
    %v5288 = vpack.c.b16 %v3952, %v3951
    %v5289 = vpack.c.b16 %v3954, %v3953
    %v5290 = vpack.c.b16 %v3956, %v3955
    %v5291 = vpack.c.b16 %v3958, %v3957
    %v5292 = vpack.c.b16 %v3960, %v3959
    %v5293 = vpack.c.b16 %v3962, %v3961
    %v5294 = vpack.c.b16 %v3964, %v3963
    %v5295 = vpack.c.b16 %v3966, %v3965
    %v5296 = vpack.c.b16 %v3968, %v3967
    %v5297 = vpack.c.b16 %v3970, %v3969
    %v5298 = vpack.c.b16 %v3972, %v3971
    %v5299 = vpack.c.b16 %v3974, %v3973
    %v5300 = vpack.c.b16 %v3976, %v3975
    %v5301 = vpack.c.b16 %v3978, %v3977
    %v5302 = vpack.c.b16 %v3980, %v3979
    %v5303 = vpack.c.b16 %v3982, %v3981
    %v5304 = vpack.c.b16 %v3984, %v3983
    %v5305 = vpack.c.b16 %v3986, %v3985
    %v5306 = vpack.c.b16 %v3988, %v3987
    %v5307 = vpack.c.b16 %v3990, %v3989
    %v5308 = vpack.c.b16 %v3992, %v3991
    %v5309 = vpack.c.b16 %v3994, %v3993
    %v5310 = vpack.c.b16 %v3996, %v3995
    %v5311 = vpack.c.b16 %v3998, %v3997
    %v5312 = vpack.c.b16 %v4000, %v3999
    %v5313 = vpack.c.b16 %v4002, %v4001
    %v5314 = vpack.c.b16 %v4004, %v4003
    %v5315 = vpack.c.b16 %v4006, %v4005
    %v5316 = vpack.c.b16 %v4008, %v4007
    %v5317 = vpack.c.b16 %v4010, %v4009
    %v5318 = vpack.c.b16 %v4012, %v4011
    %v5319 = vpack.c.b16 %v4014, %v4013
    %v5320 = vpack.c.b16 %v4016, %v4015
    %v5321 = vpack.c.b16 %v4018, %v4017
    %v5322 = vpack.c.b16 %v4020, %v4019
    %v5323 = vpack.c.b16 %v4022, %v4021
    %v5324 = vpack.c.b16 %v4024, %v4023
    %v5325 = vpack.c.b16 %v4026, %v4025
    %v5326 = vpack.c.b16 %v4028, %v4027
    %v5327 = vpack.c.b16 %v4030, %v4029
    %v5328 = vpack.c.b16 %v4032, %v4031
    %v5329 = vpack.c.b16 %v4034, %v4033
    %v5330 = vpack.c.b16 %v4036, %v4035
    %v5331 = vpack.c.b16 %v4038, %v4037
    %v5332 = vpack.c.b16 %v4040, %v4039
    %v5333 = vpack.c.b16 %v4042, %v4041
    %v5334 = vpack.c.b16 %v4044, %v4043
    %v5335 = vpack.c.b16 %v4046, %v4045
    %v5336 = vpack.c.b16 %v4048, %v4047
    %v5337 = vpack.c.b16 %v4050, %v4049
    %v5338 = vpack.c.b16 %v4052, %v4051
    %v5339 = vpack.c.b16 %v4054, %v4053
    %v5340 = vpack.c.b16 %v4056, %v4055
    %v5341 = vpack.c.b16 %v4058, %v4057
    %v5342 = vpack.c.b16 %v4060, %v4059
    %v5343 = vpack.c.b16 %v4062, %v4061
    %v5344 = vpack.c.b16 %v4064, %v4063
    %v5345 = vpack.c.b16 %v4066, %v4065
    %v5346 = vpack.c.b16 %v4068, %v4067
    %v5347 = vpack.c.b16 %v4070, %v4069
    %v5348 = vpack.c.b16 %v4072, %v4071
    %v5349 = vpack.c.b16 %v4074, %v4073
    %v5350 = vpack.c.b16 %v4076, %v4075
    %v5351 = vpack.c.b16 %v4078, %v4077
    %v5352 = vpack.c.b16 %v4080, %v4079
    %v5353 = vpack.c.b16 %v4082, %v4081
    %v5354 = vpack.c.b16 %v4084, %v4083
    %v5355 = vpack.c.b16 %v4086, %v4085
    %v5356 = vpack.c.b16 %v4088, %v4087
    %v5357 = vpack.c.b16 %v4090, %v4089
    %v5358 = vpack.c.b16 %v4092, %v4091
    %v5359 = vpack.c.b16 %v4094, %v4093
    %v5360 = vpack.c.b16 %v4096, %v4095
    %v5361 = vpack.c.b16 %v4098, %v4097
    %v5362 = vpack.c.b16 %v4100, %v4099
    %v5363 = vpack.c.b16 %v4102, %v4101
    %v5364 = vpack.c.b16 %v4104, %v4103
    %v5365 = vpack.c.b16 %v4106, %v4105
    %v5366 = vpack.c.b16 %v4108, %v4107
    %v5367 = vpack.c.b16 %v4110, %v4109
    %v5368 = vpack.c.b16 %v4112, %v4111
    %v5369 = vpack.c.b16 %v4114, %v4113
    %v5370 = vpack.c.b16 %v4116, %v4115
    %v5371 = vpack.c.b16 %v4118, %v4117
    %v5372 = vpack.c.b16 %v4120, %v4119
    %v5373 = vpack.c.b16 %v4122, %v4121
    %v5374 = vpack.c.b16 %v4124, %v4123
    %v5375 = vpack.c.b16 %v4126, %v4125
    %v5376 = vpack.c.b16 %v4128, %v4127
    %v5377 = vpack.c.b16 %v4130, %v4129
    %v5378 = vpack.c.b16 %v4132, %v4131
    %v5379 = vpack.c.b16 %v4134, %v4133
    %v5380 = vpack.c.b16 %v4136, %v4135
    %v5381 = vpack.c.b16 %v4138, %v4137
    %v5382 = vpack.c.b16 %v4140, %v4139
    %v5383 = vpack.c.b16 %v4142, %v4141
    %v5384 = vpack.c.b16 %v4144, %v4143
    %v5385 = vpack.c.b16 %v4146, %v4145
    %v5386 = vpack.c.b16 %v4148, %v4147
    %v5387 = vpack.c.b16 %v4150, %v4149
    %v5388 = vpack.c.b16 %v4152, %v4151
    %v5389 = vpack.c.b16 %v4154, %v4153
    %v5390 = vpack.c.b16 %v4156, %v4155
    %v5391 = vpack.c.b16 %v4158, %v4157
    %v5392 = vpack.c.b16 %v4160, %v4159
    %v5393 = vpack.c.b16 %v4162, %v4161
    %v5394 = vpack.c.b16 %v4164, %v4163
    %v5395 = vpack.c.b16 %v4166, %v4165
    %v5396 = vpack.c.b16 %v4168, %v4167
    %v5397 = vpack.c.b16 %v4170, %v4169
    %v5398 = vpack.c.b16 %v4172, %v4171
    %v5399 = vpack.c.b16 %v4174, %v4173
    %v5400 = vpack.c.b16 %v4176, %v4175
    %v5401 = vpack.c.b16 %v4178, %v4177
    %v5402 = vpack.c.b16 %v4180, %v4179
    %v5403 = vpack.c.b16 %v4182, %v4181
    %v5404 = vpack.c.b16 %v4184, %v4183
    %v5405 = vpack.c.b16 %v4186, %v4185
    %v5406 = vpack.c.b16 %v4188, %v4187
    %v5407 = vpack.c.b16 %v4190, %v4189
    %v5408 = vpack.c.b16 %v4192, %v4191
    %v5409 = vpack.c.b16 %v4194, %v4193
    %v5410 = vpack.c.b16 %v4196, %v4195
    %v5411 = vpack.c.b16 %v4198, %v4197
    %v5412 = vpack.c.b16 %v4200, %v4199
    %v5413 = vpack.c.b16 %v4202, %v4201
    %v5414 = vpack.c.b16 %v4204, %v4203
    %v5415 = vpack.c.b16 %v4206, %v4205
    %v5416 = vpack.c.b16 %v4208, %v4207
    %v5417 = vpack.c.b16 %v4210, %v4209
    %v5418 = vpack.c.b16 %v4212, %v4211
    %v5419 = vpack.c.b16 %v4214, %v4213
    %v5420 = vpack.c.b16 %v4216, %v4215
    %v5421 = vpack.c.b16 %v4218, %v4217
    %v5422 = vpack.c.b16 %v4220, %v4219
    %v5423 = vpack.c.b16 %v4222, %v4221
    %v5424 = vpack.c.b16 %v4224, %v4223
    %v5425 = vpack.c.b16 %v4226, %v4225
    %v5426 = vpack.c.b16 %v4228, %v4227
    %v5427 = vpack.c.b16 %v4230, %v4229
    %v5428 = vpack.c.b16 %v4232, %v4231
    %v5429 = vpack.c.b16 %v4234, %v4233
    %v5430 = vpack.c.b16 %v4236, %v4235
    %v5431 = vpack.c.b16 %v4238, %v4237
    %v5432 = vpack.c.b16 %v4240, %v4239
    %v5433 = vpack.c.b16 %v4242, %v4241
    %v5434 = vpack.c.b16 %v4244, %v4243
    %v5435 = vpack.c.b16 %v4246, %v4245
    %v5436 = vpack.c.b16 %v4248, %v4247
    %v5437 = vpack.c.b16 %v4250, %v4249
    %v5438 = vpack.c.b16 %v4252, %v4251
    %v5439 = vpack.c.b16 %v4254, %v4253
    %v5440 = vpack.c.b16 %v4256, %v4255
    %v5441 = vpack.c.b16 %v4258, %v4257
    %v5442 = vpack.c.b16 %v4260, %v4259
    %v5443 = vpack.c.b16 %v4262, %v4261
    %v5444 = vpack.c.b16 %v4264, %v4263
    %v5445 = vpack.c.b16 %v4266, %v4265
    %v5446 = vpack.c.b16 %v4268, %v4267
    %v5447 = vpack.c.b16 %v4270, %v4269
    %v5448 = vpack.c.b16 %v4272, %v4271
    %v5449 = vpack.c.b16 %v4274, %v4273
    %v5450 = vpack.c.b16 %v4276, %v4275
    %v5451 = vpack.c.b16 %v4278, %v4277
    %v5452 = vpack.c.b16 %v4280, %v4279
    %v5453 = vpack.c.b16 %v4282, %v4281
    %v5454 = vpack.c.b16 %v4284, %v4283
    %v5455 = vpack.c.b16 %v4286, %v4285
    %v5456 = vpack.c.b16 %v4288, %v4287
    %v5457 = vpack.c.b16 %v4290, %v4289
    %v5458 = vpack.c.b16 %v4292, %v4291
    %v5459 = vpack.c.b16 %v4294, %v4293
    %v5460 = vpack.c.b16 %v4296, %v4295
    %v5461 = vpack.c.b16 %v4298, %v4297
    %v5462 = vpack.c.b16 %v4300, %v4299
    %v5463 = vpack.c.b16 %v4302, %v4301
    %v5464 = vpack.c.b16 %v4304, %v4303
    %v5465 = vpack.c.b16 %v4306, %v4305
    %v5466 = vpack.c.b16 %v4308, %v4307
    %v5467 = vpack.c.b16 %v4310, %v4309
    %v5468 = vpack.c.b16 %v4312, %v4311
    %v5469 = vpack.c.b16 %v4314, %v4313
    %v5470 = vpack.c.b16 %v4316, %v4315
    %v5471 = vpack.c.b16 %v4318, %v4317
    %v5472 = vpack.c.b16 %v4320, %v4319
    %v5473 = vpack.c.b16 %v4322, %v4321
    %v5474 = vpack.c.b16 %v4324, %v4323
    %v5475 = vpack.c.b16 %v4326, %v4325
    %v5476 = vpack.c.b16 %v4328, %v4327
    %v5477 = vpack.c.b16 %v4330, %v4329
    %v5478 = vpack.c.b16 %v4332, %v4331
    %v5479 = vpack.c.b16 %v4334, %v4333
    %v5480 = vpack.c.b16 %v4336, %v4335
    %v5481 = vpack.c.b16 %v4338, %v4337
    %v5482 = vpack.c.b16 %v4340, %v4339
    %v5483 = vpack.c.b16 %v4342, %v4341
    %v5484 = vpack.c.b16 %v4344, %v4343
    %v5485 = vpack.c.b16 %v4346, %v4345
    %v5486 = vpack.c.b16 %v4348, %v4347
    %v5487 = vpack.c.b16 %v4350, %v4349
    %v5488 = vpack.c.b16 %v4352, %v4351
    %v5489 = vpack.c.b16 %v4354, %v4353
    %v5490 = vpack.c.b16 %v4356, %v4355
    %v5491 = vpack.c.b16 %v4358, %v4357
    %v5492 = vpack.c.b16 %v4360, %v4359
    %v5493 = vpack.c.b16 %v4362, %v4361
    %v5494 = vpack.c.b16 %v4364, %v4363
    %v5495 = vpack.c.b16 %v4366, %v4365
    %v5496 = vpack.c.b16 %v4368, %v4367
    %v5497 = vpack.c.b16 %v4370, %v4369
    %v5498 = vpack.c.b16 %v4372, %v4371
    %v5499 = vpack.c.b16 %v4374, %v4373
    %v5500 = vpack.c.b16 %v4376, %v4375
    %v5501 = vpack.c.b16 %v4378, %v4377
    %v5502 = vpack.c.b16 %v4380, %v4379
    %v5503 = vpack.c.b16 %v4382, %v4381
    %v5504 = vpack.c.b16 %v4384, %v4383
    %v5505 = vpack.c.b16 %v4386, %v4385
    %v5506 = vpack.c.b16 %v4388, %v4387
    %v5507 = vpack.c.b16 %v4390, %v4389
    %v5508 = vpack.c.b16 %v4392, %v4391
    %v5509 = vpack.c.b16 %v4394, %v4393
    %v5510 = vpack.c.b16 %v4396, %v4395
    %v5511 = vpack.c.b16 %v4398, %v4397
    %v5512 = vpack.c.b16 %v4400, %v4399
    %v5513 = vpack.c.b16 %v4402, %v4401
    %v5514 = vpack.c.b16 %v4404, %v4403
    %v5515 = vpack.c.b16 %v4406, %v4405
    %v5516 = vpack.c.b16 %v4408, %v4407
    %v5517 = vpack.c.b16 %v4410, %v4409
    %v5518 = vpack.c.b16 %v4412, %v4411
    %v5519 = vpack.c.b16 %v4414, %v4413
    %v5520 = vpack.c.b16 %v4416, %v4415
    %v5521 = vpack.c.b16 %v4418, %v4417
    %v5522 = vpack.c.b16 %v4420, %v4419
    %v5523 = vpack.c.b16 %v4422, %v4421
    %v5524 = vpack.c.b16 %v4424, %v4423
    %v5525 = vpack.c.b16 %v4426, %v4425
    %v5526 = vpack.c.b16 %v4428, %v4427
    %v5527 = vpack.c.b16 %v4430, %v4429
    %v5528 = vpack.c.b16 %v4432, %v4431
    %v5529 = vpack.c.b16 %v4434, %v4433
    %v5530 = vpack.c.b16 %v4436, %v4435
    %v5531 = vpack.c.b16 %v4438, %v4437
    %v5532 = vpack.c.b16 %v4440, %v4439
    %v5533 = vpack.c.b16 %v4442, %v4441
    %v5534 = vpack.c.b16 %v4444, %v4443
    %v5535 = vpack.c.b16 %v4446, %v4445
    %v5536 = vpack.c.b16 %v4448, %v4447
    %v5537 = vpack.c.b16 %v4450, %v4449
    %v5538 = vpack.c.b16 %v4452, %v4451
    %v5539 = vpack.c.b16 %v4454, %v4453
    %v5540 = vpack.c.b16 %v4456, %v4455
    %v5541 = vpack.c.b16 %v4458, %v4457
    %v5542 = vpack.c.b16 %v4460, %v4459
    %v5543 = vpack.c.b16 %v4462, %v4461
    %v5544 = vpack.c.b16 %v4464, %v4463
    %v5545 = vpack.c.b16 %v4466, %v4465
    %v5546 = vpack.c.b16 %v4468, %v4467
    %v5547 = vpack.c.b16 %v4470, %v4469
    %v5548 = vpack.c.b16 %v4472, %v4471
    %v5549 = vpack.c.b16 %v4474, %v4473
    %v5550 = vpack.c.b16 %v4476, %v4475
    %v5551 = vpack.c.b16 %v4478, %v4477
    %v5552 = vpack.c.b16 %v4480, %v4479
    %v5553 = vpack.c.b16 %v4482, %v4481
    %v5554 = vpack.c.b16 %v4484, %v4483
    %v5555 = vpack.c.b16 %v4486, %v4485
    %v5556 = vpack.c.b16 %v4488, %v4487
    %v5557 = vpack.c.b16 %v4490, %v4489
    %v5558 = vpack.c.b16 %v4492, %v4491
    %v5559 = vpack.c.b16 %v4494, %v4493
    %v5560 = vpack.c.b16 %v4496, %v4495
    %v5561 = vpack.c.b16 %v4498, %v4497
    %v5562 = vpack.c.b16 %v4500, %v4499
    %v5563 = vpack.c.b16 %v4502, %v4501
    %v5564 = vpack.c.b16 %v4504, %v4503
    %v5565 = vpack.c.b16 %v4506, %v4505
    %v5566 = vpack.c.b16 %v4508, %v4507
    %v5567 = vpack.c.b16 %v4510, %v4509
    %v5568 = vpack.c.b16 %v4512, %v4511
    %v5569 = vpack.c.b16 %v4514, %v4513
    %v5570 = vpack.c.b16 %v4516, %v4515
    %v5571 = vpack.c.b16 %v4518, %v4517
    %v5572 = vpack.c.b16 %v4520, %v4519
    %v5573 = vpack.c.b16 %v4522, %v4521
    %v5574 = vpack.c.b16 %v4524, %v4523
    %v5575 = vpack.c.b16 %v4526, %v4525
    %v5576 = vpack.c.b16 %v4528, %v4527
    %v5577 = vpack.c.b16 %v4530, %v4529
    %v5578 = vpack.c.b16 %v4532, %v4531
    %v5579 = vpack.c.b16 %v4534, %v4533
    %v5580 = vpack.c.b16 %v4536, %v4535
    %v5581 = vpack.c.b16 %v4538, %v4537
    %v5582 = vpack.c.b16 %v4540, %v4539
    %v5583 = vpack.c.b16 %v4542, %v4541
    %v5584 = vpack.c.b16 %v4544, %v4543
    %v5585 = vpack.c.b16 %v4546, %v4545
    %v5586 = vpack.c.b16 %v4548, %v4547
    %v5587 = vpack.c.b16 %v4550, %v4549
    %v5588 = vpack.c.b16 %v4552, %v4551
    %v5589 = vpack.c.b16 %v4554, %v4553
    %v5590 = vpack.c.b16 %v4556, %v4555
    %v5591 = vpack.c.b16 %v4558, %v4557
    %v5592 = vpack.c.b16 %v4560, %v4559
    %v5593 = vpack.c.b16 %v4562, %v4561
    %v5594 = vpack.c.b16 %v4564, %v4563
    %v5595 = vpack.c.b16 %v4566, %v4565
    %v5596 = vpack.c.b16 %v4568, %v4567
    %v5597 = vpack.c.b16 %v4570, %v4569
    %v5598 = vpack.c.b16 %v4572, %v4571
    %v5599 = vpack.c.b16 %v4574, %v4573
    %v5600 = vpack.c.b16 %v4576, %v4575
    %v5601 = vpack.c.b16 %v4578, %v4577
    %v5602 = vpack.c.b16 %v4580, %v4579
    %v5603 = vpack.c.b16 %v4582, %v4581
    %v5604 = vpack.c.b16 %v4584, %v4583
    %v5605 = vpack.c.b16 %v4586, %v4585
    %v5606 = vpack.c.b16 %v4588, %v4587
    %v5607 = vpack.c.b16 %v4590, %v4589
    %v5608 = vpack.c.b16 %v4592, %v4591
    %v5609 = vpack.c.b16 %v4594, %v4593
    %v5610 = vpack.c.b16 %v4596, %v4595
    %v5611 = vpack.c.b16 %v4598, %v4597
    %v5612 = vpack.c.b16 %v4600, %v4599
    %v5613 = vpack.c.b16 %v4602, %v4601
    %v5614 = vpack.c.b16 %v4604, %v4603
    %v5615 = vpack.c.b16 %v4606, %v4605
    %v5616 = vpack.c.b16 %v4608, %v4607
    %v5617 = vpack.c.b16 %v4610, %v4609
    %v5618 = vpack.c.b16 %v4612, %v4611
    %v5619 = vpack.c.b16 %v4614, %v4613
    %v5620 = vpack.c.b16 %v4616, %v4615
    %v5621 = vpack.c.b16 %v4618, %v4617
    %v5622 = vpack.c.b16 %v4620, %v4619
    %v5623 = vpack.c.b16 %v4622, %v4621
    %v5624 = vpack.c.b16 %v4624, %v4623
    %v5625 = vpack.c.b16 %v4626, %v4625
    %v5626 = vpack.c.b16 %v4628, %v4627
    %v5627 = vpack.c.b16 %v4630, %v4629
    %v5628 = vpack.c.b16 %v4632, %v4631
    %v5629 = vpack.c.b16 %v4634, %v4633
    %v5630 = vpack.c.b16 %v4636, %v4635
    %v5631 = vpack.c.b16 %v4638, %v4637
    %v5632 = vpack.c.b16 %v4640, %v4639
    %v5633 = vpack.c.b16 %v4642, %v4641
    %v5634 = vpack.c.b16 %v4644, %v4643
    %v5635 = vpack.c.b16 %v4646, %v4645
    %v5636 = vpack.c.b16 %v4648, %v4647
    %v5637 = vpack.c.b16 %v4650, %v4649
    %v5638 = vpack.c.b16 %v4652, %v4651
    %v5639 = vpack.c.b16 %v4654, %v4653
    %v5640 = vpack.c.b16 %v4656, %v4655
    %v5641 = vpack.c.b16 %v4658, %v4657
    %v5642 = vpack.c.b16 %v4660, %v4659
    %v5643 = vpack.c.b16 %v4662, %v4661
    %v5644 = vpack.c.b16 %v4664, %v4663
    %v5645 = vpack.c.b16 %v4666, %v4665
    %v5646 = vpack.c.b16 %v4668, %v4667
    %v5647 = vpack.c.b16 %v4670, %v4669
    %v5648 = vpack.c.b16 %v4672, %v4671
    %v5649 = vpack.c.b16 %v4674, %v4673
    %v5650 = vpack.c.b16 %v4676, %v4675
    %v5651 = vpack.c.b16 %v4678, %v4677
    %v5652 = vpack.c.b16 %v4680, %v4679
    %v5653 = vpack.c.b16 %v4682, %v4681
    %v5654 = vpack.c.b16 %v4684, %v4683
    %v5655 = vpack.c.b16 %v4686, %v4685
    %v5656 = vpack.c.b16 %v4688, %v4687
    %v5657 = vpack.c.b16 %v4690, %v4689
    %v5658 = vpack.c.b16 %v4692, %v4691
    %v5659 = vpack.c.b16 %v4694, %v4693
    %v5660 = vpack.c.b16 %v4696, %v4695
    %v5661 = vpack.c.b16 %v4698, %v4697
    %v5662 = vpack.c.b16 %v4700, %v4699
    %v5663 = vpack.c.b16 %v4702, %v4701
    %v5664 = vpack.c.b16 %v4704, %v4703
    %v5665 = vpack.c.b16 %v4706, %v4705
    %v5666 = vpack.c.b16 %v4708, %v4707
    %v5667 = vpack.c.b16 %v4710, %v4709
    %v5668 = vpack.c.b16 %v4712, %v4711
    %v5669 = vpack.c.b16 %v4714, %v4713
    %v5670 = vpack.c.b16 %v4716, %v4715
    %v5671 = vpack.c.b16 %v4718, %v4717
    %v5672 = vpack.c.b16 %v4720, %v4719
    %v5673 = vpack.c.b16 %v4722, %v4721
    %v5674 = vpack.c.b16 %v4724, %v4723
    %v5675 = vpack.c.b16 %v4726, %v4725
    %v5676 = vpack.c.b16 %v4728, %v4727
    %v5677 = vpack.c.b16 %v4730, %v4729
    %v5678 = vpack.c.b16 %v4732, %v4731
    %v5679 = vpack.c.b16 %v4734, %v4733
    %v5680 = vpack.c.b16 %v4736, %v4735
    %v5681 = vpack.c.b16 %v4738, %v4737
    %v5682 = vpack.c.b16 %v4740, %v4739
    %v5683 = vpack.c.b16 %v4742, %v4741
    %v5684 = vpack.c.b16 %v4744, %v4743
    %v5685 = vpack.c.b16 %v4746, %v4745
    %v5686 = vpack.c.b16 %v4748, %v4747
    %v5687 = vpack.c.b16 %v4750, %v4749
    %v5688 = vpack.c.b16 %v4752, %v4751
    %v5689 = vpack.c.b16 %v4754, %v4753
    %v5690 = vpack.c.b16 %v4756, %v4755
    %v5691 = vpack.c.b16 %v4758, %v4757
    %v5692 = vpack.c.b16 %v4760, %v4759
    %v5693 = vpack.c.b16 %v4762, %v4761
    %v5694 = vpack.c.b16 %v4764, %v4763
    %v5695 = vpack.c.b16 %v4766, %v4765
    %v5696 = vpack.c.b16 %v4768, %v4767
    %v5697 = vpack.c.b16 %v4770, %v4769
    %v5698 = vpack.c.b16 %v4772, %v4771
    %v5699 = vpack.c.b16 %v4774, %v4773
    %v5700 = vpack.c.b16 %v4776, %v4775
    %v5701 = vpack.c.b16 %v4778, %v4777
    %v5702 = vpack.c.b16 %v4780, %v4779
    %v5703 = vpack.c.b16 %v4782, %v4781
    %v5704 = vpack.c.b16 %v4784, %v4783
    %v5705 = vpack.c.b16 %v4786, %v4785
    %v5706 = vpack.c.b16 %v4788, %v4787
    %v5707 = vpack.c.b16 %v4790, %v4789
    %v5708 = vpack.c.b16 %v4792, %v4791
    %v5709 = vpack.c.b16 %v4794, %v4793
    %v5710 = vpack.c.b16 %v4796, %v4795
    %v5711 = vpack.c.b16 %v4798, %v4797
    %v5712 = vpack.c.b16 %v4800, %v4799
    %v5713 = vpack.c.b16 %v4802, %v4801
    %v5714 = vpack.c.b16 %v4804, %v4803
    %v5715 = vpack.c.b16 %v4806, %v4805
    %v5716 = vpack.c.b16 %v4808, %v4807
    %v5717 = vpack.c.b16 %v4810, %v4809
    %v5718 = vpack.c.b16 %v4812, %v4811
    %v5719 = vpack.c.b16 %v4814, %v4813
    %v5720 = vpack.c.b16 %v4816, %v4815
    %v5721 = vpack.c.b16 %v4818, %v4817
    %v5722 = vpack.c.b16 %v4820, %v4819
    %v5723 = vpack.c.b16 %v4822, %v4821
    %v5724 = vpack.c.b16 %v4824, %v4823
    %v5725 = vpack.c.b16 %v4826, %v4825
    %v5726 = vpack.c.b16 %v4828, %v4827
    %v5727 = vpack.c.b16 %v4830, %v4829
    %v5728 = vpack.c.b16 %v4832, %v4831
    %v5729 = vpack.c.b16 %v4834, %v4833
    %v5730 = vpack.c.b16 %v4836, %v4835
    %v5731 = vpack.c.b16 %v4838, %v4837
    %v5732 = vpack.c.b16 %v4840, %v4839
    %v5733 = vpack.c.b16 %v4842, %v4841
    %v5734 = vpack.c.b16 %v4844, %v4843
    %v5735 = vpack.c.b16 %v4846, %v4845
    %v5736 = vpack.c.b16 %v4848, %v4847
    %v5737 = vpack.c.b16 %v4850, %v4849
    %v5738 = vpack.c.b16 %v4852, %v4851
    %v5739 = vpack.c.b16 %v4854, %v4853
    %v5740 = vpack.c.b16 %v4856, %v4855
    %v5741 = vpack.c.b16 %v4858, %v4857
    %v5742 = vpack.c.b16 %v4860, %v4859
    %v5743 = vpack.c.b16 %v4862, %v4861
    %v5744 = vpack.c.b16 %v4864, %v4863
    %v5745 = vpack.c.b16 %v4866, %v4865
    %v5746 = vpack.c.b16 %v4868, %v4867
    %v5747 = vpack.c.b16 %v4870, %v4869
    %v5748 = vpack.c.b16 %v4872, %v4871
    %v5749 = vpack.c.b16 %v4874, %v4873
    %v5750 = vpack.c.b16 %v4876, %v4875
    %v5751 = vpack.c.b16 %v4878, %v4877
    %v5752 = vpack.c.b16 %v4880, %v4879
    %v5753 = vpack.c.b16 %v4882, %v4881
    %v5754 = vpack.c.b16 %v4884, %v4883
    %v5755 = vpack.c.b16 %v4886, %v4885
    %v5756 = vpack.c.b16 %v4888, %v4887
    %v5757 = vpack.c.b16 %v4890, %v4889
    %v5758 = vpack.c.b16 %v4892, %v4891
    %v5759 = vpack.c.b16 %v4894, %v4893
    %v5760 = vpack.c.b16 %v4896, %v4895
    %v5761 = vpack.c.b16 %v4898, %v4897
    %v5762 = vpack.c.b16 %v4900, %v4899
    %v5763 = vpack.c.b16 %v4902, %v4901
    %v5764 = vpack.c.b16 %v4904, %v4903
    %v5765 = vpack.c.b16 %v4906, %v4905
    %v5766 = vpack.c.b16 %v4908, %v4907
    %v5767 = vpack.c.b16 %v4910, %v4909
    %v5768 = vpack.c.b16 %v4912, %v4911
    %v5769 = vpack.c.b16 %v4914, %v4913
    %v5770 = vpack.c.b16 %v4916, %v4915
    %v5771 = vpack.c.b16 %v4918, %v4917
    %v5772 = vpack.c.b16 %v4920, %v4919
    %v5773 = vpack.c.b16 %v4922, %v4921
    %v5774 = vpack.c.b16 %v4924, %v4923
    %v5775 = vpack.c.b16 %v4926, %v4925
    %v5776 = vpack.c.b16 %v4928, %v4927
    %v5777 = vpack.c.b16 %v4930, %v4929
    %v5778 = vpack.c.b16 %v4932, %v4931
    %v5779 = vpack.c.b16 %v4934, %v4933
    %v5780 = vpack.c.b16 %v4936, %v4935
    %v5781 = vpack.c.b16 %v4938, %v4937
    %v5782 = vpack.c.b16 %v4940, %v4939
    %v5783 = vpack.c.b16 %v4942, %v4941
    %v5784 = vpack.c.b16 %v4944, %v4943
    %v5785 = vpack.c.b16 %v4946, %v4945
    %v5786 = vpack.c.b16 %v4948, %v4947
    %v5787 = vpack.c.b16 %v4950, %v4949
    %v5788 = vpack.c.b16 %v4952, %v4951
    %v5789 = vpack.c.b16 %v4954, %v4953
    %v5790 = vpack.c.b16 %v4956, %v4955
    %v5791 = vpack.c.b16 %v4958, %v4957
    %v5792 = vpack.c.b16 %v4960, %v4959
    %v5793 = vpack.c.b16 %v4962, %v4961
    %v5794 = vpack.c.b16 %v4964, %v4963
    %v5795 = vpack.c.b16 %v4966, %v4965
    %v5796 = vpack.c.b16 %v4968, %v4967
    %v5797 = vpack.c.b16 %v4970, %v4969
    %v5798 = vpack.c.b16 %v4972, %v4971
    %v5799 = vpack.c.b16 %v4974, %v4973
    %v5800 = vpack.c.b16 %v4976, %v4975
    %v5801 = vpack.c.b16 %v4978, %v4977
    %v5802 = vpack.c.b16 %v4980, %v4979
    %v5803 = vpack.c.b16 %v4982, %v4981
    %v5804 = vpack.c.b16 %v4984, %v4983
    %v5805 = vpack.c.b16 %v4986, %v4985
    %v5806 = vpack.c.b16 %v4988, %v4987
    %v5807 = vpack.c.b16 %v4990, %v4989
    %v5808 = vpack.c.b16 %v4992, %v4991
    %v5809 = vpack.c.b16 %v4994, %v4993
    %v5810 = vpack.c.b16 %v4996, %v4995
    %v5811 = vpack.c.b16 %v4998, %v4997
    %v5812 = vpack.c.b16 %v5000, %v4999
    %v5813 = vpack.c.b16 %v5002, %v5001
    %v5814 = vpack.c.b16 %v5004, %v5003
    %v5815 = vpack.c.b16 %v5006, %v5005
    %v5816 = vpack.c.b16 %v5008, %v5007
    %v5817 = vpack.c.b16 %v5010, %v5009
    %v5818 = vpack.c.b16 %v5012, %v5011
    %v5819 = vpack.c.b16 %v5014, %v5013
    %v5820 = vpack.c.b16 %v5016, %v5015
    %v5821 = vpack.c.b16 %v5018, %v5017
    %v5822 = vpack.c.b16 %v5020, %v5019
    %v5823 = vpack.c.b16 %v5022, %v5021
    %v5824 = vpack.c.b16 %v5024, %v5023
    %v5825 = vpack.c.b16 %v5026, %v5025
    %v5826 = vpack.c.b16 %v5028, %v5027
    %v5827 = vpack.c.b16 %v5030, %v5029
    %v5828 = vpack.c.b16 %v5032, %v5031
    %v5829 = vpack.c.b16 %v5034, %v5033
    %v5830 = vpack.c.b16 %v5036, %v5035
    %v5831 = vpack.c.b16 %v5038, %v5037
    %v5832 = vpack.c.b16 %v5040, %v5039
    %v5833 = vpack.c.b16 %v5042, %v5041
    %v5834 = vpack.c.b16 %v5044, %v5043
    %v5835 = vpack.c.b16 %v5046, %v5045
    %v5836 = vpack.c.b16 %v5048, %v5047
    %v5837 = vpack.c.b16 %v5050, %v5049
    %v5838 = vpack.c.b16 %v5052, %v5051
    %v5839 = vpack.c.b16 %v5054, %v5053
    %v5840 = vpack.c.b16 %v5056, %v5055
    %v5841 = vpack.c.b16 %v5058, %v5057
    %v5842 = vpack.c.b16 %v5060, %v5059
    %v5843 = vpack.c.b16 %v5062, %v5061
    %v5844 = vpack.c.b16 %v5064, %v5063
    %v5845 = vpack.c.b16 %v5066, %v5065
    %v5846 = vpack.c.b16 %v5068, %v5067
    %v5847 = vpack.c.b16 %v5070, %v5069
    %v5848 = vpack.c.b16 %v5072, %v5071
    %v5849 = vpack.c.b16 %v5074, %v5073
    %v5850 = vpack.c.b16 %v5076, %v5075
    %v5851 = vpack.c.b16 %v5078, %v5077
    %v5852 = vpack.c.b16 %v5080, %v5079
    %v5853 = vpack.c.b16 %v5082, %v5081
    %v5854 = vpack.c.b16 %v5084, %v5083
    %v5855 = vpack.c.b16 %v5086, %v5085
    %v5856 = vpack.c.b16 %v5088, %v5087
    %6625 = vmatpush.bf16.msra.mxu0 %v5096
    %6626 = vmatpush.bf16.msra.mxu0 %v5095
    %6627 = vmatpush.bf16.msra.mxu0 %v5094
    %6628 = vmatpush.bf16.msra.mxu0 %v5093
    %6629 = vmatpush.bf16.msra.mxu0 %v5092
    %6630 = vmatpush.bf16.msra.mxu0 %v5091
    %6631 = vmatpush.bf16.msra.mxu0 %v5090
    %6632 = vmatpush.bf16.msra.mxu0 %v5089
    %6633 = vmatmul.bf16.gmra.mxu0 %v1825
    %v6634 = vpop.f32.mrf.mxu0
    %v6635 = vadd.f32 %v1679, %v6634
    %v6636 = vpop.f32.mrf.mxu0
    %6637 = vdwg.mxu0
    %6638 = vmatpush.bf16.msra.mxu0 %v5104
    %6639 = vmatpush.bf16.msra.mxu0 %v5103
    %6640 = vmatpush.bf16.msra.mxu0 %v5102
    %6641 = vmatpush.bf16.msra.mxu0 %v5101
    %6642 = vmatpush.bf16.msra.mxu0 %v5100
    %6643 = vmatpush.bf16.msra.mxu0 %v5099
    %6644 = vmatpush.bf16.msra.mxu0 %v5098
    %6645 = vmatpush.bf16.msra.mxu0 %v5097
    %6646 = vmatmul.bf16.gmra.mxu0 %v1826
    %v6647 = vpop.f32.mrf.mxu0
    %v6648 = vadd.f32 %v6635, %v6647
    %v6649 = vpop.f32.mrf.mxu0
    %6650 = vdwg.mxu0
    %6651 = vmatpush.bf16.msra.mxu0 %v5112
    %6652 = vmatpush.bf16.msra.mxu0 %v5111
    %6653 = vmatpush.bf16.msra.mxu0 %v5110
    %6654 = vmatpush.bf16.msra.mxu0 %v5109
    %6655 = vmatpush.bf16.msra.mxu0 %v5108
    %6656 = vmatpush.bf16.msra.mxu0 %v5107
    %6657 = vmatpush.bf16.msra.mxu0 %v5106
    %6658 = vmatpush.bf16.msra.mxu0 %v5105
    %6659 = vmatmul.bf16.gmra.mxu0 %v1827
    %v6660 = vpop.f32.mrf.mxu0
    %v6661 = vadd.f32 %v6648, %v6660
    %v6662 = vpop.f32.mrf.mxu0
    %6663 = vdwg.mxu0
    %6664 = vmatpush.bf16.msra.mxu0 %v5120
    %6665 = vmatpush.bf16.msra.mxu0 %v5119
    %6666 = vmatpush.bf16.msra.mxu0 %v5118
    %6667 = vmatpush.bf16.msra.mxu0 %v5117
    %6668 = vmatpush.bf16.msra.mxu0 %v5116
    %6669 = vmatpush.bf16.msra.mxu0 %v5115
    %6670 = vmatpush.bf16.msra.mxu0 %v5114
    %6671 = vmatpush.bf16.msra.mxu0 %v5113
    %6672 = vmatmul.bf16.gmra.mxu0 %v1828
    %v6673 = vpop.f32.mrf.mxu0
    %v6674 = vadd.f32 %v6661, %v6673
    %v6675 = vpop.f32.mrf.mxu0
    %6676 = vdwg.mxu0
    %6677 = vmatpush.bf16.msra.mxu0 %v5128
    %6678 = vmatpush.bf16.msra.mxu0 %v5127
    %6679 = vmatpush.bf16.msra.mxu0 %v5126
    %6680 = vmatpush.bf16.msra.mxu0 %v5125
    %6681 = vmatpush.bf16.msra.mxu0 %v5124
    %6682 = vmatpush.bf16.msra.mxu0 %v5123
    %6683 = vmatpush.bf16.msra.mxu0 %v5122
    %6684 = vmatpush.bf16.msra.mxu0 %v5121
    %6685 = vmatmul.bf16.gmra.mxu0 %v1829
    %v6686 = vpop.f32.mrf.mxu0
    %v6687 = vadd.f32 %v6674, %v6686
    %v6688 = vpop.f32.mrf.mxu0
    %6689 = vdwg.mxu0
    %6690 = vmatpush.bf16.msra.mxu0 %v5136
    %6691 = vmatpush.bf16.msra.mxu0 %v5135
    %6692 = vmatpush.bf16.msra.mxu0 %v5134
    %6693 = vmatpush.bf16.msra.mxu0 %v5133
    %6694 = vmatpush.bf16.msra.mxu0 %v5132
    %6695 = vmatpush.bf16.msra.mxu0 %v5131
    %6696 = vmatpush.bf16.msra.mxu0 %v5130
    %6697 = vmatpush.bf16.msra.mxu0 %v5129
    %6698 = vmatmul.bf16.gmra.mxu0 %v1830
    %v6699 = vpop.f32.mrf.mxu0
    %v6700 = vadd.f32 %v6687, %v6699
    %v6701 = vpop.f32.mrf.mxu0
    %6702 = vdwg.mxu0
    %6703 = vmatpush.bf16.msra.mxu0 %v5144
    %6704 = vmatpush.bf16.msra.mxu0 %v5143
    %6705 = vmatpush.bf16.msra.mxu0 %v5142
    %6706 = vmatpush.bf16.msra.mxu0 %v5141
    %6707 = vmatpush.bf16.msra.mxu0 %v5140
    %6708 = vmatpush.bf16.msra.mxu0 %v5139
    %6709 = vmatpush.bf16.msra.mxu0 %v5138
    %6710 = vmatpush.bf16.msra.mxu0 %v5137
    %6711 = vmatmul.bf16.gmra.mxu0 %v1831
    %v6712 = vpop.f32.mrf.mxu0
    %v6713 = vadd.f32 %v6700, %v6712
    %v6714 = vpop.f32.mrf.mxu0
    %6715 = vdwg.mxu0
    %6716 = vmatpush.bf16.msra.mxu0 %v5152
    %6717 = vmatpush.bf16.msra.mxu0 %v5151
    %6718 = vmatpush.bf16.msra.mxu0 %v5150
    %6719 = vmatpush.bf16.msra.mxu0 %v5149
    %6720 = vmatpush.bf16.msra.mxu0 %v5148
    %6721 = vmatpush.bf16.msra.mxu0 %v5147
    %6722 = vmatpush.bf16.msra.mxu0 %v5146
    %6723 = vmatpush.bf16.msra.mxu0 %v5145
    %6724 = vmatmul.bf16.gmra.mxu0 %v1832
    %v6725 = vpop.f32.mrf.mxu0
    %v6726 = vadd.f32 %v6713, %v6725
    %v6727 = vpop.f32.mrf.mxu0
    %6728 = vdwg.mxu0
    %6729 = vmatpush.bf16.msra.mxu0 %v5160
    %6730 = vmatpush.bf16.msra.mxu0 %v5159
    %6731 = vmatpush.bf16.msra.mxu0 %v5158
    %6732 = vmatpush.bf16.msra.mxu0 %v5157
    %6733 = vmatpush.bf16.msra.mxu0 %v5156
    %6734 = vmatpush.bf16.msra.mxu0 %v5155
    %6735 = vmatpush.bf16.msra.mxu0 %v5154
    %6736 = vmatpush.bf16.msra.mxu0 %v5153
    %6737 = vmatmul.bf16.gmra.mxu0 %v1833
    %v6738 = vpop.f32.mrf.mxu0
    %v6739 = vadd.f32 %v6726, %v6738
    %v6740 = vpop.f32.mrf.mxu0
    %6741 = vdwg.mxu0
    %6742 = vmatpush.bf16.msra.mxu0 %v5168
    %6743 = vmatpush.bf16.msra.mxu0 %v5167
    %6744 = vmatpush.bf16.msra.mxu0 %v5166
    %6745 = vmatpush.bf16.msra.mxu0 %v5165
    %6746 = vmatpush.bf16.msra.mxu0 %v5164
    %6747 = vmatpush.bf16.msra.mxu0 %v5163
    %6748 = vmatpush.bf16.msra.mxu0 %v5162
    %6749 = vmatpush.bf16.msra.mxu0 %v5161
    %6750 = vmatmul.bf16.gmra.mxu0 %v1834
    %v6751 = vpop.f32.mrf.mxu0
    %v6752 = vadd.f32 %v6739, %v6751
    %v6753 = vpop.f32.mrf.mxu0
    %6754 = vdwg.mxu0
    %6755 = vmatpush.bf16.msra.mxu0 %v5176
    %6756 = vmatpush.bf16.msra.mxu0 %v5175
    %6757 = vmatpush.bf16.msra.mxu0 %v5174
    %6758 = vmatpush.bf16.msra.mxu0 %v5173
    %6759 = vmatpush.bf16.msra.mxu0 %v5172
    %6760 = vmatpush.bf16.msra.mxu0 %v5171
    %6761 = vmatpush.bf16.msra.mxu0 %v5170
    %6762 = vmatpush.bf16.msra.mxu0 %v5169
    %6763 = vmatmul.bf16.gmra.mxu0 %v1835
    %v6764 = vpop.f32.mrf.mxu0
    %v6765 = vadd.f32 %v6752, %v6764
    %v6766 = vpop.f32.mrf.mxu0
    %6767 = vdwg.mxu0
    %6768 = vmatpush.bf16.msra.mxu0 %v5184
    %6769 = vmatpush.bf16.msra.mxu0 %v5183
    %6770 = vmatpush.bf16.msra.mxu0 %v5182
    %6771 = vmatpush.bf16.msra.mxu0 %v5181
    %6772 = vmatpush.bf16.msra.mxu0 %v5180
    %6773 = vmatpush.bf16.msra.mxu0 %v5179
    %6774 = vmatpush.bf16.msra.mxu0 %v5178
    %6775 = vmatpush.bf16.msra.mxu0 %v5177
    %6776 = vmatmul.bf16.gmra.mxu0 %v1836
    %v6777 = vpop.f32.mrf.mxu0
    %v6778 = vadd.f32 %v6765, %v6777
    %v6779 = vpop.f32.mrf.mxu0
    %6780 = vdwg.mxu0
    %6781 = vmatpush.bf16.msra.mxu0 %v5192
    %6782 = vmatpush.bf16.msra.mxu0 %v5191
    %6783 = vmatpush.bf16.msra.mxu0 %v5190
    %6784 = vmatpush.bf16.msra.mxu0 %v5189
    %6785 = vmatpush.bf16.msra.mxu0 %v5188
    %6786 = vmatpush.bf16.msra.mxu0 %v5187
    %6787 = vmatpush.bf16.msra.mxu0 %v5186
    %6788 = vmatpush.bf16.msra.mxu0 %v5185
    %6789 = vmatmul.bf16.gmra.mxu0 %v1837
    %v6790 = vpop.f32.mrf.mxu0
    %v6791 = vadd.f32 %v6778, %v6790
    %v6792 = vpop.f32.mrf.mxu0
    %6793 = vdwg.mxu0
    %6794 = vmatpush.bf16.msra.mxu0 %v5200
    %6795 = vmatpush.bf16.msra.mxu0 %v5199
    %6796 = vmatpush.bf16.msra.mxu0 %v5198
    %6797 = vmatpush.bf16.msra.mxu0 %v5197
    %6798 = vmatpush.bf16.msra.mxu0 %v5196
    %6799 = vmatpush.bf16.msra.mxu0 %v5195
    %6800 = vmatpush.bf16.msra.mxu0 %v5194
    %6801 = vmatpush.bf16.msra.mxu0 %v5193
    %6802 = vmatmul.bf16.gmra.mxu0 %v1838
    %v6803 = vpop.f32.mrf.mxu0
    %v6804 = vadd.f32 %v6791, %v6803
    %v6805 = vpop.f32.mrf.mxu0
    %6806 = vdwg.mxu0
    %6807 = vmatpush.bf16.msra.mxu0 %v5208
    %6808 = vmatpush.bf16.msra.mxu0 %v5207
    %6809 = vmatpush.bf16.msra.mxu0 %v5206
    %6810 = vmatpush.bf16.msra.mxu0 %v5205
    %6811 = vmatpush.bf16.msra.mxu0 %v5204
    %6812 = vmatpush.bf16.msra.mxu0 %v5203
    %6813 = vmatpush.bf16.msra.mxu0 %v5202
    %6814 = vmatpush.bf16.msra.mxu0 %v5201
    %6815 = vmatmul.bf16.gmra.mxu0 %v1839
    %v6816 = vpop.f32.mrf.mxu0
    %v6817 = vadd.f32 %v6804, %v6816
    %v6818 = vpop.f32.mrf.mxu0
    %6819 = vdwg.mxu0
    %6820 = vmatpush.bf16.msra.mxu0 %v5216
    %6821 = vmatpush.bf16.msra.mxu0 %v5215
    %6822 = vmatpush.bf16.msra.mxu0 %v5214
    %6823 = vmatpush.bf16.msra.mxu0 %v5213
    %6824 = vmatpush.bf16.msra.mxu0 %v5212
    %6825 = vmatpush.bf16.msra.mxu0 %v5211
    %6826 = vmatpush.bf16.msra.mxu0 %v5210
    %6827 = vmatpush.bf16.msra.mxu0 %v5209
    %6828 = vmatmul.bf16.gmra.mxu0 %v1840
    %v6829 = vpop.f32.mrf.mxu0
    %v6830 = vadd.f32 %v6817, %v6829
    %v6831 = vpop.f32.mrf.mxu0
    %6832 = vdwg.mxu0
    %6833 = vmatpush.bf16.msra.mxu0 %v5224
    %6834 = vmatpush.bf16.msra.mxu0 %v5223
    %6835 = vmatpush.bf16.msra.mxu0 %v5222
    %6836 = vmatpush.bf16.msra.mxu0 %v5221
    %6837 = vmatpush.bf16.msra.mxu0 %v5220
    %6838 = vmatpush.bf16.msra.mxu0 %v5219
    %6839 = vmatpush.bf16.msra.mxu0 %v5218
    %6840 = vmatpush.bf16.msra.mxu0 %v5217
    %6841 = vmatmul.bf16.gmra.mxu0 %v1841
    %v6842 = vpop.f32.mrf.mxu0
    %v6843 = vadd.f32 %v6830, %v6842
    %v6844 = vpop.f32.mrf.mxu0
    %6845 = vdwg.mxu0
    %6846 = vmatpush.bf16.msra.mxu0 %v5232
    %6847 = vmatpush.bf16.msra.mxu0 %v5231
    %6848 = vmatpush.bf16.msra.mxu0 %v5230
    %6849 = vmatpush.bf16.msra.mxu0 %v5229
    %6850 = vmatpush.bf16.msra.mxu0 %v5228
    %6851 = vmatpush.bf16.msra.mxu0 %v5227
    %6852 = vmatpush.bf16.msra.mxu0 %v5226
    %6853 = vmatpush.bf16.msra.mxu0 %v5225
    %6854 = vmatmul.bf16.gmra.mxu0 %v1842
    %v6855 = vpop.f32.mrf.mxu0
    %v6856 = vadd.f32 %v6843, %v6855
    %v6857 = vpop.f32.mrf.mxu0
    %6858 = vdwg.mxu0
    %6859 = vmatpush.bf16.msra.mxu0 %v5240
    %6860 = vmatpush.bf16.msra.mxu0 %v5239
    %6861 = vmatpush.bf16.msra.mxu0 %v5238
    %6862 = vmatpush.bf16.msra.mxu0 %v5237
    %6863 = vmatpush.bf16.msra.mxu0 %v5236
    %6864 = vmatpush.bf16.msra.mxu0 %v5235
    %6865 = vmatpush.bf16.msra.mxu0 %v5234
    %6866 = vmatpush.bf16.msra.mxu0 %v5233
    %6867 = vmatmul.bf16.gmra.mxu0 %v1843
    %v6868 = vpop.f32.mrf.mxu0
    %v6869 = vadd.f32 %v6856, %v6868
    %v6870 = vpop.f32.mrf.mxu0
    %6871 = vdwg.mxu0
    %6872 = vmatpush.bf16.msra.mxu0 %v5248
    %6873 = vmatpush.bf16.msra.mxu0 %v5247
    %6874 = vmatpush.bf16.msra.mxu0 %v5246
    %6875 = vmatpush.bf16.msra.mxu0 %v5245
    %6876 = vmatpush.bf16.msra.mxu0 %v5244
    %6877 = vmatpush.bf16.msra.mxu0 %v5243
    %6878 = vmatpush.bf16.msra.mxu0 %v5242
    %6879 = vmatpush.bf16.msra.mxu0 %v5241
    %6880 = vmatmul.bf16.gmra.mxu0 %v1844
    %v6881 = vpop.f32.mrf.mxu0
    %v6882 = vadd.f32 %v6869, %v6881
    %v6883 = vpop.f32.mrf.mxu0
    %6884 = vdwg.mxu0
    %6885 = vmatpush.bf16.msra.mxu0 %v5256
    %6886 = vmatpush.bf16.msra.mxu0 %v5255
    %6887 = vmatpush.bf16.msra.mxu0 %v5254
    %6888 = vmatpush.bf16.msra.mxu0 %v5253
    %6889 = vmatpush.bf16.msra.mxu0 %v5252
    %6890 = vmatpush.bf16.msra.mxu0 %v5251
    %6891 = vmatpush.bf16.msra.mxu0 %v5250
    %6892 = vmatpush.bf16.msra.mxu0 %v5249
    %6893 = vmatmul.bf16.gmra.mxu0 %v1845
    %v6894 = vpop.f32.mrf.mxu0
    %v6895 = vadd.f32 %v6882, %v6894
    %v6896 = vpop.f32.mrf.mxu0
    %6897 = vdwg.mxu0
    %6898 = vmatpush.bf16.msra.mxu0 %v5264
    %6899 = vmatpush.bf16.msra.mxu0 %v5263
    %6900 = vmatpush.bf16.msra.mxu0 %v5262
    %6901 = vmatpush.bf16.msra.mxu0 %v5261
    %6902 = vmatpush.bf16.msra.mxu0 %v5260
    %6903 = vmatpush.bf16.msra.mxu0 %v5259
    %6904 = vmatpush.bf16.msra.mxu0 %v5258
    %6905 = vmatpush.bf16.msra.mxu0 %v5257
    %6906 = vmatmul.bf16.gmra.mxu0 %v1846
    %v6907 = vpop.f32.mrf.mxu0
    %v6908 = vadd.f32 %v6895, %v6907
    %v6909 = vpop.f32.mrf.mxu0
    %6910 = vdwg.mxu0
    %6911 = vmatpush.bf16.msra.mxu0 %v5272
    %6912 = vmatpush.bf16.msra.mxu0 %v5271
    %6913 = vmatpush.bf16.msra.mxu0 %v5270
    %6914 = vmatpush.bf16.msra.mxu0 %v5269
    %6915 = vmatpush.bf16.msra.mxu0 %v5268
    %6916 = vmatpush.bf16.msra.mxu0 %v5267
    %6917 = vmatpush.bf16.msra.mxu0 %v5266
    %6918 = vmatpush.bf16.msra.mxu0 %v5265
    %6919 = vmatmul.bf16.gmra.mxu0 %v1847
    %v6920 = vpop.f32.mrf.mxu0
    %v6921 = vadd.f32 %v6908, %v6920
    %v6922 = vpop.f32.mrf.mxu0
    %6923 = vdwg.mxu0
    %6924 = vmatpush.bf16.msra.mxu0 %v5280
    %6925 = vmatpush.bf16.msra.mxu0 %v5279
    %6926 = vmatpush.bf16.msra.mxu0 %v5278
    %6927 = vmatpush.bf16.msra.mxu0 %v5277
    %6928 = vmatpush.bf16.msra.mxu0 %v5276
    %6929 = vmatpush.bf16.msra.mxu0 %v5275
    %6930 = vmatpush.bf16.msra.mxu0 %v5274
    %6931 = vmatpush.bf16.msra.mxu0 %v5273
    %6932 = vmatmul.bf16.gmra.mxu0 %v1848
    %v6933 = vpop.f32.mrf.mxu0
    %v6934 = vadd.f32 %v6921, %v6933
    %v6935 = vpop.f32.mrf.mxu0
    %6936 = vdwg.mxu0
    %6937 = vmatpush.bf16.msra.mxu0 %v5288
    %6938 = vmatpush.bf16.msra.mxu0 %v5287
    %6939 = vmatpush.bf16.msra.mxu0 %v5286
    %6940 = vmatpush.bf16.msra.mxu0 %v5285
    %6941 = vmatpush.bf16.msra.mxu0 %v5284
    %6942 = vmatpush.bf16.msra.mxu0 %v5283
    %6943 = vmatpush.bf16.msra.mxu0 %v5282
    %6944 = vmatpush.bf16.msra.mxu0 %v5281
    %6945 = vmatmul.bf16.gmra.mxu0 %v1849
    %v6946 = vpop.f32.mrf.mxu0
    %v6947 = vadd.f32 %v6934, %v6946
    %v6948 = vpop.f32.mrf.mxu0
    %6949 = vdwg.mxu0
    %6950 = vmatpush.bf16.msra.mxu0 %v5296
    %6951 = vmatpush.bf16.msra.mxu0 %v5295
    %6952 = vmatpush.bf16.msra.mxu0 %v5294
    %6953 = vmatpush.bf16.msra.mxu0 %v5293
    %6954 = vmatpush.bf16.msra.mxu0 %v5292
    %6955 = vmatpush.bf16.msra.mxu0 %v5291
    %6956 = vmatpush.bf16.msra.mxu0 %v5290
    %6957 = vmatpush.bf16.msra.mxu0 %v5289
    %6958 = vmatmul.bf16.gmra.mxu0 %v1850
    %v6959 = vpop.f32.mrf.mxu0
    %v6960 = vadd.f32 %v6947, %v6959
    %v6961 = vpop.f32.mrf.mxu0
    %6962 = vdwg.mxu0
    %6963 = vmatpush.bf16.msra.mxu0 %v5304
    %6964 = vmatpush.bf16.msra.mxu0 %v5303
    %6965 = vmatpush.bf16.msra.mxu0 %v5302
    %6966 = vmatpush.bf16.msra.mxu0 %v5301
    %6967 = vmatpush.bf16.msra.mxu0 %v5300
    %6968 = vmatpush.bf16.msra.mxu0 %v5299
    %6969 = vmatpush.bf16.msra.mxu0 %v5298
    %6970 = vmatpush.bf16.msra.mxu0 %v5297
    %6971 = vmatmul.bf16.gmra.mxu0 %v1851
    %v6972 = vpop.f32.mrf.mxu0
    %v6973 = vadd.f32 %v6960, %v6972
    %v6974 = vpop.f32.mrf.mxu0
    %6975 = vdwg.mxu0
    %6976 = vmatpush.bf16.msra.mxu0 %v5312
    %6977 = vmatpush.bf16.msra.mxu0 %v5311
    %6978 = vmatpush.bf16.msra.mxu0 %v5310
    %6979 = vmatpush.bf16.msra.mxu0 %v5309
    %6980 = vmatpush.bf16.msra.mxu0 %v5308
    %6981 = vmatpush.bf16.msra.mxu0 %v5307
    %6982 = vmatpush.bf16.msra.mxu0 %v5306
    %6983 = vmatpush.bf16.msra.mxu0 %v5305
    %6984 = vmatmul.bf16.gmra.mxu0 %v1852
    %v6985 = vpop.f32.mrf.mxu0
    %v6986 = vadd.f32 %v6973, %v6985
    %v6987 = vpop.f32.mrf.mxu0
    %6988 = vdwg.mxu0
    %6989 = vmatpush.bf16.msra.mxu0 %v5320
    %6990 = vmatpush.bf16.msra.mxu0 %v5319
    %6991 = vmatpush.bf16.msra.mxu0 %v5318
    %6992 = vmatpush.bf16.msra.mxu0 %v5317
    %6993 = vmatpush.bf16.msra.mxu0 %v5316
    %6994 = vmatpush.bf16.msra.mxu0 %v5315
    %6995 = vmatpush.bf16.msra.mxu0 %v5314
    %6996 = vmatpush.bf16.msra.mxu0 %v5313
    %6997 = vmatmul.bf16.gmra.mxu0 %v1853
    %v6998 = vpop.f32.mrf.mxu0
    %v6999 = vadd.f32 %v6986, %v6998
    %v7000 = vpop.f32.mrf.mxu0
    %7001 = vdwg.mxu0
    %7002 = vmatpush.bf16.msra.mxu0 %v5328
    %7003 = vmatpush.bf16.msra.mxu0 %v5327
    %7004 = vmatpush.bf16.msra.mxu0 %v5326
    %7005 = vmatpush.bf16.msra.mxu0 %v5325
    %7006 = vmatpush.bf16.msra.mxu0 %v5324
    %7007 = vmatpush.bf16.msra.mxu0 %v5323
    %7008 = vmatpush.bf16.msra.mxu0 %v5322
    %7009 = vmatpush.bf16.msra.mxu0 %v5321
    %7010 = vmatmul.bf16.gmra.mxu0 %v1854
    %v7011 = vpop.f32.mrf.mxu0
    %v7012 = vadd.f32 %v6999, %v7011
    %v7013 = vpop.f32.mrf.mxu0
    %7014 = vdwg.mxu0
    %7015 = vmatpush.bf16.msra.mxu0 %v5336
    %7016 = vmatpush.bf16.msra.mxu0 %v5335
    %7017 = vmatpush.bf16.msra.mxu0 %v5334
    %7018 = vmatpush.bf16.msra.mxu0 %v5333
    %7019 = vmatpush.bf16.msra.mxu0 %v5332
    %7020 = vmatpush.bf16.msra.mxu0 %v5331
    %7021 = vmatpush.bf16.msra.mxu0 %v5330
    %7022 = vmatpush.bf16.msra.mxu0 %v5329
    %7023 = vmatmul.bf16.gmra.mxu0 %v1855
    %v7024 = vpop.f32.mrf.mxu0
    %v7025 = vadd.f32 %v7012, %v7024
    %v7026 = vpop.f32.mrf.mxu0
    %7027 = vdwg.mxu0
    %7028 = vmatpush.bf16.msra.mxu0 %v5344
    %7029 = vmatpush.bf16.msra.mxu0 %v5343
    %7030 = vmatpush.bf16.msra.mxu0 %v5342
    %7031 = vmatpush.bf16.msra.mxu0 %v5341
    %7032 = vmatpush.bf16.msra.mxu0 %v5340
    %7033 = vmatpush.bf16.msra.mxu0 %v5339
    %7034 = vmatpush.bf16.msra.mxu0 %v5338
    %7035 = vmatpush.bf16.msra.mxu0 %v5337
    %7036 = vmatmul.bf16.gmra.mxu0 %v1856
    %v7037 = vpop.f32.mrf.mxu0
    %v7038 = vadd.f32 %v7025, %v7037
    %v7039 = vpop.f32.mrf.mxu0
    %7040 = vdwg.mxu0
    %7041 = vmatpush.bf16.msra.mxu0 %v5352
    %7042 = vmatpush.bf16.msra.mxu0 %v5351
    %7043 = vmatpush.bf16.msra.mxu0 %v5350
    %7044 = vmatpush.bf16.msra.mxu0 %v5349
    %7045 = vmatpush.bf16.msra.mxu0 %v5348
    %7046 = vmatpush.bf16.msra.mxu0 %v5347
    %7047 = vmatpush.bf16.msra.mxu0 %v5346
    %7048 = vmatpush.bf16.msra.mxu0 %v5345
    %7049 = vmatmul.bf16.gmra.mxu0 %v1857
    %v7050 = vpop.f32.mrf.mxu0
    %v7051 = vadd.f32 %v7038, %v7050
    %v7052 = vpop.f32.mrf.mxu0
    %7053 = vdwg.mxu0
    %7054 = vmatpush.bf16.msra.mxu0 %v5360
    %7055 = vmatpush.bf16.msra.mxu0 %v5359
    %7056 = vmatpush.bf16.msra.mxu0 %v5358
    %7057 = vmatpush.bf16.msra.mxu0 %v5357
    %7058 = vmatpush.bf16.msra.mxu0 %v5356
    %7059 = vmatpush.bf16.msra.mxu0 %v5355
    %7060 = vmatpush.bf16.msra.mxu0 %v5354
    %7061 = vmatpush.bf16.msra.mxu0 %v5353
    %7062 = vmatmul.bf16.gmra.mxu0 %v1858
    %v7063 = vpop.f32.mrf.mxu0
    %v7064 = vadd.f32 %v7051, %v7063
    %v7065 = vpop.f32.mrf.mxu0
    %7066 = vdwg.mxu0
    %7067 = vmatpush.bf16.msra.mxu0 %v5368
    %7068 = vmatpush.bf16.msra.mxu0 %v5367
    %7069 = vmatpush.bf16.msra.mxu0 %v5366
    %7070 = vmatpush.bf16.msra.mxu0 %v5365
    %7071 = vmatpush.bf16.msra.mxu0 %v5364
    %7072 = vmatpush.bf16.msra.mxu0 %v5363
    %7073 = vmatpush.bf16.msra.mxu0 %v5362
    %7074 = vmatpush.bf16.msra.mxu0 %v5361
    %7075 = vmatmul.bf16.gmra.mxu0 %v1859
    %v7076 = vpop.f32.mrf.mxu0
    %v7077 = vadd.f32 %v7064, %v7076
    %v7078 = vpop.f32.mrf.mxu0
    %7079 = vdwg.mxu0
    %7080 = vmatpush.bf16.msra.mxu0 %v5376
    %7081 = vmatpush.bf16.msra.mxu0 %v5375
    %7082 = vmatpush.bf16.msra.mxu0 %v5374
    %7083 = vmatpush.bf16.msra.mxu0 %v5373
    %7084 = vmatpush.bf16.msra.mxu0 %v5372
    %7085 = vmatpush.bf16.msra.mxu0 %v5371
    %7086 = vmatpush.bf16.msra.mxu0 %v5370
    %7087 = vmatpush.bf16.msra.mxu0 %v5369
    %7088 = vmatmul.bf16.gmra.mxu0 %v1860
    %v7089 = vpop.f32.mrf.mxu0
    %v7090 = vadd.f32 %v7077, %v7089
    %v7091 = vpop.f32.mrf.mxu0
    %7092 = vdwg.mxu0
    %7093 = vmatpush.bf16.msra.mxu0 %v5384
    %7094 = vmatpush.bf16.msra.mxu0 %v5383
    %7095 = vmatpush.bf16.msra.mxu0 %v5382
    %7096 = vmatpush.bf16.msra.mxu0 %v5381
    %7097 = vmatpush.bf16.msra.mxu0 %v5380
    %7098 = vmatpush.bf16.msra.mxu0 %v5379
    %7099 = vmatpush.bf16.msra.mxu0 %v5378
    %7100 = vmatpush.bf16.msra.mxu0 %v5377
    %7101 = vmatmul.bf16.gmra.mxu0 %v1861
    %v7102 = vpop.f32.mrf.mxu0
    %v7103 = vadd.f32 %v7090, %v7102
    %v7104 = vpop.f32.mrf.mxu0
    %7105 = vdwg.mxu0
    %7106 = vmatpush.bf16.msra.mxu0 %v5392
    %7107 = vmatpush.bf16.msra.mxu0 %v5391
    %7108 = vmatpush.bf16.msra.mxu0 %v5390
    %7109 = vmatpush.bf16.msra.mxu0 %v5389
    %7110 = vmatpush.bf16.msra.mxu0 %v5388
    %7111 = vmatpush.bf16.msra.mxu0 %v5387
    %7112 = vmatpush.bf16.msra.mxu0 %v5386
    %7113 = vmatpush.bf16.msra.mxu0 %v5385
    %7114 = vmatmul.bf16.gmra.mxu0 %v1862
    %v7115 = vpop.f32.mrf.mxu0
    %v7116 = vadd.f32 %v7103, %v7115
    %v7117 = vpop.f32.mrf.mxu0
    %7118 = vdwg.mxu0
    %7119 = vmatpush.bf16.msra.mxu0 %v5400
    %7120 = vmatpush.bf16.msra.mxu0 %v5399
    %7121 = vmatpush.bf16.msra.mxu0 %v5398
    %7122 = vmatpush.bf16.msra.mxu0 %v5397
    %7123 = vmatpush.bf16.msra.mxu0 %v5396
    %7124 = vmatpush.bf16.msra.mxu0 %v5395
    %7125 = vmatpush.bf16.msra.mxu0 %v5394
    %7126 = vmatpush.bf16.msra.mxu0 %v5393
    %7127 = vmatmul.bf16.gmra.mxu0 %v1863
    %v7128 = vpop.f32.mrf.mxu0
    %v7129 = vadd.f32 %v7116, %v7128
    %v7130 = vpop.f32.mrf.mxu0
    %7131 = vdwg.mxu0
    %7132 = vmatpush.bf16.msra.mxu0 %v5408
    %7133 = vmatpush.bf16.msra.mxu0 %v5407
    %7134 = vmatpush.bf16.msra.mxu0 %v5406
    %7135 = vmatpush.bf16.msra.mxu0 %v5405
    %7136 = vmatpush.bf16.msra.mxu0 %v5404
    %7137 = vmatpush.bf16.msra.mxu0 %v5403
    %7138 = vmatpush.bf16.msra.mxu0 %v5402
    %7139 = vmatpush.bf16.msra.mxu0 %v5401
    %7140 = vmatmul.bf16.gmra.mxu0 %v1864
    %v7141 = vpop.f32.mrf.mxu0
    %v7142 = vadd.f32 %v7129, %v7141
    %v7143 = vpop.f32.mrf.mxu0
    %7144 = vdwg.mxu0
    %7145 = vmatpush.bf16.msra.mxu0 %v5416
    %7146 = vmatpush.bf16.msra.mxu0 %v5415
    %7147 = vmatpush.bf16.msra.mxu0 %v5414
    %7148 = vmatpush.bf16.msra.mxu0 %v5413
    %7149 = vmatpush.bf16.msra.mxu0 %v5412
    %7150 = vmatpush.bf16.msra.mxu0 %v5411
    %7151 = vmatpush.bf16.msra.mxu0 %v5410
    %7152 = vmatpush.bf16.msra.mxu0 %v5409
    %7153 = vmatmul.bf16.gmra.mxu0 %v1865
    %v7154 = vpop.f32.mrf.mxu0
    %v7155 = vadd.f32 %v7142, %v7154
    %v7156 = vpop.f32.mrf.mxu0
    %7157 = vdwg.mxu0
    %7158 = vmatpush.bf16.msra.mxu0 %v5424
    %7159 = vmatpush.bf16.msra.mxu0 %v5423
    %7160 = vmatpush.bf16.msra.mxu0 %v5422
    %7161 = vmatpush.bf16.msra.mxu0 %v5421
    %7162 = vmatpush.bf16.msra.mxu0 %v5420
    %7163 = vmatpush.bf16.msra.mxu0 %v5419
    %7164 = vmatpush.bf16.msra.mxu0 %v5418
    %7165 = vmatpush.bf16.msra.mxu0 %v5417
    %7166 = vmatmul.bf16.gmra.mxu0 %v1866
    %v7167 = vpop.f32.mrf.mxu0
    %v7168 = vadd.f32 %v7155, %v7167
    %v7169 = vpop.f32.mrf.mxu0
    %7170 = vdwg.mxu0
    %7171 = vmatpush.bf16.msra.mxu0 %v5432
    %7172 = vmatpush.bf16.msra.mxu0 %v5431
    %7173 = vmatpush.bf16.msra.mxu0 %v5430
    %7174 = vmatpush.bf16.msra.mxu0 %v5429
    %7175 = vmatpush.bf16.msra.mxu0 %v5428
    %7176 = vmatpush.bf16.msra.mxu0 %v5427
    %7177 = vmatpush.bf16.msra.mxu0 %v5426
    %7178 = vmatpush.bf16.msra.mxu0 %v5425
    %7179 = vmatmul.bf16.gmra.mxu0 %v1867
    %v7180 = vpop.f32.mrf.mxu0
    %v7181 = vadd.f32 %v7168, %v7180
    %v7182 = vpop.f32.mrf.mxu0
    %7183 = vdwg.mxu0
    %7184 = vmatpush.bf16.msra.mxu0 %v5440
    %7185 = vmatpush.bf16.msra.mxu0 %v5439
    %7186 = vmatpush.bf16.msra.mxu0 %v5438
    %7187 = vmatpush.bf16.msra.mxu0 %v5437
    %7188 = vmatpush.bf16.msra.mxu0 %v5436
    %7189 = vmatpush.bf16.msra.mxu0 %v5435
    %7190 = vmatpush.bf16.msra.mxu0 %v5434
    %7191 = vmatpush.bf16.msra.mxu0 %v5433
    %7192 = vmatmul.bf16.gmra.mxu0 %v1868
    %v7193 = vpop.f32.mrf.mxu0
    %v7194 = vadd.f32 %v7181, %v7193
    %v7195 = vpop.f32.mrf.mxu0
    %7196 = vdwg.mxu0
    %7197 = vmatpush.bf16.msra.mxu0 %v5448
    %7198 = vmatpush.bf16.msra.mxu0 %v5447
    %7199 = vmatpush.bf16.msra.mxu0 %v5446
    %7200 = vmatpush.bf16.msra.mxu0 %v5445
    %7201 = vmatpush.bf16.msra.mxu0 %v5444
    %7202 = vmatpush.bf16.msra.mxu0 %v5443
    %7203 = vmatpush.bf16.msra.mxu0 %v5442
    %7204 = vmatpush.bf16.msra.mxu0 %v5441
    %7205 = vmatmul.bf16.gmra.mxu0 %v1869
    %v7206 = vpop.f32.mrf.mxu0
    %v7207 = vadd.f32 %v7194, %v7206
    %v7208 = vpop.f32.mrf.mxu0
    %7209 = vdwg.mxu0
    %7210 = vmatpush.bf16.msra.mxu0 %v5456
    %7211 = vmatpush.bf16.msra.mxu0 %v5455
    %7212 = vmatpush.bf16.msra.mxu0 %v5454
    %7213 = vmatpush.bf16.msra.mxu0 %v5453
    %7214 = vmatpush.bf16.msra.mxu0 %v5452
    %7215 = vmatpush.bf16.msra.mxu0 %v5451
    %7216 = vmatpush.bf16.msra.mxu0 %v5450
    %7217 = vmatpush.bf16.msra.mxu0 %v5449
    %7218 = vmatmul.bf16.gmra.mxu0 %v1870
    %v7219 = vpop.f32.mrf.mxu0
    %v7220 = vadd.f32 %v7207, %v7219
    %v7221 = vpop.f32.mrf.mxu0
    %7222 = vdwg.mxu0
    %7223 = vmatpush.bf16.msra.mxu0 %v5464
    %7224 = vmatpush.bf16.msra.mxu0 %v5463
    %7225 = vmatpush.bf16.msra.mxu0 %v5462
    %7226 = vmatpush.bf16.msra.mxu0 %v5461
    %7227 = vmatpush.bf16.msra.mxu0 %v5460
    %7228 = vmatpush.bf16.msra.mxu0 %v5459
    %7229 = vmatpush.bf16.msra.mxu0 %v5458
    %7230 = vmatpush.bf16.msra.mxu0 %v5457
    %7231 = vmatmul.bf16.gmra.mxu0 %v1871
    %v7232 = vpop.f32.mrf.mxu0
    %v7233 = vadd.f32 %v7220, %v7232
    %v7234 = vpop.f32.mrf.mxu0
    %7235 = vdwg.mxu0
    %7236 = vmatpush.bf16.msra.mxu0 %v5472
    %7237 = vmatpush.bf16.msra.mxu0 %v5471
    %7238 = vmatpush.bf16.msra.mxu0 %v5470
    %7239 = vmatpush.bf16.msra.mxu0 %v5469
    %7240 = vmatpush.bf16.msra.mxu0 %v5468
    %7241 = vmatpush.bf16.msra.mxu0 %v5467
    %7242 = vmatpush.bf16.msra.mxu0 %v5466
    %7243 = vmatpush.bf16.msra.mxu0 %v5465
    %7244 = vmatmul.bf16.gmra.mxu0 %v1872
    %v7245 = vpop.f32.mrf.mxu0
    %v7246 = vadd.f32 %v7233, %v7245
    %v7247 = vpop.f32.mrf.mxu0
    %7248 = vdwg.mxu0
    %7249 = vmatpush.bf16.msra.mxu0 %v5480
    %7250 = vmatpush.bf16.msra.mxu0 %v5479
    %7251 = vmatpush.bf16.msra.mxu0 %v5478
    %7252 = vmatpush.bf16.msra.mxu0 %v5477
    %7253 = vmatpush.bf16.msra.mxu0 %v5476
    %7254 = vmatpush.bf16.msra.mxu0 %v5475
    %7255 = vmatpush.bf16.msra.mxu0 %v5474
    %7256 = vmatpush.bf16.msra.mxu0 %v5473
    %7257 = vmatmul.bf16.gmra.mxu0 %v1873
    %v7258 = vpop.f32.mrf.mxu0
    %v7259 = vadd.f32 %v7246, %v7258
    %v7260 = vpop.f32.mrf.mxu0
    %7261 = vdwg.mxu0
    %7262 = vmatpush.bf16.msra.mxu0 %v5488
    %7263 = vmatpush.bf16.msra.mxu0 %v5487
    %7264 = vmatpush.bf16.msra.mxu0 %v5486
    %7265 = vmatpush.bf16.msra.mxu0 %v5485
    %7266 = vmatpush.bf16.msra.mxu0 %v5484
    %7267 = vmatpush.bf16.msra.mxu0 %v5483
    %7268 = vmatpush.bf16.msra.mxu0 %v5482
    %7269 = vmatpush.bf16.msra.mxu0 %v5481
    %7270 = vmatmul.bf16.gmra.mxu0 %v1874
    %v7271 = vpop.f32.mrf.mxu0
    %v7272 = vadd.f32 %v7259, %v7271
    %v7273 = vpop.f32.mrf.mxu0
    %7274 = vdwg.mxu0
    %7275 = vmatpush.bf16.msra.mxu0 %v5496
    %7276 = vmatpush.bf16.msra.mxu0 %v5495
    %7277 = vmatpush.bf16.msra.mxu0 %v5494
    %7278 = vmatpush.bf16.msra.mxu0 %v5493
    %7279 = vmatpush.bf16.msra.mxu0 %v5492
    %7280 = vmatpush.bf16.msra.mxu0 %v5491
    %7281 = vmatpush.bf16.msra.mxu0 %v5490
    %7282 = vmatpush.bf16.msra.mxu0 %v5489
    %7283 = vmatmul.bf16.gmra.mxu0 %v1875
    %v7284 = vpop.f32.mrf.mxu0
    %v7285 = vadd.f32 %v7272, %v7284
    %v7286 = vpop.f32.mrf.mxu0
    %7287 = vdwg.mxu0
    %7288 = vmatpush.bf16.msra.mxu0 %v5504
    %7289 = vmatpush.bf16.msra.mxu0 %v5503
    %7290 = vmatpush.bf16.msra.mxu0 %v5502
    %7291 = vmatpush.bf16.msra.mxu0 %v5501
    %7292 = vmatpush.bf16.msra.mxu0 %v5500
    %7293 = vmatpush.bf16.msra.mxu0 %v5499
    %7294 = vmatpush.bf16.msra.mxu0 %v5498
    %7295 = vmatpush.bf16.msra.mxu0 %v5497
    %7296 = vmatmul.bf16.gmra.mxu0 %v1876
    %v7297 = vpop.f32.mrf.mxu0
    %v7298 = vadd.f32 %v7285, %v7297
    %v7299 = vpop.f32.mrf.mxu0
    %7300 = vdwg.mxu0
    %7301 = vmatpush.bf16.msra.mxu0 %v5512
    %7302 = vmatpush.bf16.msra.mxu0 %v5511
    %7303 = vmatpush.bf16.msra.mxu0 %v5510
    %7304 = vmatpush.bf16.msra.mxu0 %v5509
    %7305 = vmatpush.bf16.msra.mxu0 %v5508
    %7306 = vmatpush.bf16.msra.mxu0 %v5507
    %7307 = vmatpush.bf16.msra.mxu0 %v5506
    %7308 = vmatpush.bf16.msra.mxu0 %v5505
    %7309 = vmatmul.bf16.gmra.mxu0 %v1877
    %v7310 = vpop.f32.mrf.mxu0
    %v7311 = vadd.f32 %v7298, %v7310
    %v7312 = vpop.f32.mrf.mxu0
    %7313 = vdwg.mxu0
    %7314 = vmatpush.bf16.msra.mxu0 %v5520
    %7315 = vmatpush.bf16.msra.mxu0 %v5519
    %7316 = vmatpush.bf16.msra.mxu0 %v5518
    %7317 = vmatpush.bf16.msra.mxu0 %v5517
    %7318 = vmatpush.bf16.msra.mxu0 %v5516
    %7319 = vmatpush.bf16.msra.mxu0 %v5515
    %7320 = vmatpush.bf16.msra.mxu0 %v5514
    %7321 = vmatpush.bf16.msra.mxu0 %v5513
    %7322 = vmatmul.bf16.gmra.mxu0 %v1878
    %v7323 = vpop.f32.mrf.mxu0
    %v7324 = vadd.f32 %v7311, %v7323
    %v7325 = vpop.f32.mrf.mxu0
    %7326 = vdwg.mxu0
    %7327 = vmatpush.bf16.msra.mxu0 %v5528
    %7328 = vmatpush.bf16.msra.mxu0 %v5527
    %7329 = vmatpush.bf16.msra.mxu0 %v5526
    %7330 = vmatpush.bf16.msra.mxu0 %v5525
    %7331 = vmatpush.bf16.msra.mxu0 %v5524
    %7332 = vmatpush.bf16.msra.mxu0 %v5523
    %7333 = vmatpush.bf16.msra.mxu0 %v5522
    %7334 = vmatpush.bf16.msra.mxu0 %v5521
    %7335 = vmatmul.bf16.gmra.mxu0 %v1879
    %v7336 = vpop.f32.mrf.mxu0
    %v7337 = vadd.f32 %v7324, %v7336
    %v7338 = vpop.f32.mrf.mxu0
    %7339 = vdwg.mxu0
    %7340 = vmatpush.bf16.msra.mxu0 %v5536
    %7341 = vmatpush.bf16.msra.mxu0 %v5535
    %7342 = vmatpush.bf16.msra.mxu0 %v5534
    %7343 = vmatpush.bf16.msra.mxu0 %v5533
    %7344 = vmatpush.bf16.msra.mxu0 %v5532
    %7345 = vmatpush.bf16.msra.mxu0 %v5531
    %7346 = vmatpush.bf16.msra.mxu0 %v5530
    %7347 = vmatpush.bf16.msra.mxu0 %v5529
    %7348 = vmatmul.bf16.gmra.mxu0 %v1880
    %v7349 = vpop.f32.mrf.mxu0
    %v7350 = vadd.f32 %v7337, %v7349
    %v7351 = vpop.f32.mrf.mxu0
    %7352 = vdwg.mxu0
    %7353 = vmatpush.bf16.msra.mxu0 %v5544
    %7354 = vmatpush.bf16.msra.mxu0 %v5543
    %7355 = vmatpush.bf16.msra.mxu0 %v5542
    %7356 = vmatpush.bf16.msra.mxu0 %v5541
    %7357 = vmatpush.bf16.msra.mxu0 %v5540
    %7358 = vmatpush.bf16.msra.mxu0 %v5539
    %7359 = vmatpush.bf16.msra.mxu0 %v5538
    %7360 = vmatpush.bf16.msra.mxu0 %v5537
    %7361 = vmatmul.bf16.gmra.mxu0 %v1881
    %v7362 = vpop.f32.mrf.mxu0
    %v7363 = vadd.f32 %v7350, %v7362
    %v7364 = vpop.f32.mrf.mxu0
    %7365 = vdwg.mxu0
    %7366 = vmatpush.bf16.msra.mxu0 %v5552
    %7367 = vmatpush.bf16.msra.mxu0 %v5551
    %7368 = vmatpush.bf16.msra.mxu0 %v5550
    %7369 = vmatpush.bf16.msra.mxu0 %v5549
    %7370 = vmatpush.bf16.msra.mxu0 %v5548
    %7371 = vmatpush.bf16.msra.mxu0 %v5547
    %7372 = vmatpush.bf16.msra.mxu0 %v5546
    %7373 = vmatpush.bf16.msra.mxu0 %v5545
    %7374 = vmatmul.bf16.gmra.mxu0 %v1882
    %v7375 = vpop.f32.mrf.mxu0
    %v7376 = vadd.f32 %v7363, %v7375
    %v7377 = vpop.f32.mrf.mxu0
    %7378 = vdwg.mxu0
    %7379 = vmatpush.bf16.msra.mxu0 %v5560
    %7380 = vmatpush.bf16.msra.mxu0 %v5559
    %7381 = vmatpush.bf16.msra.mxu0 %v5558
    %7382 = vmatpush.bf16.msra.mxu0 %v5557
    %7383 = vmatpush.bf16.msra.mxu0 %v5556
    %7384 = vmatpush.bf16.msra.mxu0 %v5555
    %7385 = vmatpush.bf16.msra.mxu0 %v5554
    %7386 = vmatpush.bf16.msra.mxu0 %v5553
    %7387 = vmatmul.bf16.gmra.mxu0 %v1883
    %v7388 = vpop.f32.mrf.mxu0
    %v7389 = vadd.f32 %v7376, %v7388
    %v7390 = vpop.f32.mrf.mxu0
    %7391 = vdwg.mxu0
    %7392 = vmatpush.bf16.msra.mxu0 %v5568
    %7393 = vmatpush.bf16.msra.mxu0 %v5567
    %7394 = vmatpush.bf16.msra.mxu0 %v5566
    %7395 = vmatpush.bf16.msra.mxu0 %v5565
    %7396 = vmatpush.bf16.msra.mxu0 %v5564
    %7397 = vmatpush.bf16.msra.mxu0 %v5563
    %7398 = vmatpush.bf16.msra.mxu0 %v5562
    %7399 = vmatpush.bf16.msra.mxu0 %v5561
    %7400 = vmatmul.bf16.gmra.mxu0 %v1884
    %v7401 = vpop.f32.mrf.mxu0
    %v7402 = vadd.f32 %v7389, %v7401
    %v7403 = vpop.f32.mrf.mxu0
    %7404 = vdwg.mxu0
    %7405 = vmatpush.bf16.msra.mxu0 %v5576
    %7406 = vmatpush.bf16.msra.mxu0 %v5575
    %7407 = vmatpush.bf16.msra.mxu0 %v5574
    %7408 = vmatpush.bf16.msra.mxu0 %v5573
    %7409 = vmatpush.bf16.msra.mxu0 %v5572
    %7410 = vmatpush.bf16.msra.mxu0 %v5571
    %7411 = vmatpush.bf16.msra.mxu0 %v5570
    %7412 = vmatpush.bf16.msra.mxu0 %v5569
    %7413 = vmatmul.bf16.gmra.mxu0 %v1885
    %v7414 = vpop.f32.mrf.mxu0
    %v7415 = vadd.f32 %v7402, %v7414
    %v7416 = vpop.f32.mrf.mxu0
    %7417 = vdwg.mxu0
    %7418 = vmatpush.bf16.msra.mxu0 %v5584
    %7419 = vmatpush.bf16.msra.mxu0 %v5583
    %7420 = vmatpush.bf16.msra.mxu0 %v5582
    %7421 = vmatpush.bf16.msra.mxu0 %v5581
    %7422 = vmatpush.bf16.msra.mxu0 %v5580
    %7423 = vmatpush.bf16.msra.mxu0 %v5579
    %7424 = vmatpush.bf16.msra.mxu0 %v5578
    %7425 = vmatpush.bf16.msra.mxu0 %v5577
    %7426 = vmatmul.bf16.gmra.mxu0 %v1886
    %v7427 = vpop.f32.mrf.mxu0
    %v7428 = vadd.f32 %v7415, %v7427
    %v7429 = vpop.f32.mrf.mxu0
    %7430 = vdwg.mxu0
    %7431 = vmatpush.bf16.msra.mxu0 %v5592
    %7432 = vmatpush.bf16.msra.mxu0 %v5591
    %7433 = vmatpush.bf16.msra.mxu0 %v5590
    %7434 = vmatpush.bf16.msra.mxu0 %v5589
    %7435 = vmatpush.bf16.msra.mxu0 %v5588
    %7436 = vmatpush.bf16.msra.mxu0 %v5587
    %7437 = vmatpush.bf16.msra.mxu0 %v5586
    %7438 = vmatpush.bf16.msra.mxu0 %v5585
    %7439 = vmatmul.bf16.gmra.mxu0 %v1887
    %v7440 = vpop.f32.mrf.mxu0
    %v7441 = vadd.f32 %v7428, %v7440
    %v7442 = vpop.f32.mrf.mxu0
    %7443 = vdwg.mxu0
    %7444 = vmatpush.bf16.msra.mxu0 %v5600
    %7445 = vmatpush.bf16.msra.mxu0 %v5599
    %7446 = vmatpush.bf16.msra.mxu0 %v5598
    %7447 = vmatpush.bf16.msra.mxu0 %v5597
    %7448 = vmatpush.bf16.msra.mxu0 %v5596
    %7449 = vmatpush.bf16.msra.mxu0 %v5595
    %7450 = vmatpush.bf16.msra.mxu0 %v5594
    %7451 = vmatpush.bf16.msra.mxu0 %v5593
    %7452 = vmatmul.bf16.gmra.mxu0 %v1888
    %v7453 = vpop.f32.mrf.mxu0
    %v7454 = vadd.f32 %v7441, %v7453
    %v7455 = vpop.f32.mrf.mxu0
    %7456 = vdwg.mxu0
    %7457 = vmatpush.bf16.msra.mxu0 %v5608
    %7458 = vmatpush.bf16.msra.mxu0 %v5607
    %7459 = vmatpush.bf16.msra.mxu0 %v5606
    %7460 = vmatpush.bf16.msra.mxu0 %v5605
    %7461 = vmatpush.bf16.msra.mxu0 %v5604
    %7462 = vmatpush.bf16.msra.mxu0 %v5603
    %7463 = vmatpush.bf16.msra.mxu0 %v5602
    %7464 = vmatpush.bf16.msra.mxu0 %v5601
    %7465 = vmatmul.bf16.gmra.mxu0 %v1889
    %v7466 = vpop.f32.mrf.mxu0
    %v7467 = vadd.f32 %v7454, %v7466
    %v7468 = vpop.f32.mrf.mxu0
    %7469 = vdwg.mxu0
    %7470 = vmatpush.bf16.msra.mxu0 %v5616
    %7471 = vmatpush.bf16.msra.mxu0 %v5615
    %7472 = vmatpush.bf16.msra.mxu0 %v5614
    %7473 = vmatpush.bf16.msra.mxu0 %v5613
    %7474 = vmatpush.bf16.msra.mxu0 %v5612
    %7475 = vmatpush.bf16.msra.mxu0 %v5611
    %7476 = vmatpush.bf16.msra.mxu0 %v5610
    %7477 = vmatpush.bf16.msra.mxu0 %v5609
    %7478 = vmatmul.bf16.gmra.mxu0 %v1890
    %v7479 = vpop.f32.mrf.mxu0
    %v7480 = vadd.f32 %v7467, %v7479
    %v7481 = vpop.f32.mrf.mxu0
    %7482 = vdwg.mxu0
    %7483 = vmatpush.bf16.msra.mxu0 %v5624
    %7484 = vmatpush.bf16.msra.mxu0 %v5623
    %7485 = vmatpush.bf16.msra.mxu0 %v5622
    %7486 = vmatpush.bf16.msra.mxu0 %v5621
    %7487 = vmatpush.bf16.msra.mxu0 %v5620
    %7488 = vmatpush.bf16.msra.mxu0 %v5619
    %7489 = vmatpush.bf16.msra.mxu0 %v5618
    %7490 = vmatpush.bf16.msra.mxu0 %v5617
    %7491 = vmatmul.bf16.gmra.mxu0 %v1891
    %v7492 = vpop.f32.mrf.mxu0
    %v7493 = vadd.f32 %v7480, %v7492
    %v7494 = vpop.f32.mrf.mxu0
    %7495 = vdwg.mxu0
    %7496 = vmatpush.bf16.msra.mxu0 %v5632
    %7497 = vmatpush.bf16.msra.mxu0 %v5631
    %7498 = vmatpush.bf16.msra.mxu0 %v5630
    %7499 = vmatpush.bf16.msra.mxu0 %v5629
    %7500 = vmatpush.bf16.msra.mxu0 %v5628
    %7501 = vmatpush.bf16.msra.mxu0 %v5627
    %7502 = vmatpush.bf16.msra.mxu0 %v5626
    %7503 = vmatpush.bf16.msra.mxu0 %v5625
    %7504 = vmatmul.bf16.gmra.mxu0 %v1892
    %v7505 = vpop.f32.mrf.mxu0
    %v7506 = vadd.f32 %v7493, %v7505
    %v7507 = vpop.f32.mrf.mxu0
    %7508 = vdwg.mxu0
    %7509 = vmatpush.bf16.msra.mxu0 %v5640
    %7510 = vmatpush.bf16.msra.mxu0 %v5639
    %7511 = vmatpush.bf16.msra.mxu0 %v5638
    %7512 = vmatpush.bf16.msra.mxu0 %v5637
    %7513 = vmatpush.bf16.msra.mxu0 %v5636
    %7514 = vmatpush.bf16.msra.mxu0 %v5635
    %7515 = vmatpush.bf16.msra.mxu0 %v5634
    %7516 = vmatpush.bf16.msra.mxu0 %v5633
    %7517 = vmatmul.bf16.gmra.mxu0 %v1893
    %v7518 = vpop.f32.mrf.mxu0
    %v7519 = vadd.f32 %v7506, %v7518
    %v7520 = vpop.f32.mrf.mxu0
    %7521 = vdwg.mxu0
    %7522 = vmatpush.bf16.msra.mxu0 %v5648
    %7523 = vmatpush.bf16.msra.mxu0 %v5647
    %7524 = vmatpush.bf16.msra.mxu0 %v5646
    %7525 = vmatpush.bf16.msra.mxu0 %v5645
    %7526 = vmatpush.bf16.msra.mxu0 %v5644
    %7527 = vmatpush.bf16.msra.mxu0 %v5643
    %7528 = vmatpush.bf16.msra.mxu0 %v5642
    %7529 = vmatpush.bf16.msra.mxu0 %v5641
    %7530 = vmatmul.bf16.gmra.mxu0 %v1894
    %v7531 = vpop.f32.mrf.mxu0
    %v7532 = vadd.f32 %v7519, %v7531
    %v7533 = vpop.f32.mrf.mxu0
    %7534 = vdwg.mxu0
    %7535 = vmatpush.bf16.msra.mxu0 %v5656
    %7536 = vmatpush.bf16.msra.mxu0 %v5655
    %7537 = vmatpush.bf16.msra.mxu0 %v5654
    %7538 = vmatpush.bf16.msra.mxu0 %v5653
    %7539 = vmatpush.bf16.msra.mxu0 %v5652
    %7540 = vmatpush.bf16.msra.mxu0 %v5651
    %7541 = vmatpush.bf16.msra.mxu0 %v5650
    %7542 = vmatpush.bf16.msra.mxu0 %v5649
    %7543 = vmatmul.bf16.gmra.mxu0 %v1895
    %v7544 = vpop.f32.mrf.mxu0
    %v7545 = vadd.f32 %v7532, %v7544
    %v7546 = vpop.f32.mrf.mxu0
    %7547 = vdwg.mxu0
    %7548 = vmatpush.bf16.msra.mxu0 %v5664
    %7549 = vmatpush.bf16.msra.mxu0 %v5663
    %7550 = vmatpush.bf16.msra.mxu0 %v5662
    %7551 = vmatpush.bf16.msra.mxu0 %v5661
    %7552 = vmatpush.bf16.msra.mxu0 %v5660
    %7553 = vmatpush.bf16.msra.mxu0 %v5659
    %7554 = vmatpush.bf16.msra.mxu0 %v5658
    %7555 = vmatpush.bf16.msra.mxu0 %v5657
    %7556 = vmatmul.bf16.gmra.mxu0 %v1896
    %v7557 = vpop.f32.mrf.mxu0
    %v7558 = vadd.f32 %v7545, %v7557
    %v7559 = vpop.f32.mrf.mxu0
    %7560 = vdwg.mxu0
    %7561 = vmatpush.bf16.msra.mxu0 %v5672
    %7562 = vmatpush.bf16.msra.mxu0 %v5671
    %7563 = vmatpush.bf16.msra.mxu0 %v5670
    %7564 = vmatpush.bf16.msra.mxu0 %v5669
    %7565 = vmatpush.bf16.msra.mxu0 %v5668
    %7566 = vmatpush.bf16.msra.mxu0 %v5667
    %7567 = vmatpush.bf16.msra.mxu0 %v5666
    %7568 = vmatpush.bf16.msra.mxu0 %v5665
    %7569 = vmatmul.bf16.gmra.mxu0 %v1897
    %v7570 = vpop.f32.mrf.mxu0
    %v7571 = vadd.f32 %v7558, %v7570
    %v7572 = vpop.f32.mrf.mxu0
    %7573 = vdwg.mxu0
    %7574 = vmatpush.bf16.msra.mxu0 %v5680
    %7575 = vmatpush.bf16.msra.mxu0 %v5679
    %7576 = vmatpush.bf16.msra.mxu0 %v5678
    %7577 = vmatpush.bf16.msra.mxu0 %v5677
    %7578 = vmatpush.bf16.msra.mxu0 %v5676
    %7579 = vmatpush.bf16.msra.mxu0 %v5675
    %7580 = vmatpush.bf16.msra.mxu0 %v5674
    %7581 = vmatpush.bf16.msra.mxu0 %v5673
    %7582 = vmatmul.bf16.gmra.mxu0 %v1898
    %v7583 = vpop.f32.mrf.mxu0
    %v7584 = vadd.f32 %v7571, %v7583
    %v7585 = vpop.f32.mrf.mxu0
    %7586 = vdwg.mxu0
    %7587 = vmatpush.bf16.msra.mxu0 %v5688
    %7588 = vmatpush.bf16.msra.mxu0 %v5687
    %7589 = vmatpush.bf16.msra.mxu0 %v5686
    %7590 = vmatpush.bf16.msra.mxu0 %v5685
    %7591 = vmatpush.bf16.msra.mxu0 %v5684
    %7592 = vmatpush.bf16.msra.mxu0 %v5683
    %7593 = vmatpush.bf16.msra.mxu0 %v5682
    %7594 = vmatpush.bf16.msra.mxu0 %v5681
    %7595 = vmatmul.bf16.gmra.mxu0 %v1899
    %v7596 = vpop.f32.mrf.mxu0
    %v7597 = vadd.f32 %v7584, %v7596
    %v7598 = vpop.f32.mrf.mxu0
    %7599 = vdwg.mxu0
    %7600 = vmatpush.bf16.msra.mxu0 %v5696
    %7601 = vmatpush.bf16.msra.mxu0 %v5695
    %7602 = vmatpush.bf16.msra.mxu0 %v5694
    %7603 = vmatpush.bf16.msra.mxu0 %v5693
    %7604 = vmatpush.bf16.msra.mxu0 %v5692
    %7605 = vmatpush.bf16.msra.mxu0 %v5691
    %7606 = vmatpush.bf16.msra.mxu0 %v5690
    %7607 = vmatpush.bf16.msra.mxu0 %v5689
    %7608 = vmatmul.bf16.gmra.mxu0 %v1900
    %v7609 = vpop.f32.mrf.mxu0
    %v7610 = vadd.f32 %v7597, %v7609
    %v7611 = vpop.f32.mrf.mxu0
    %7612 = vdwg.mxu0
    %7613 = vmatpush.bf16.msra.mxu0 %v5704
    %7614 = vmatpush.bf16.msra.mxu0 %v5703
    %7615 = vmatpush.bf16.msra.mxu0 %v5702
    %7616 = vmatpush.bf16.msra.mxu0 %v5701
    %7617 = vmatpush.bf16.msra.mxu0 %v5700
    %7618 = vmatpush.bf16.msra.mxu0 %v5699
    %7619 = vmatpush.bf16.msra.mxu0 %v5698
    %7620 = vmatpush.bf16.msra.mxu0 %v5697
    %7621 = vmatmul.bf16.gmra.mxu0 %v1901
    %v7622 = vpop.f32.mrf.mxu0
    %v7623 = vadd.f32 %v7610, %v7622
    %v7624 = vpop.f32.mrf.mxu0
    %7625 = vdwg.mxu0
    %7626 = vmatpush.bf16.msra.mxu0 %v5712
    %7627 = vmatpush.bf16.msra.mxu0 %v5711
    %7628 = vmatpush.bf16.msra.mxu0 %v5710
    %7629 = vmatpush.bf16.msra.mxu0 %v5709
    %7630 = vmatpush.bf16.msra.mxu0 %v5708
    %7631 = vmatpush.bf16.msra.mxu0 %v5707
    %7632 = vmatpush.bf16.msra.mxu0 %v5706
    %7633 = vmatpush.bf16.msra.mxu0 %v5705
    %7634 = vmatmul.bf16.gmra.mxu0 %v1902
    %v7635 = vpop.f32.mrf.mxu0
    %v7636 = vadd.f32 %v7623, %v7635
    %v7637 = vpop.f32.mrf.mxu0
    %7638 = vdwg.mxu0
    %7639 = vmatpush.bf16.msra.mxu0 %v5720
    %7640 = vmatpush.bf16.msra.mxu0 %v5719
    %7641 = vmatpush.bf16.msra.mxu0 %v5718
    %7642 = vmatpush.bf16.msra.mxu0 %v5717
    %7643 = vmatpush.bf16.msra.mxu0 %v5716
    %7644 = vmatpush.bf16.msra.mxu0 %v5715
    %7645 = vmatpush.bf16.msra.mxu0 %v5714
    %7646 = vmatpush.bf16.msra.mxu0 %v5713
    %7647 = vmatmul.bf16.gmra.mxu0 %v1903
    %v7648 = vpop.f32.mrf.mxu0
    %v7649 = vadd.f32 %v7636, %v7648
    %v7650 = vpop.f32.mrf.mxu0
    %7651 = vdwg.mxu0
    %7652 = vmatpush.bf16.msra.mxu0 %v5728
    %7653 = vmatpush.bf16.msra.mxu0 %v5727
    %7654 = vmatpush.bf16.msra.mxu0 %v5726
    %7655 = vmatpush.bf16.msra.mxu0 %v5725
    %7656 = vmatpush.bf16.msra.mxu0 %v5724
    %7657 = vmatpush.bf16.msra.mxu0 %v5723
    %7658 = vmatpush.bf16.msra.mxu0 %v5722
    %7659 = vmatpush.bf16.msra.mxu0 %v5721
    %7660 = vmatmul.bf16.gmra.mxu0 %v1904
    %v7661 = vpop.f32.mrf.mxu0
    %v7662 = vadd.f32 %v7649, %v7661
    %v7663 = vpop.f32.mrf.mxu0
    %7664 = vdwg.mxu0
    %7665 = vmatpush.bf16.msra.mxu0 %v5736
    %7666 = vmatpush.bf16.msra.mxu0 %v5735
    %7667 = vmatpush.bf16.msra.mxu0 %v5734
    %7668 = vmatpush.bf16.msra.mxu0 %v5733
    %7669 = vmatpush.bf16.msra.mxu0 %v5732
    %7670 = vmatpush.bf16.msra.mxu0 %v5731
    %7671 = vmatpush.bf16.msra.mxu0 %v5730
    %7672 = vmatpush.bf16.msra.mxu0 %v5729
    %7673 = vmatmul.bf16.gmra.mxu0 %v1905
    %v7674 = vpop.f32.mrf.mxu0
    %v7675 = vadd.f32 %v7662, %v7674
    %v7676 = vpop.f32.mrf.mxu0
    %7677 = vdwg.mxu0
    %7678 = vmatpush.bf16.msra.mxu0 %v5744
    %7679 = vmatpush.bf16.msra.mxu0 %v5743
    %7680 = vmatpush.bf16.msra.mxu0 %v5742
    %7681 = vmatpush.bf16.msra.mxu0 %v5741
    %7682 = vmatpush.bf16.msra.mxu0 %v5740
    %7683 = vmatpush.bf16.msra.mxu0 %v5739
    %7684 = vmatpush.bf16.msra.mxu0 %v5738
    %7685 = vmatpush.bf16.msra.mxu0 %v5737
    %7686 = vmatmul.bf16.gmra.mxu0 %v1906
    %v7687 = vpop.f32.mrf.mxu0
    %v7688 = vadd.f32 %v7675, %v7687
    %v7689 = vpop.f32.mrf.mxu0
    %7690 = vdwg.mxu0
    %7691 = vmatpush.bf16.msra.mxu0 %v5752
    %7692 = vmatpush.bf16.msra.mxu0 %v5751
    %7693 = vmatpush.bf16.msra.mxu0 %v5750
    %7694 = vmatpush.bf16.msra.mxu0 %v5749
    %7695 = vmatpush.bf16.msra.mxu0 %v5748
    %7696 = vmatpush.bf16.msra.mxu0 %v5747
    %7697 = vmatpush.bf16.msra.mxu0 %v5746
    %7698 = vmatpush.bf16.msra.mxu0 %v5745
    %7699 = vmatmul.bf16.gmra.mxu0 %v1907
    %v7700 = vpop.f32.mrf.mxu0
    %v7701 = vadd.f32 %v7688, %v7700
    %v7702 = vpop.f32.mrf.mxu0
    %7703 = vdwg.mxu0
    %7704 = vmatpush.bf16.msra.mxu0 %v5760
    %7705 = vmatpush.bf16.msra.mxu0 %v5759
    %7706 = vmatpush.bf16.msra.mxu0 %v5758
    %7707 = vmatpush.bf16.msra.mxu0 %v5757
    %7708 = vmatpush.bf16.msra.mxu0 %v5756
    %7709 = vmatpush.bf16.msra.mxu0 %v5755
    %7710 = vmatpush.bf16.msra.mxu0 %v5754
    %7711 = vmatpush.bf16.msra.mxu0 %v5753
    %7712 = vmatmul.bf16.gmra.mxu0 %v1908
    %v7713 = vpop.f32.mrf.mxu0
    %v7714 = vadd.f32 %v7701, %v7713
    %v7715 = vpop.f32.mrf.mxu0
    %7716 = vdwg.mxu0
    %7717 = vmatpush.bf16.msra.mxu0 %v5768
    %7718 = vmatpush.bf16.msra.mxu0 %v5767
    %7719 = vmatpush.bf16.msra.mxu0 %v5766
    %7720 = vmatpush.bf16.msra.mxu0 %v5765
    %7721 = vmatpush.bf16.msra.mxu0 %v5764
    %7722 = vmatpush.bf16.msra.mxu0 %v5763
    %7723 = vmatpush.bf16.msra.mxu0 %v5762
    %7724 = vmatpush.bf16.msra.mxu0 %v5761
    %7725 = vmatmul.bf16.gmra.mxu0 %v1909
    %v7726 = vpop.f32.mrf.mxu0
    %v7727 = vadd.f32 %v7714, %v7726
    %v7728 = vpop.f32.mrf.mxu0
    %7729 = vdwg.mxu0
    %7730 = vmatpush.bf16.msra.mxu0 %v5776
    %7731 = vmatpush.bf16.msra.mxu0 %v5775
    %7732 = vmatpush.bf16.msra.mxu0 %v5774
    %7733 = vmatpush.bf16.msra.mxu0 %v5773
    %7734 = vmatpush.bf16.msra.mxu0 %v5772
    %7735 = vmatpush.bf16.msra.mxu0 %v5771
    %7736 = vmatpush.bf16.msra.mxu0 %v5770
    %7737 = vmatpush.bf16.msra.mxu0 %v5769
    %7738 = vmatmul.bf16.gmra.mxu0 %v1910
    %v7739 = vpop.f32.mrf.mxu0
    %v7740 = vadd.f32 %v7727, %v7739
    %v7741 = vpop.f32.mrf.mxu0
    %7742 = vdwg.mxu0
    %7743 = vmatpush.bf16.msra.mxu0 %v5784
    %7744 = vmatpush.bf16.msra.mxu0 %v5783
    %7745 = vmatpush.bf16.msra.mxu0 %v5782
    %7746 = vmatpush.bf16.msra.mxu0 %v5781
    %7747 = vmatpush.bf16.msra.mxu0 %v5780
    %7748 = vmatpush.bf16.msra.mxu0 %v5779
    %7749 = vmatpush.bf16.msra.mxu0 %v5778
    %7750 = vmatpush.bf16.msra.mxu0 %v5777
    %7751 = vmatmul.bf16.gmra.mxu0 %v1911
    %v7752 = vpop.f32.mrf.mxu0
    %v7753 = vadd.f32 %v7740, %v7752
    %v7754 = vpop.f32.mrf.mxu0
    %7755 = vdwg.mxu0
    %7756 = vmatpush.bf16.msra.mxu0 %v5792
    %7757 = vmatpush.bf16.msra.mxu0 %v5791
    %7758 = vmatpush.bf16.msra.mxu0 %v5790
    %7759 = vmatpush.bf16.msra.mxu0 %v5789
    %7760 = vmatpush.bf16.msra.mxu0 %v5788
    %7761 = vmatpush.bf16.msra.mxu0 %v5787
    %7762 = vmatpush.bf16.msra.mxu0 %v5786
    %7763 = vmatpush.bf16.msra.mxu0 %v5785
    %7764 = vmatmul.bf16.gmra.mxu0 %v1912
    %v7765 = vpop.f32.mrf.mxu0
    %v7766 = vadd.f32 %v7753, %v7765
    %v7767 = vpop.f32.mrf.mxu0
    %7768 = vdwg.mxu0
    %7769 = vmatpush.bf16.msra.mxu0 %v5800
    %7770 = vmatpush.bf16.msra.mxu0 %v5799
    %7771 = vmatpush.bf16.msra.mxu0 %v5798
    %7772 = vmatpush.bf16.msra.mxu0 %v5797
    %7773 = vmatpush.bf16.msra.mxu0 %v5796
    %7774 = vmatpush.bf16.msra.mxu0 %v5795
    %7775 = vmatpush.bf16.msra.mxu0 %v5794
    %7776 = vmatpush.bf16.msra.mxu0 %v5793
    %7777 = vmatmul.bf16.gmra.mxu0 %v1913
    %v7778 = vpop.f32.mrf.mxu0
    %v7779 = vadd.f32 %v7766, %v7778
    %v7780 = vpop.f32.mrf.mxu0
    %7781 = vdwg.mxu0
    %7782 = vmatpush.bf16.msra.mxu0 %v5808
    %7783 = vmatpush.bf16.msra.mxu0 %v5807
    %7784 = vmatpush.bf16.msra.mxu0 %v5806
    %7785 = vmatpush.bf16.msra.mxu0 %v5805
    %7786 = vmatpush.bf16.msra.mxu0 %v5804
    %7787 = vmatpush.bf16.msra.mxu0 %v5803
    %7788 = vmatpush.bf16.msra.mxu0 %v5802
    %7789 = vmatpush.bf16.msra.mxu0 %v5801
    %7790 = vmatmul.bf16.gmra.mxu0 %v1914
    %v7791 = vpop.f32.mrf.mxu0
    %v7792 = vadd.f32 %v7779, %v7791
    %v7793 = vpop.f32.mrf.mxu0
    %7794 = vdwg.mxu0
    %7795 = vmatpush.bf16.msra.mxu0 %v5816
    %7796 = vmatpush.bf16.msra.mxu0 %v5815
    %7797 = vmatpush.bf16.msra.mxu0 %v5814
    %7798 = vmatpush.bf16.msra.mxu0 %v5813
    %7799 = vmatpush.bf16.msra.mxu0 %v5812
    %7800 = vmatpush.bf16.msra.mxu0 %v5811
    %7801 = vmatpush.bf16.msra.mxu0 %v5810
    %7802 = vmatpush.bf16.msra.mxu0 %v5809
    %7803 = vmatmul.bf16.gmra.mxu0 %v1915
    %v7804 = vpop.f32.mrf.mxu0
    %v7805 = vadd.f32 %v7792, %v7804
    %v7806 = vpop.f32.mrf.mxu0
    %7807 = vdwg.mxu0
    %7808 = vmatpush.bf16.msra.mxu0 %v5824
    %7809 = vmatpush.bf16.msra.mxu0 %v5823
    %7810 = vmatpush.bf16.msra.mxu0 %v5822
    %7811 = vmatpush.bf16.msra.mxu0 %v5821
    %7812 = vmatpush.bf16.msra.mxu0 %v5820
    %7813 = vmatpush.bf16.msra.mxu0 %v5819
    %7814 = vmatpush.bf16.msra.mxu0 %v5818
    %7815 = vmatpush.bf16.msra.mxu0 %v5817
    %7816 = vmatmul.bf16.gmra.mxu0 %v1916
    %v7817 = vpop.f32.mrf.mxu0
    %v7818 = vadd.f32 %v7805, %v7817
    %v7819 = vpop.f32.mrf.mxu0
    %7820 = vdwg.mxu0
    %7821 = vmatpush.bf16.msra.mxu0 %v5832
    %7822 = vmatpush.bf16.msra.mxu0 %v5831
    %7823 = vmatpush.bf16.msra.mxu0 %v5830
    %7824 = vmatpush.bf16.msra.mxu0 %v5829
    %7825 = vmatpush.bf16.msra.mxu0 %v5828
    %7826 = vmatpush.bf16.msra.mxu0 %v5827
    %7827 = vmatpush.bf16.msra.mxu0 %v5826
    %7828 = vmatpush.bf16.msra.mxu0 %v5825
    %7829 = vmatmul.bf16.gmra.mxu0 %v1917
    %v7830 = vpop.f32.mrf.mxu0
    %v7831 = vadd.f32 %v7818, %v7830
    %v7832 = vpop.f32.mrf.mxu0
    %7833 = vdwg.mxu0
    %7834 = vmatpush.bf16.msra.mxu0 %v5840
    %7835 = vmatpush.bf16.msra.mxu0 %v5839
    %7836 = vmatpush.bf16.msra.mxu0 %v5838
    %7837 = vmatpush.bf16.msra.mxu0 %v5837
    %7838 = vmatpush.bf16.msra.mxu0 %v5836
    %7839 = vmatpush.bf16.msra.mxu0 %v5835
    %7840 = vmatpush.bf16.msra.mxu0 %v5834
    %7841 = vmatpush.bf16.msra.mxu0 %v5833
    %7842 = vmatmul.bf16.gmra.mxu0 %v1918
    %v7843 = vpop.f32.mrf.mxu0
    %v7844 = vadd.f32 %v7831, %v7843
    %v7845 = vpop.f32.mrf.mxu0
    %7846 = vdwg.mxu0
    %7847 = vmatpush.bf16.msra.mxu0 %v5848
    %7848 = vmatpush.bf16.msra.mxu0 %v5847
    %7849 = vmatpush.bf16.msra.mxu0 %v5846
    %7850 = vmatpush.bf16.msra.mxu0 %v5845
    %7851 = vmatpush.bf16.msra.mxu0 %v5844
    %7852 = vmatpush.bf16.msra.mxu0 %v5843
    %7853 = vmatpush.bf16.msra.mxu0 %v5842
    %7854 = vmatpush.bf16.msra.mxu0 %v5841
    %7855 = vmatmul.bf16.gmra.mxu0 %v1919
    %v7856 = vpop.f32.mrf.mxu0
    %v7857 = vadd.f32 %v7844, %v7856
    %v7858 = vpop.f32.mrf.mxu0
    %7859 = vdwg.mxu0
    %7860 = vmatpush.bf16.msra.mxu0 %v5856
    %7861 = vmatpush.bf16.msra.mxu0 %v5855
    %7862 = vmatpush.bf16.msra.mxu0 %v5854
    %7863 = vmatpush.bf16.msra.mxu0 %v5853
    %7864 = vmatpush.bf16.msra.mxu0 %v5852
    %7865 = vmatpush.bf16.msra.mxu0 %v5851
    %7866 = vmatpush.bf16.msra.mxu0 %v5850
    %7867 = vmatpush.bf16.msra.mxu0 %v5849
    %7868 = vmatmul.bf16.gmra.mxu0 %v1920
    %v7869 = vpop.f32.mrf.mxu0
    %v7870 = vadd.f32 %v7857, %v7869
    %v7871 = vpop.f32.mrf.mxu0
    %7872 = vdwg.mxu0
    %v7873 = vmax.f32 %v7870, 0.0
    %v7874 = vld [vmem:[#allocation8] sm:$0xff]
    %v7875 = vld [vmem:[#allocation8 + $0x8] sm:$0xff]
    %v7876 = vld [vmem:[#allocation8 + $0x10] sm:$0xff]
    %v7877 = vld [vmem:[#allocation8 + $0x18] sm:$0xff]
    %v7878 = vld [vmem:[#allocation8 + $0x20] sm:$0xff]
    %v7879 = vld [vmem:[#allocation8 + $0x28] sm:$0xff]
    %v7880 = vld [vmem:[#allocation8 + $0x30] sm:$0xff]
    %v7881 = vld [vmem:[#allocation8 + $0x38] sm:$0xff]
    %v7882 = vld [vmem:[#allocation8 + $0x40] sm:$0xff]
    %v7883 = vld [vmem:[#allocation8 + $0x48] sm:$0xff]
    %v7884 = vld [vmem:[#allocation8 + $0x50] sm:$0xff]
    %v7885 = vld [vmem:[#allocation8 + $0x58] sm:$0xff]
    %v7886 = vld [vmem:[#allocation8 + $0x60] sm:$0xff]
    %v7887 = vld [vmem:[#allocation8 + $0x68] sm:$0xff]
    %v7888 = vld [vmem:[#allocation8 + $0x70] sm:$0xff]
    %v7889 = vld [vmem:[#allocation8 + $0x78] sm:$0xff]
    %v7890 = vld [vmem:[#allocation10] sm:$0x1]
    %v7892 = vperm.slane %v7890, 0
    %7894 = vmatpush.msra.mxu0 %v7889
    %7895 = vmatpush.msra.mxu0 %v7888
    %7896 = vmatpush.msra.mxu0 %v7887
    %7897 = vmatpush.msra.mxu0 %v7886
    %7898 = vmatpush.msra.mxu0 %v7885
    %7899 = vmatpush.msra.mxu0 %v7884
    %7900 = vmatpush.msra.mxu0 %v7883
    %7901 = vmatpush.msra.mxu0 %v7882
    %7902 = vmatpush.msra.mxu0 %v7881
    %7903 = vmatpush.msra.mxu0 %v7880
    %7904 = vmatpush.msra.mxu0 %v7879
    %7905 = vmatpush.msra.mxu0 %v7878
    %7906 = vmatpush.msra.mxu0 %v7877
    %7907 = vmatpush.msra.mxu0 %v7876
    %7908 = vmatpush.msra.mxu0 %v7875
    %7909 = vmatpush.msra.mxu0 %v7874
    %7910 = vmatmul.f32.gmra.mxu0 %v7873
    %v7911 = vpop.f32.mrf.mxu0
    %v7912 = vadd.f32 %v7892, %v7911
    %7913 = vdwg.mxu0
    %7914 = vst [vmem:[#allocation11] sm:$0xff] %v7912
    // Predicated region
    $region42: #{tpu_custom_call.1} parent=1 // pred_check
      _
    $region43: #{tpu_custom_call.1} parent=1 // pred_check_branch
      %7916 = sbr.rel (0) target = $region45
    $region44: #{tpu_custom_call.1} parent=1 // pred_region
      %7918 = vsyncadd [#allocation4], 0
      %s7920 = sshll.u32 [#allocation11], 4
      %s7921 = int_to_ptr.vmem [resolvable:$true] %s7920
      %s7922 = sshll.u32 %s5, 4
      %s7923 = int_to_ptr.hbm [resolvable:$true] %s7922
      %7925 = dma.vmem_to_hbm [thread:$0]  %s7921, 128, %s7923, [#allocation4]
    $region45: #{tpu_custom_call.1} parent=1 // pred_fallthru
      _
    // Predicated region
    $region46: #{tpu_custom_call.1} parent=1 // pred_check
      _
    $region47: #{tpu_custom_call.1} parent=1 // pred_check_branch
      %7927 = sbr.rel (0) target = $region49
    $region48: #{tpu_custom_call.1} parent=1 // pred_region
      %7929 = dma.done [#allocation4], 128
    $region49: #{tpu_custom_call.1} parent=1 // pred_fallthru
      _
    %7930 = vsyncpa [#allocation3], 1
    %7931 = vsyncpa [#allocation6], 1
    %7932 = vsyncpa [#allocation9], 1
    %7933 = vsyncpa [#allocation4], 1

</llo_original>
